<compile_context>
chip_gen: v7x
topology: tpu7x:2x2x1
jax: 0.10.0
libtpu: 0.0.40
codegen_flags: <defaults>
</compile_context>

<pallas_src>
import math
import functools

import jax
import jax.numpy as jnp
from jax.experimental import pallas as pl
from jax.experimental.pallas import tpu as pltpu


def _layernorm(t, g, b):
    mu = jnp.mean(t, axis=-1, keepdims=True)
    c = t - mu
    var = jnp.mean(c * c, axis=-1, keepdims=True)
    return c * jax.lax.rsqrt(var + 1e-5) * g + b


def _gelu_exact(x):
    # Exact (erf-based) GELU via the A&S 7.1.26 polynomial (|err| < 2e-7),
    # using only exp / mul / add / where so it is lowering-safe on TPU.
    z = x * (1.0 / math.sqrt(2.0))
    a1, a2, a3, a4, a5 = (0.254829592, -0.284496736, 1.421413741,
                          -1.453152027, 1.061405429)
    p = 0.3275911
    sgn = jnp.where(z >= 0.0, 1.0, -1.0)
    az = jnp.abs(z)
    t = 1.0 / (1.0 + p * az)
    poly = ((((a5 * t + a4) * t + a3) * t + a2) * t + a1) * t
    erf = sgn * (1.0 - poly * jnp.exp(-az * az))
    return 0.5 * x * (1.0 + erf)


# ----------------------------------------------------------------------------
# Pallas kernel: grid = (batch, query-tile).
# ----------------------------------------------------------------------------
def _block_kernel(
    # inputs
    x_ref, ctx_ref,
    # norm1 + attn1 (self-attn)
    g1_ref, b1_ref, wq1_ref, wk1_ref, wv1_ref, wo1_ref, bo1_ref,
    # norm2 + attn2 (cross-attn)
    g2_ref, b2_ref, wq2_ref, wk2_ref, wv2_ref, wo2_ref, bo2_ref,
    # norm3 + GEGLU feed-forward (projection pre-split into value/gate halves)
    g3_ref, b3_ref, wu_ref, bu_ref, wg_ref, bg_ref, w2_ref, bf2_ref,
    # output
    o_ref,
    # persistent VMEM scratch
    k1_sc, v1_sc, k2_sc, v2_sc, q_sc,
    *, heads: int, ctx_len: int,
):
    qi = pl.program_id(1)
    H = heads
    bf16 = jnp.bfloat16
    tq = o_ref.shape[1]

    # Read the small (1, C) parameters once.
    g1 = g1_ref[...]; b1 = b1_ref[...]
    g2 = g2_ref[...]; b2 = b2_ref[...]
    g3 = g3_ref[...]; b3 = b3_ref[...]
    bo1 = bo1_ref[...]; bo2 = bo2_ref[...]
    bu = bu_ref[...]; bg = bg_ref[...]; bf2 = bf2_ref[...]

    # --- Hoisted head-major K/V: filled once per batch element (qi == 0). ---
    @pl.when(qi == 0)
    def _():
        xf = x_ref[0].astype(jnp.float32)                         # (N, D)
        h1f = _layernorm(xf, g1, b1).astype(bf16)
        cf = ctx_ref[0].astype(bf16)                              # (Mp, Cd)
        for hh in range(H):
            k1_sc[hh] = jnp.dot(h1f, wk1_ref[hh],
                                preferred_element_type=jnp.float32).astype(bf16)
            v1_sc[hh] = jnp.dot(h1f, wv1_ref[hh],
                                preferred_element_type=jnp.float32).astype(bf16)
            k2_sc[hh] = jnp.dot(cf, wk2_ref[hh],
                                preferred_element_type=jnp.float32).astype(bf16)
            v2_sc[hh] = jnp.dot(cf, wv2_ref[hh],
                                preferred_element_type=jnp.float32).astype(bf16)

    def attention(xn, wq_ref, k_kv, v_kv, wo_ref, bo, valid_len=None):
        # xn: (TQ, D) f32 normed activations.  k_kv / v_kv: (H, Mk, dh) bf16.
        mk = k_kv.shape[1]
        xn16 = xn.astype(bf16)
        # Per-head Q projection straight into head-major scratch (scale already
        # folded into wq): no lane-splitting reshape in the per-tile path.
        for hh in range(H):
            q_sc[hh] = jnp.dot(xn16, wq_ref[hh],
                               preferred_element_type=jnp.float32).astype(bf16)
        q3 = q_sc[...]                                            # (H, TQ, dh)
        s = jnp.einsum("hqd,hkd->hqk", q3, k_kv,
                       preferred_element_type=jnp.float32)        # (H, TQ, Mk)
        if valid_len is not None and valid_len < mk:
            col = jax.lax.broadcasted_iota(jnp.int32, s.shape, 2)
            s = jnp.where(col < valid_len, s, -1e30)
        m = jnp.max(s, axis=-1, keepdims=True)
        p = jnp.exp(s - m)
        denom = jnp.sum(p, axis=-1, keepdims=True)                # (H, TQ, 1)
        o = jnp.einsum("hqk,hkd->hqd", p.astype(bf16), v_kv,
                       preferred_element_type=jnp.float32)        # (H, TQ, dh)
        o = (o * pl.reciprocal(denom, approx=True)).astype(bf16)  # EUP recip
        out = jnp.einsum("hqd,hde->hqe", o, wo_ref[...],
                         preferred_element_type=jnp.float32)      # (H, TQ, D)
        return jnp.sum(out, axis=0) + bo                          # (TQ, D)

    # --- Query tile sliced from the per-batch full-sequence block. ---
    start = pl.multiple_of(qi * tq, tq)
    x = x_ref[0, pl.ds(start, tq), :].astype(jnp.float32)         # (TQ, D)

    # attn1: self-attention on LayerNorm1(x)
    h1 = _layernorm(x, g1, b1)
    x = x + attention(h1, wq1_ref, k1_sc[...], v1_sc[...], wo1_ref, bo1)

    # attn2: cross-attention with (padded) context
    h2 = _layernorm(x, g2, b2)
    x = x + attention(h2, wq2_ref, k2_sc[...], v2_sc[...], wo2_ref, bo2,
                      valid_len=ctx_len)

    # GEGLU feed-forward (projection split into value/gate halves)
    h3 = _layernorm(x, g3, b3).astype(bf16)
    u = jnp.dot(h3, wu_ref[...], preferred_element_type=jnp.float32) + bu
    gate = jnp.dot(h3, wg_ref[...], preferred_element_type=jnp.float32) + bg
    ff = (u * _gelu_exact(gate)).astype(bf16)
    x = x + jnp.dot(ff, w2_ref[...], preferred_element_type=jnp.float32) + bf2

    o_ref[0] = x.astype(o_ref.dtype)


# ----------------------------------------------------------------------------
# Wrapper
# ----------------------------------------------------------------------------
def _const_index_map(ndim):
    return lambda b, q: (0,) * ndim


def basic_transformer_block(x, context, params, *, heads, d_head, q_tile=None):
    """x: (B, N, D) float32, context: (B, M, Cd) float32."""
    B, N, D = x.shape
    _, M, Cd = context.shape
    ff_inner = params["wp"].shape[1] // 2

    if q_tile is None:
        q_tile = 128 if N % 128 == 0 else N
    if N % q_tile != 0:
        raise ValueError(f"q_tile={q_tile} must divide N={N}")
    if q_tile % 8 != 0 and q_tile != N:
        raise ValueError(f"q_tile={q_tile} must be a multiple of 8 (or == N)")
    n_q = N // q_tile

    # Pad the context token axis to a lane-aligned length; padded key columns
    # are masked to -1e30 in-kernel before the softmax.
    Mp = ((M + 127) // 128) * 128
    if Mp != M:
        context = jnp.pad(context, ((0, 0), (0, Mp - M), (0, 0)))

    bf16 = jnp.bfloat16
    f32 = lambda a: a.astype(jnp.float32)
    scale = 1.0 / math.sqrt(d_head)

    def heads_in(w):   # (C, H*dh) -> (H, C, dh) bf16
        c = w.shape[0]
        return jnp.transpose(w.reshape(c, heads, d_head), (1, 0, 2)).astype(bf16)

    def heads_out(w):  # (H*dh, D) -> (H, dh, D) bf16
        return w.reshape(heads, d_head, D).astype(bf16)

    weights = [
        f32(params["g1"]), f32(params["b1"]),
        heads_in(params["wq1"] * scale),            # 1/sqrt(dh) folded into wq
        heads_in(params["wk1"]), heads_in(params["wv1"]),
        heads_out(params["wo1"]), f32(params["bo1"]),
        f32(params["g2"]), f32(params["b2"]),
        heads_in(params["wq2"] * scale),
        heads_in(params["wk2"]), heads_in(params["wv2"]),
        heads_out(params["wo2"]), f32(params["bo2"]),
        f32(params["g3"]), f32(params["b3"]),
        params["wp"][:, :ff_inner].astype(bf16), f32(params["bp"][:, :ff_inner]),
        params["wp"][:, ff_inner:].astype(bf16), f32(params["bp"][:, ff_inner:]),
        params["w2"].astype(bf16), f32(params["bf2"]),
    ]

    in_specs = [
        pl.BlockSpec((1, N, D), lambda b, q: (b, 0, 0)),     # x (full seq per b)
        pl.BlockSpec((1, Mp, Cd), lambda b, q: (b, 0, 0)),   # context (padded)
    ] + [pl.BlockSpec(w.shape, _const_index_map(w.ndim)) for w in weights]

    kernel = functools.partial(_block_kernel, heads=heads, ctx_len=M)

    return pl.pallas_call(
        kernel,
        out_shape=jax.ShapeDtypeStruct((B, N, D), x.dtype),
        grid=(B, n_q),
        in_specs=in_specs,
        out_specs=pl.BlockSpec((1, q_tile, D), lambda b, q: (b, q, 0)),
        scratch_shapes=[
            pltpu.VMEM((heads, N, d_head), jnp.bfloat16),    # self-attn K
            pltpu.VMEM((heads, N, d_head), jnp.bfloat16),    # self-attn V
            pltpu.VMEM((heads, Mp, d_head), jnp.bfloat16),   # cross-attn K
            pltpu.VMEM((heads, Mp, d_head), jnp.bfloat16),   # cross-attn V
            pltpu.VMEM((heads, q_tile, d_head), jnp.bfloat16),  # head-major Q
        ],
        compiler_params=pltpu.CompilerParams(
            # batch axis parallel (megacore sharding); query-tile axis MUST be
            # sequential ("arbitrary") so the hoisted K/V scratch stays valid.
            dimension_semantics=("parallel", "arbitrary"),
            vmem_limit_bytes=48 * 1024 * 1024,
        ),
    )(x, context, *weights)


# ----------------------------------------------------------------------------
# Pure-JAX f32 reference (same math) for correctness checking.
# ----------------------------------------------------------------------------
def _ref_forward(x, ctx, p, heads, d_head):
    def layernorm(h, g, b):
        mu = jnp.mean(h, axis=-1, keepdims=True)
        var = jnp.mean((h - mu) ** 2, axis=-1, keepdims=True)
        return (h - mu) / jnp.sqrt(var + 1e-5) * g + b

    def mha(q_in, kv_in, wq, wk, wv, wo, bo):
        B, N, _ = q_in.shape
        M = kv_in.shape[1]
        q = (q_in @ wq).reshape(B, N, heads, d_head).transpose(0, 2, 1, 3)
        k = (kv_in @ wk).reshape(B, M, heads, d_head).transpose(0, 2, 1, 3)
        v = (kv_in @ wv).reshape(B, M, heads, d_head).transpose(0, 2, 1, 3)
        s = jnp.einsum("bhid,bhjd->bhij", q, k) / math.sqrt(d_head)
        a = jax.nn.softmax(s, axis=-1)
        o = jnp.einsum("bhij,bhjd->bhid", a, v)
        o = o.transpose(0, 2, 1, 3).reshape(B, N, heads * d_head)
        return o @ wo + bo

    ff_inner = p["wp"].shape[1] // 2
    h1 = layernorm(x, p["g1"], p["b1"])
    x = x + mha(h1, h1, p["wq1"], p["wk1"], p["wv1"], p["wo1"], p["bo1"])
    h2 = layernorm(x, p["g2"], p["b2"])
    x = x + mha(h2, ctx, p["wq2"], p["wk2"], p["wv2"], p["wo2"], p["bo2"])
    h3 = layernorm(x, p["g3"], p["b3"])
    proj = h3 @ p["wp"] + p["bp"]
    ff = proj[..., :ff_inner] * jax.nn.gelu(proj[..., ff_inner:], approximate=False)
    return x + ff @ p["w2"] + p["bf2"]


# ----------------------------------------------------------------------------
if __name__ == "__main__":
    # Small shapes consistent with the module (N chosen so the query axis is
    # actually tiled: q_tile=8 -> 2 tiles per batch element).
    B, N, D = 2, 16, 32         # batch, query tokens, model dim
    M, Cd = 8, 16               # context tokens, context dim
    heads, d_head = 4, 8        # inner_dim = heads*d_head = 32
    inner = heads * d_head
    ff_inner = 4 * D            # mult = 4

    key = jax.random.PRNGKey(0)
    ks = jax.random.split(key, 16)

    x = jax.random.normal(ks[0], (B, N, D), dtype=jnp.float32)
    context = jax.random.normal(ks[1], (B, M, Cd), dtype=jnp.float32)

    def w(k, shape, scale=0.05):
        return (scale * jax.random.normal(k, shape)).astype(jnp.float32)

    params = {
        # norm1 + attn1 (self-attn: context_dim = query_dim = D)
        "g1": jnp.ones((1, D), jnp.float32), "b1": jnp.zeros((1, D), jnp.float32),
        "wq1": w(ks[2], (D, inner)), "wk1": w(ks[3], (D, inner)),
        "wv1": w(ks[4], (D, inner)),
        "wo1": w(ks[5], (inner, D)), "bo1": jnp.zeros((1, D), jnp.float32),
        # norm2 + attn2 (cross-attn: context_dim = Cd)
        "g2": jnp.ones((1, D), jnp.float32), "b2": jnp.zeros((1, D), jnp.float32),
        "wq2": w(ks[6], (D, inner)), "wk2": w(ks[7], (Cd, inner)),
        "wv2": w(ks[8], (Cd, inner)),
        "wo2": w(ks[9], (inner, D)), "bo2": jnp.zeros((1, D), jnp.float32),
        # norm3 + GEGLU FF
        "g3": jnp.ones((1, D), jnp.float32), "b3": jnp.zeros((1, D), jnp.float32),
        "wp": w(ks[10], (D, 2 * ff_inner)),
        "bp": jnp.zeros((1, 2 * ff_inner), jnp.float32),
        "w2": w(ks[11], (ff_inner, D)), "bf2": jnp.zeros((1, D), jnp.float32),
    }

    out = basic_transformer_block(x, context, params,
                                  heads=heads, d_head=d_head, q_tile=8)
    out = jax.block_until_ready(out)

    ref = _ref_forward(x, context, params, heads, d_head)
    assert out.shape == (B, N, D)
    max_err = float(jnp.max(jnp.abs(out - ref)))
    # bf16 MXU operands + approx reciprocal -> compare with a relaxed tolerance.
    assert jnp.allclose(out, ref, rtol=3e-2, atol=3e-2), \
        f"mismatch vs JAX reference (max abs err {max_err})"

    print("KERNEL_OK")
</pallas_src>

<mosaic_0001>
module attributes {stable_mosaic.version = 11 : i64} {
  func.func @_block_kernel(%arg0: i32, %arg1: i32, %arg2: memref<1x16x32xf32, #tpu.memory_space<vmem>>, %arg3: memref<1x128x16xf32, #tpu.memory_space<vmem>>, %arg4: memref<1x32xf32, #tpu.memory_space<vmem>>, %arg5: memref<1x32xf32, #tpu.memory_space<vmem>>, %arg6: memref<4x32x8xbf16, #tpu.memory_space<vmem>>, %arg7: memref<4x32x8xbf16, #tpu.memory_space<vmem>>, %arg8: memref<4x32x8xbf16, #tpu.memory_space<vmem>>, %arg9: memref<4x8x32xbf16, #tpu.memory_space<vmem>>, %arg10: memref<1x32xf32, #tpu.memory_space<vmem>>, %arg11: memref<1x32xf32, #tpu.memory_space<vmem>>, %arg12: memref<1x32xf32, #tpu.memory_space<vmem>>, %arg13: memref<4x32x8xbf16, #tpu.memory_space<vmem>>, %arg14: memref<4x16x8xbf16, #tpu.memory_space<vmem>>, %arg15: memref<4x16x8xbf16, #tpu.memory_space<vmem>>, %arg16: memref<4x8x32xbf16, #tpu.memory_space<vmem>>, %arg17: memref<1x32xf32, #tpu.memory_space<vmem>>, %arg18: memref<1x32xf32, #tpu.memory_space<vmem>>, %arg19: memref<1x32xf32, #tpu.memory_space<vmem>>, %arg20: memref<32x128xbf16, #tpu.memory_space<vmem>>, %arg21: memref<1x128xf32, #tpu.memory_space<vmem>>, %arg22: memref<32x128xbf16, #tpu.memory_space<vmem>>, %arg23: memref<1x128xf32, #tpu.memory_space<vmem>>, %arg24: memref<128x32xbf16, #tpu.memory_space<vmem>>, %arg25: memref<1x32xf32, #tpu.memory_space<vmem>>, %arg26: memref<1x8x32xf32, #tpu.memory_space<vmem>>, %arg27: memref<4x16x8xbf16, #tpu.memory_space<vmem>>, %arg28: memref<4x16x8xbf16, #tpu.memory_space<vmem>>, %arg29: memref<4x128x8xbf16, #tpu.memory_space<vmem>>, %arg30: memref<4x128x8xbf16, #tpu.memory_space<vmem>>, %arg31: memref<4x8x8xbf16, #tpu.memory_space<vmem>>) attributes {dimension_semantics = [#tpu.dimension_semantics<parallel>, #tpu.dimension_semantics<arbitrary>], iteration_bounds = array<i64: 2, 2>, scalar_prefetch = 0 : i64, scratch_operands = 5 : i64, tpu.core_type = #tpu.core_type<tc>, window_params = [{transform_indices = @transform_0, window_bounds = array<i64: 1, 16, 32>}, {transform_indices = @transform_1, window_bounds = array<i64: 1, 128, 16>}, {pipeline_mode = #tpu.pipeline_mode<synchronous>, transform_indices = @transform_2, window_bounds = array<i64: 1, 32>}, {pipeline_mode = #tpu.pipeline_mode<synchronous>, transform_indices = @transform_3, window_bounds = array<i64: 1, 32>}, {pipeline_mode = #tpu.pipeline_mode<synchronous>, transform_indices = @transform_4, window_bounds = array<i64: 4, 32, 8>}, {pipeline_mode = #tpu.pipeline_mode<synchronous>, transform_indices = @transform_5, window_bounds = array<i64: 4, 32, 8>}, {pipeline_mode = #tpu.pipeline_mode<synchronous>, transform_indices = @transform_6, window_bounds = array<i64: 4, 32, 8>}, {pipeline_mode = #tpu.pipeline_mode<synchronous>, transform_indices = @transform_7, window_bounds = array<i64: 4, 8, 32>}, {pipeline_mode = #tpu.pipeline_mode<synchronous>, transform_indices = @transform_8, window_bounds = array<i64: 1, 32>}, {pipeline_mode = #tpu.pipeline_mode<synchronous>, transform_indices = @transform_9, window_bounds = array<i64: 1, 32>}, {pipeline_mode = #tpu.pipeline_mode<synchronous>, transform_indices = @transform_10, window_bounds = array<i64: 1, 32>}, {pipeline_mode = #tpu.pipeline_mode<synchronous>, transform_indices = @transform_11, window_bounds = array<i64: 4, 32, 8>}, {pipeline_mode = #tpu.pipeline_mode<synchronous>, transform_indices = @transform_12, window_bounds = array<i64: 4, 16, 8>}, {pipeline_mode = #tpu.pipeline_mode<synchronous>, transform_indices = @transform_13, window_bounds = array<i64: 4, 16, 8>}, {pipeline_mode = #tpu.pipeline_mode<synchronous>, transform_indices = @transform_14, window_bounds = array<i64: 4, 8, 32>}, {pipeline_mode = #tpu.pipeline_mode<synchronous>, transform_indices = @transform_15, window_bounds = array<i64: 1, 32>}, {pipeline_mode = #tpu.pipeline_mode<synchronous>, transform_indices = @transform_16, window_bounds = array<i64: 1, 32>}, {pipeline_mode = #tpu.pipeline_mode<synchronous>, transform_indices = @transform_17, window_bounds = array<i64: 1, 32>}, {pipeline_mode = #tpu.pipeline_mode<synchronous>, transform_indices = @transform_18, window_bounds = array<i64: 32, 128>}, {pipeline_mode = #tpu.pipeline_mode<synchronous>, transform_indices = @transform_19, window_bounds = array<i64: 1, 128>}, {pipeline_mode = #tpu.pipeline_mode<synchronous>, transform_indices = @transform_20, window_bounds = array<i64: 32, 128>}, {pipeline_mode = #tpu.pipeline_mode<synchronous>, transform_indices = @transform_21, window_bounds = array<i64: 1, 128>}, {pipeline_mode = #tpu.pipeline_mode<synchronous>, transform_indices = @transform_22, window_bounds = array<i64: 128, 32>}, {pipeline_mode = #tpu.pipeline_mode<synchronous>, transform_indices = @transform_23, window_bounds = array<i64: 1, 32>}, {transform_indices = @transform_24, window_bounds = array<i64: 1, 8, 32>}]} {
    %c0 = arith.constant 0 : index
    %c0_0 = arith.constant 0 : index
    %0 = vector.load %arg4[%c0, %c0_0] : memref<1x32xf32, #tpu.memory_space<vmem>>, vector<1x32xf32>
    %c0_1 = arith.constant 0 : index
    %c0_2 = arith.constant 0 : index
    %1 = vector.load %arg5[%c0_1, %c0_2] : memref<1x32xf32, #tpu.memory_space<vmem>>, vector<1x32xf32>
    %c0_3 = arith.constant 0 : index
    %c0_4 = arith.constant 0 : index
    %2 = vector.load %arg11[%c0_3, %c0_4] : memref<1x32xf32, #tpu.memory_space<vmem>>, vector<1x32xf32>
    %c0_5 = arith.constant 0 : index
    %c0_6 = arith.constant 0 : index
    %3 = vector.load %arg12[%c0_5, %c0_6] : memref<1x32xf32, #tpu.memory_space<vmem>>, vector<1x32xf32>
    %c0_7 = arith.constant 0 : index
    %c0_8 = arith.constant 0 : index
    %4 = vector.load %arg18[%c0_7, %c0_8] : memref<1x32xf32, #tpu.memory_space<vmem>>, vector<1x32xf32>
    %c0_9 = arith.constant 0 : index
    %c0_10 = arith.constant 0 : index
    %5 = vector.load %arg19[%c0_9, %c0_10] : memref<1x32xf32, #tpu.memory_space<vmem>>, vector<1x32xf32>
    %c0_11 = arith.constant 0 : index
    %c0_12 = arith.constant 0 : index
    %6 = vector.load %arg10[%c0_11, %c0_12] : memref<1x32xf32, #tpu.memory_space<vmem>>, vector<1x32xf32>
    %c0_13 = arith.constant 0 : index
    %c0_14 = arith.constant 0 : index
    %7 = vector.load %arg17[%c0_13, %c0_14] : memref<1x32xf32, #tpu.memory_space<vmem>>, vector<1x32xf32>
    %c0_15 = arith.constant 0 : index
    %c0_16 = arith.constant 0 : index
    %8 = vector.load %arg21[%c0_15, %c0_16] : memref<1x128xf32, #tpu.memory_space<vmem>>, vector<1x128xf32>
    %c0_17 = arith.constant 0 : index
    %c0_18 = arith.constant 0 : index
    %9 = vector.load %arg23[%c0_17, %c0_18] : memref<1x128xf32, #tpu.memory_space<vmem>>, vector<1x128xf32>
    %c0_19 = arith.constant 0 : index
    %c0_20 = arith.constant 0 : index
    %10 = vector.load %arg25[%c0_19, %c0_20] : memref<1x32xf32, #tpu.memory_space<vmem>>, vector<1x32xf32>
    %c0_i32 = arith.constant 0 : i32
    %11 = arith.cmpi eq, %arg1, %c0_i32 : i32
    %12 = arith.extui %11 : i1 to i32
    %c0_i32_21 = arith.constant 0 : i32
    %13 = arith.cmpi ne, %12, %c0_i32_21 : i32
    scf.if %13 {
      %c0_157 = arith.constant 0 : index
      %c0_158 = arith.constant 0 : index
      %c0_159 = arith.constant 0 : index
      %248 = vector.load %arg2[%c0_157, %c0_158, %c0_159] : memref<1x16x32xf32, #tpu.memory_space<vmem>>, vector<1x16x32xf32>
      %249 = vector.shape_cast %248 : vector<1x16x32xf32> to vector<16x32xf32>
      %cst_160 = arith.constant dense<0.000000e+00> : vector<16xf32>
      %250 = vector.multi_reduction <add>, %249, %cst_160 [1] : vector<16x32xf32> to vector<16xf32>
      %251 = vector.shape_cast %250 : vector<16xf32> to vector<16x1xf32>
      %cst_161 = arith.constant 3.200000e+01 : f32
      %252 = vector.broadcast %cst_161 : f32 to vector<16x1xf32>
      %253 = arith.divf %251, %252 : vector<16x1xf32>
      %254 = vector.broadcast %253 : vector<16x1xf32> to vector<16x32xf32>
      %255 = arith.subf %249, %254 : vector<16x32xf32>
      %256 = arith.mulf %255, %255 : vector<16x32xf32>
      %cst_162 = arith.constant dense<0.000000e+00> : vector<16xf32>
      %257 = vector.multi_reduction <add>, %256, %cst_162 [1] : vector<16x32xf32> to vector<16xf32>
      %258 = vector.shape_cast %257 : vector<16xf32> to vector<16x1xf32>
      %cst_163 = arith.constant 3.200000e+01 : f32
      %259 = vector.broadcast %cst_163 : f32 to vector<16x1xf32>
      %260 = arith.divf %258, %259 : vector<16x1xf32>
      %cst_164 = arith.constant 9.99999974E-6 : f32
      %261 = vector.broadcast %cst_164 : f32 to vector<16x1xf32>
      %262 = arith.addf %260, %261 : vector<16x1xf32>
      %263 = math.rsqrt %262 : vector<16x1xf32>
      %264 = vector.broadcast %263 : vector<16x1xf32> to vector<16x32xf32>
      %265 = arith.mulf %255, %264 : vector<16x32xf32>
      %266 = vector.broadcast %0 : vector<1x32xf32> to vector<16x32xf32>
      %267 = arith.mulf %265, %266 : vector<16x32xf32>
      %268 = vector.broadcast %1 : vector<1x32xf32> to vector<16x32xf32>
      %269 = arith.addf %267, %268 : vector<16x32xf32>
      %270 = arith.truncf %269 : vector<16x32xf32> to vector<16x32xbf16>
      %c0_165 = arith.constant 0 : index
      %c0_166 = arith.constant 0 : index
      %c0_167 = arith.constant 0 : index
      %271 = vector.load %arg3[%c0_165, %c0_166, %c0_167] : memref<1x128x16xf32, #tpu.memory_space<vmem>>, vector<1x128x16xf32>
      %272 = vector.shape_cast %271 : vector<1x128x16xf32> to vector<128x16xf32>
      %273 = arith.truncf %272 : vector<128x16xf32> to vector<128x16xbf16>
      %c0_168 = arith.constant 0 : index
      %c0_169 = arith.constant 0 : index
      %c0_170 = arith.constant 0 : index
      %274 = vector.load %arg7[%c0_168, %c0_169, %c0_170] : memref<4x32x8xbf16, #tpu.memory_space<vmem>>, vector<1x32x8xbf16>
      %275 = vector.shape_cast %274 : vector<1x32x8xbf16> to vector<32x8xbf16>
      %cst_171 = arith.constant dense<0.000000e+00> : vector<16x8xf32>
      %276 = tpu.matmul %270, %275, %cst_171 {dimension_numbers = #tpu.dot_dimension_numbers<[1], [0], [0], [1], [0, 0, 1, 1], [], []>} : vector<16x32xbf16>, vector<32x8xbf16>, vector<16x8xf32> -> vector<16x8xf32>
      %277 = arith.truncf %276 : vector<16x8xf32> to vector<16x8xbf16>
      %c0_172 = arith.constant 0 : index
      %c0_173 = arith.constant 0 : index
      %c0_174 = arith.constant 0 : index
      %278 = vector.load %arg27[%c0_172, %c0_173, %c0_174] : memref<4x16x8xbf16, #tpu.memory_space<vmem>>, vector<1x16x8xbf16>
      %279 = vector.shape_cast %278 : vector<1x16x8xbf16> to vector<16x8xbf16>
      %280 = vector.shape_cast %277 : vector<16x8xbf16> to vector<1x16x8xbf16>
      tpu.vector_store %arg27[%c0_172, %c0_173, %c0_174], %280 {strides = array<i32>} : memref<4x16x8xbf16, #tpu.memory_space<vmem>>, vector<1x16x8xbf16>,
      %c0_175 = arith.constant 0 : index
      %c0_176 = arith.constant 0 : index
      %c0_177 = arith.constant 0 : index
      %281 = vector.load %arg8[%c0_175, %c0_176, %c0_177] : memref<4x32x8xbf16, #tpu.memory_space<vmem>>, vector<1x32x8xbf16>
      %282 = vector.shape_cast %281 : vector<1x32x8xbf16> to vector<32x8xbf16>
      %cst_178 = arith.constant dense<0.000000e+00> : vector<16x8xf32>
      %283 = tpu.matmul %270, %282, %cst_178 {dimension_numbers = #tpu.dot_dimension_numbers<[1], [0], [0], [1], [0, 0, 1, 1], [], []>} : vector<16x32xbf16>, vector<32x8xbf16>, vector<16x8xf32> -> vector<16x8xf32>
      %284 = arith.truncf %283 : vector<16x8xf32> to vector<16x8xbf16>
      %c0_179 = arith.constant 0 : index
      %c0_180 = arith.constant 0 : index
      %c0_181 = arith.constant 0 : index
      %285 = vector.load %arg28[%c0_179, %c0_180, %c0_181] : memref<4x16x8xbf16, #tpu.memory_space<vmem>>, vector<1x16x8xbf16>
      %286 = vector.shape_cast %285 : vector<1x16x8xbf16> to vector<16x8xbf16>
      %287 = vector.shape_cast %284 : vector<16x8xbf16> to vector<1x16x8xbf16>
      tpu.vector_store %arg28[%c0_179, %c0_180, %c0_181], %287 {strides = array<i32>} : memref<4x16x8xbf16, #tpu.memory_space<vmem>>, vector<1x16x8xbf16>,
      %c0_182 = arith.constant 0 : index
      %c0_183 = arith.constant 0 : index
      %c0_184 = arith.constant 0 : index
      %288 = vector.load %arg14[%c0_182, %c0_183, %c0_184] : memref<4x16x8xbf16, #tpu.memory_space<vmem>>, vector<1x16x8xbf16>
      %289 = vector.shape_cast %288 : vector<1x16x8xbf16> to vector<16x8xbf16>
      %cst_185 = arith.constant dense<0.000000e+00> : vector<128x8xf32>
      %290 = tpu.matmul %273, %289, %cst_185 {dimension_numbers = #tpu.dot_dimension_numbers<[1], [0], [0], [1], [0, 0, 1, 1], [], []>} : vector<128x16xbf16>, vector<16x8xbf16>, vector<128x8xf32> -> vector<128x8xf32>
      %291 = arith.truncf %290 : vector<128x8xf32> to vector<128x8xbf16>
      %c0_186 = arith.constant 0 : index
      %c0_187 = arith.constant 0 : index
      %c0_188 = arith.constant 0 : index
      %292 = vector.load %arg29[%c0_186, %c0_187, %c0_188] : memref<4x128x8xbf16, #tpu.memory_space<vmem>>, vector<1x128x8xbf16>
      %293 = vector.shape_cast %292 : vector<1x128x8xbf16> to vector<128x8xbf16>
      %294 = vector.shape_cast %291 : vector<128x8xbf16> to vector<1x128x8xbf16>
      tpu.vector_store %arg29[%c0_186, %c0_187, %c0_188], %294 {strides = array<i32>} : memref<4x128x8xbf16, #tpu.memory_space<vmem>>, vector<1x128x8xbf16>,
      %c0_189 = arith.constant 0 : index
      %c0_190 = arith.constant 0 : index
      %c0_191 = arith.constant 0 : index
      %295 = vector.load %arg15[%c0_189, %c0_190, %c0_191] : memref<4x16x8xbf16, #tpu.memory_space<vmem>>, vector<1x16x8xbf16>
      %296 = vector.shape_cast %295 : vector<1x16x8xbf16> to vector<16x8xbf16>
      %cst_192 = arith.constant dense<0.000000e+00> : vector<128x8xf32>
      %297 = tpu.matmul %273, %296, %cst_192 {dimension_numbers = #tpu.dot_dimension_numbers<[1], [0], [0], [1], [0, 0, 1, 1], [], []>} : vector<128x16xbf16>, vector<16x8xbf16>, vector<128x8xf32> -> vector<128x8xf32>
      %298 = arith.truncf %297 : vector<128x8xf32> to vector<128x8xbf16>
      %c0_193 = arith.constant 0 : index
      %c0_194 = arith.constant 0 : index
      %c0_195 = arith.constant 0 : index
      %299 = vector.load %arg30[%c0_193, %c0_194, %c0_195] : memref<4x128x8xbf16, #tpu.memory_space<vmem>>, vector<1x128x8xbf16>
      %300 = vector.shape_cast %299 : vector<1x128x8xbf16> to vector<128x8xbf16>
      %301 = vector.shape_cast %298 : vector<128x8xbf16> to vector<1x128x8xbf16>
      tpu.vector_store %arg30[%c0_193, %c0_194, %c0_195], %301 {strides = array<i32>} : memref<4x128x8xbf16, #tpu.memory_space<vmem>>, vector<1x128x8xbf16>,
      %c1_196 = arith.constant 1 : index
      %c0_197 = arith.constant 0 : index
      %c0_198 = arith.constant 0 : index
      %302 = vector.load %arg7[%c1_196, %c0_197, %c0_198] : memref<4x32x8xbf16, #tpu.memory_space<vmem>>, vector<1x32x8xbf16>
      %303 = vector.shape_cast %302 : vector<1x32x8xbf16> to vector<32x8xbf16>
      %cst_199 = arith.constant dense<0.000000e+00> : vector<16x8xf32>
      %304 = tpu.matmul %270, %303, %cst_199 {dimension_numbers = #tpu.dot_dimension_numbers<[1], [0], [0], [1], [0, 0, 1, 1], [], []>} : vector<16x32xbf16>, vector<32x8xbf16>, vector<16x8xf32> -> vector<16x8xf32>
      %305 = arith.truncf %304 : vector<16x8xf32> to vector<16x8xbf16>
      %c1_200 = arith.constant 1 : index
      %c0_201 = arith.constant 0 : index
      %c0_202 = arith.constant 0 : index
      %306 = vector.load %arg27[%c1_200, %c0_201, %c0_202] : memref<4x16x8xbf16, #tpu.memory_space<vmem>>, vector<1x16x8xbf16>
      %307 = vector.shape_cast %306 : vector<1x16x8xbf16> to vector<16x8xbf16>
      %308 = vector.shape_cast %305 : vector<16x8xbf16> to vector<1x16x8xbf16>
      tpu.vector_store %arg27[%c1_200, %c0_201, %c0_202], %308 {strides = array<i32>} : memref<4x16x8xbf16, #tpu.memory_space<vmem>>, vector<1x16x8xbf16>,
      %c1_203 = arith.constant 1 : index
      %c0_204 = arith.constant 0 : index
      %c0_205 = arith.constant 0 : index
      %309 = vector.load %arg8[%c1_203, %c0_204, %c0_205] : memref<4x32x8xbf16, #tpu.memory_space<vmem>>, vector<1x32x8xbf16>
      %310 = vector.shape_cast %309 : vector<1x32x8xbf16> to vector<32x8xbf16>
      %cst_206 = arith.constant dense<0.000000e+00> : vector<16x8xf32>
      %311 = tpu.matmul %270, %310, %cst_206 {dimension_numbers = #tpu.dot_dimension_numbers<[1], [0], [0], [1], [0, 0, 1, 1], [], []>} : vector<16x32xbf16>, vector<32x8xbf16>, vector<16x8xf32> -> vector<16x8xf32>
      %312 = arith.truncf %311 : vector<16x8xf32> to vector<16x8xbf16>
      %c1_207 = arith.constant 1 : index
      %c0_208 = arith.constant 0 : index
      %c0_209 = arith.constant 0 : index
      %313 = vector.load %arg28[%c1_207, %c0_208, %c0_209] : memref<4x16x8xbf16, #tpu.memory_space<vmem>>, vector<1x16x8xbf16>
      %314 = vector.shape_cast %313 : vector<1x16x8xbf16> to vector<16x8xbf16>
      %315 = vector.shape_cast %312 : vector<16x8xbf16> to vector<1x16x8xbf16>
      tpu.vector_store %arg28[%c1_207, %c0_208, %c0_209], %315 {strides = array<i32>} : memref<4x16x8xbf16, #tpu.memory_space<vmem>>, vector<1x16x8xbf16>,
      %c1_210 = arith.constant 1 : index
      %c0_211 = arith.constant 0 : index
      %c0_212 = arith.constant 0 : index
      %316 = vector.load %arg14[%c1_210, %c0_211, %c0_212] : memref<4x16x8xbf16, #tpu.memory_space<vmem>>, vector<1x16x8xbf16>
      %317 = vector.shape_cast %316 : vector<1x16x8xbf16> to vector<16x8xbf16>
      %cst_213 = arith.constant dense<0.000000e+00> : vector<128x8xf32>
      %318 = tpu.matmul %273, %317, %cst_213 {dimension_numbers = #tpu.dot_dimension_numbers<[1], [0], [0], [1], [0, 0, 1, 1], [], []>} : vector<128x16xbf16>, vector<16x8xbf16>, vector<128x8xf32> -> vector<128x8xf32>
      %319 = arith.truncf %318 : vector<128x8xf32> to vector<128x8xbf16>
      %c1_214 = arith.constant 1 : index
      %c0_215 = arith.constant 0 : index
      %c0_216 = arith.constant 0 : index
      %320 = vector.load %arg29[%c1_214, %c0_215, %c0_216] : memref<4x128x8xbf16, #tpu.memory_space<vmem>>, vector<1x128x8xbf16>
      %321 = vector.shape_cast %320 : vector<1x128x8xbf16> to vector<128x8xbf16>
      %322 = vector.shape_cast %319 : vector<128x8xbf16> to vector<1x128x8xbf16>
      tpu.vector_store %arg29[%c1_214, %c0_215, %c0_216], %322 {strides = array<i32>} : memref<4x128x8xbf16, #tpu.memory_space<vmem>>, vector<1x128x8xbf16>,
      %c1_217 = arith.constant 1 : index
      %c0_218 = arith.constant 0 : index
      %c0_219 = arith.constant 0 : index
      %323 = vector.load %arg15[%c1_217, %c0_218, %c0_219] : memref<4x16x8xbf16, #tpu.memory_space<vmem>>, vector<1x16x8xbf16>
      %324 = vector.shape_cast %323 : vector<1x16x8xbf16> to vector<16x8xbf16>
      %cst_220 = arith.constant dense<0.000000e+00> : vector<128x8xf32>
      %325 = tpu.matmul %273, %324, %cst_220 {dimension_numbers = #tpu.dot_dimension_numbers<[1], [0], [0], [1], [0, 0, 1, 1], [], []>} : vector<128x16xbf16>, vector<16x8xbf16>, vector<128x8xf32> -> vector<128x8xf32>
      %326 = arith.truncf %325 : vector<128x8xf32> to vector<128x8xbf16>
      %c1_221 = arith.constant 1 : index
      %c0_222 = arith.constant 0 : index
      %c0_223 = arith.constant 0 : index
      %327 = vector.load %arg30[%c1_221, %c0_222, %c0_223] : memref<4x128x8xbf16, #tpu.memory_space<vmem>>, vector<1x128x8xbf16>
      %328 = vector.shape_cast %327 : vector<1x128x8xbf16> to vector<128x8xbf16>
      %329 = vector.shape_cast %326 : vector<128x8xbf16> to vector<1x128x8xbf16>
      tpu.vector_store %arg30[%c1_221, %c0_222, %c0_223], %329 {strides = array<i32>} : memref<4x128x8xbf16, #tpu.memory_space<vmem>>, vector<1x128x8xbf16>,
      %c2_224 = arith.constant 2 : index
      %c0_225 = arith.constant 0 : index
      %c0_226 = arith.constant 0 : index
      %330 = vector.load %arg7[%c2_224, %c0_225, %c0_226] : memref<4x32x8xbf16, #tpu.memory_space<vmem>>, vector<1x32x8xbf16>
      %331 = vector.shape_cast %330 : vector<1x32x8xbf16> to vector<32x8xbf16>
      %cst_227 = arith.constant dense<0.000000e+00> : vector<16x8xf32>
      %332 = tpu.matmul %270, %331, %cst_227 {dimension_numbers = #tpu.dot_dimension_numbers<[1], [0], [0], [1], [0, 0, 1, 1], [], []>} : vector<16x32xbf16>, vector<32x8xbf16>, vector<16x8xf32> -> vector<16x8xf32>
      %333 = arith.truncf %332 : vector<16x8xf32> to vector<16x8xbf16>
      %c2_228 = arith.constant 2 : index
      %c0_229 = arith.constant 0 : index
      %c0_230 = arith.constant 0 : index
      %334 = vector.load %arg27[%c2_228, %c0_229, %c0_230] : memref<4x16x8xbf16, #tpu.memory_space<vmem>>, vector<1x16x8xbf16>
      %335 = vector.shape_cast %334 : vector<1x16x8xbf16> to vector<16x8xbf16>
      %336 = vector.shape_cast %333 : vector<16x8xbf16> to vector<1x16x8xbf16>
      tpu.vector_store %arg27[%c2_228, %c0_229, %c0_230], %336 {strides = array<i32>} : memref<4x16x8xbf16, #tpu.memory_space<vmem>>, vector<1x16x8xbf16>,
      %c2_231 = arith.constant 2 : index
      %c0_232 = arith.constant 0 : index
      %c0_233 = arith.constant 0 : index
      %337 = vector.load %arg8[%c2_231, %c0_232, %c0_233] : memref<4x32x8xbf16, #tpu.memory_space<vmem>>, vector<1x32x8xbf16>
      %338 = vector.shape_cast %337 : vector<1x32x8xbf16> to vector<32x8xbf16>
      %cst_234 = arith.constant dense<0.000000e+00> : vector<16x8xf32>
      %339 = tpu.matmul %270, %338, %cst_234 {dimension_numbers = #tpu.dot_dimension_numbers<[1], [0], [0], [1], [0, 0, 1, 1], [], []>} : vector<16x32xbf16>, vector<32x8xbf16>, vector<16x8xf32> -> vector<16x8xf32>
      %340 = arith.truncf %339 : vector<16x8xf32> to vector<16x8xbf16>
      %c2_235 = arith.constant 2 : index
      %c0_236 = arith.constant 0 : index
      %c0_237 = arith.constant 0 : index
      %341 = vector.load %arg28[%c2_235, %c0_236, %c0_237] : memref<4x16x8xbf16, #tpu.memory_space<vmem>>, vector<1x16x8xbf16>
      %342 = vector.shape_cast %341 : vector<1x16x8xbf16> to vector<16x8xbf16>
      %343 = vector.shape_cast %340 : vector<16x8xbf16> to vector<1x16x8xbf16>
      tpu.vector_store %arg28[%c2_235, %c0_236, %c0_237], %343 {strides = array<i32>} : memref<4x16x8xbf16, #tpu.memory_space<vmem>>, vector<1x16x8xbf16>,
      %c2_238 = arith.constant 2 : index
      %c0_239 = arith.constant 0 : index
      %c0_240 = arith.constant 0 : index
      %344 = vector.load %arg14[%c2_238, %c0_239, %c0_240] : memref<4x16x8xbf16, #tpu.memory_space<vmem>>, vector<1x16x8xbf16>
      %345 = vector.shape_cast %344 : vector<1x16x8xbf16> to vector<16x8xbf16>
      %cst_241 = arith.constant dense<0.000000e+00> : vector<128x8xf32>
      %346 = tpu.matmul %273, %345, %cst_241 {dimension_numbers = #tpu.dot_dimension_numbers<[1], [0], [0], [1], [0, 0, 1, 1], [], []>} : vector<128x16xbf16>, vector<16x8xbf16>, vector<128x8xf32> -> vector<128x8xf32>
      %347 = arith.truncf %346 : vector<128x8xf32> to vector<128x8xbf16>
      %c2_242 = arith.constant 2 : index
      %c0_243 = arith.constant 0 : index
      %c0_244 = arith.constant 0 : index
      %348 = vector.load %arg29[%c2_242, %c0_243, %c0_244] : memref<4x128x8xbf16, #tpu.memory_space<vmem>>, vector<1x128x8xbf16>
      %349 = vector.shape_cast %348 : vector<1x128x8xbf16> to vector<128x8xbf16>
      %350 = vector.shape_cast %347 : vector<128x8xbf16> to vector<1x128x8xbf16>
      tpu.vector_store %arg29[%c2_242, %c0_243, %c0_244], %350 {strides = array<i32>} : memref<4x128x8xbf16, #tpu.memory_space<vmem>>, vector<1x128x8xbf16>,
      %c2_245 = arith.constant 2 : index
      %c0_246 = arith.constant 0 : index
      %c0_247 = arith.constant 0 : index
      %351 = vector.load %arg15[%c2_245, %c0_246, %c0_247] : memref<4x16x8xbf16, #tpu.memory_space<vmem>>, vector<1x16x8xbf16>
      %352 = vector.shape_cast %351 : vector<1x16x8xbf16> to vector<16x8xbf16>
      %cst_248 = arith.constant dense<0.000000e+00> : vector<128x8xf32>
      %353 = tpu.matmul %273, %352, %cst_248 {dimension_numbers = #tpu.dot_dimension_numbers<[1], [0], [0], [1], [0, 0, 1, 1], [], []>} : vector<128x16xbf16>, vector<16x8xbf16>, vector<128x8xf32> -> vector<128x8xf32>
      %354 = arith.truncf %353 : vector<128x8xf32> to vector<128x8xbf16>
      %c2_249 = arith.constant 2 : index
      %c0_250 = arith.constant 0 : index
      %c0_251 = arith.constant 0 : index
      %355 = vector.load %arg30[%c2_249, %c0_250, %c0_251] : memref<4x128x8xbf16, #tpu.memory_space<vmem>>, vector<1x128x8xbf16>
      %356 = vector.shape_cast %355 : vector<1x128x8xbf16> to vector<128x8xbf16>
      %357 = vector.shape_cast %354 : vector<128x8xbf16> to vector<1x128x8xbf16>
      tpu.vector_store %arg30[%c2_249, %c0_250, %c0_251], %357 {strides = array<i32>} : memref<4x128x8xbf16, #tpu.memory_space<vmem>>, vector<1x128x8xbf16>,
      %c3_252 = arith.constant 3 : index
      %c0_253 = arith.constant 0 : index
      %c0_254 = arith.constant 0 : index
      %358 = vector.load %arg7[%c3_252, %c0_253, %c0_254] : memref<4x32x8xbf16, #tpu.memory_space<vmem>>, vector<1x32x8xbf16>
      %359 = vector.shape_cast %358 : vector<1x32x8xbf16> to vector<32x8xbf16>
      %cst_255 = arith.constant dense<0.000000e+00> : vector<16x8xf32>
      %360 = tpu.matmul %270, %359, %cst_255 {dimension_numbers = #tpu.dot_dimension_numbers<[1], [0], [0], [1], [0, 0, 1, 1], [], []>} : vector<16x32xbf16>, vector<32x8xbf16>, vector<16x8xf32> -> vector<16x8xf32>
      %361 = arith.truncf %360 : vector<16x8xf32> to vector<16x8xbf16>
      %c3_256 = arith.constant 3 : index
      %c0_257 = arith.constant 0 : index
      %c0_258 = arith.constant 0 : index
      %362 = vector.load %arg27[%c3_256, %c0_257, %c0_258] : memref<4x16x8xbf16, #tpu.memory_space<vmem>>, vector<1x16x8xbf16>
      %363 = vector.shape_cast %362 : vector<1x16x8xbf16> to vector<16x8xbf16>
      %364 = vector.shape_cast %361 : vector<16x8xbf16> to vector<1x16x8xbf16>
      tpu.vector_store %arg27[%c3_256, %c0_257, %c0_258], %364 {strides = array<i32>} : memref<4x16x8xbf16, #tpu.memory_space<vmem>>, vector<1x16x8xbf16>,
      %c3_259 = arith.constant 3 : index
      %c0_260 = arith.constant 0 : index
      %c0_261 = arith.constant 0 : index
      %365 = vector.load %arg8[%c3_259, %c0_260, %c0_261] : memref<4x32x8xbf16, #tpu.memory_space<vmem>>, vector<1x32x8xbf16>
      %366 = vector.shape_cast %365 : vector<1x32x8xbf16> to vector<32x8xbf16>
      %cst_262 = arith.constant dense<0.000000e+00> : vector<16x8xf32>
      %367 = tpu.matmul %270, %366, %cst_262 {dimension_numbers = #tpu.dot_dimension_numbers<[1], [0], [0], [1], [0, 0, 1, 1], [], []>} : vector<16x32xbf16>, vector<32x8xbf16>, vector<16x8xf32> -> vector<16x8xf32>
      %368 = arith.truncf %367 : vector<16x8xf32> to vector<16x8xbf16>
      %c3_263 = arith.constant 3 : index
      %c0_264 = arith.constant 0 : index
      %c0_265 = arith.constant 0 : index
      %369 = vector.load %arg28[%c3_263, %c0_264, %c0_265] : memref<4x16x8xbf16, #tpu.memory_space<vmem>>, vector<1x16x8xbf16>
      %370 = vector.shape_cast %369 : vector<1x16x8xbf16> to vector<16x8xbf16>
      %371 = vector.shape_cast %368 : vector<16x8xbf16> to vector<1x16x8xbf16>
      tpu.vector_store %arg28[%c3_263, %c0_264, %c0_265], %371 {strides = array<i32>} : memref<4x16x8xbf16, #tpu.memory_space<vmem>>, vector<1x16x8xbf16>,
      %c3_266 = arith.constant 3 : index
      %c0_267 = arith.constant 0 : index
      %c0_268 = arith.constant 0 : index
      %372 = vector.load %arg14[%c3_266, %c0_267, %c0_268] : memref<4x16x8xbf16, #tpu.memory_space<vmem>>, vector<1x16x8xbf16>
      %373 = vector.shape_cast %372 : vector<1x16x8xbf16> to vector<16x8xbf16>
      %cst_269 = arith.constant dense<0.000000e+00> : vector<128x8xf32>
      %374 = tpu.matmul %273, %373, %cst_269 {dimension_numbers = #tpu.dot_dimension_numbers<[1], [0], [0], [1], [0, 0, 1, 1], [], []>} : vector<128x16xbf16>, vector<16x8xbf16>, vector<128x8xf32> -> vector<128x8xf32>
      %375 = arith.truncf %374 : vector<128x8xf32> to vector<128x8xbf16>
      %c3_270 = arith.constant 3 : index
      %c0_271 = arith.constant 0 : index
      %c0_272 = arith.constant 0 : index
      %376 = vector.load %arg29[%c3_270, %c0_271, %c0_272] : memref<4x128x8xbf16, #tpu.memory_space<vmem>>, vector<1x128x8xbf16>
      %377 = vector.shape_cast %376 : vector<1x128x8xbf16> to vector<128x8xbf16>
      %378 = vector.shape_cast %375 : vector<128x8xbf16> to vector<1x128x8xbf16>
      tpu.vector_store %arg29[%c3_270, %c0_271, %c0_272], %378 {strides = array<i32>} : memref<4x128x8xbf16, #tpu.memory_space<vmem>>, vector<1x128x8xbf16>,
      %c3_273 = arith.constant 3 : index
      %c0_274 = arith.constant 0 : index
      %c0_275 = arith.constant 0 : index
      %379 = vector.load %arg15[%c3_273, %c0_274, %c0_275] : memref<4x16x8xbf16, #tpu.memory_space<vmem>>, vector<1x16x8xbf16>
      %380 = vector.shape_cast %379 : vector<1x16x8xbf16> to vector<16x8xbf16>
      %cst_276 = arith.constant dense<0.000000e+00> : vector<128x8xf32>
      %381 = tpu.matmul %273, %380, %cst_276 {dimension_numbers = #tpu.dot_dimension_numbers<[1], [0], [0], [1], [0, 0, 1, 1], [], []>} : vector<128x16xbf16>, vector<16x8xbf16>, vector<128x8xf32> -> vector<128x8xf32>
      %382 = arith.truncf %381 : vector<128x8xf32> to vector<128x8xbf16>
      %c3_277 = arith.constant 3 : index
      %c0_278 = arith.constant 0 : index
      %c0_279 = arith.constant 0 : index
      %383 = vector.load %arg30[%c3_277, %c0_278, %c0_279] : memref<4x128x8xbf16, #tpu.memory_space<vmem>>, vector<1x128x8xbf16>
      %384 = vector.shape_cast %383 : vector<1x128x8xbf16> to vector<128x8xbf16>
      %385 = vector.shape_cast %382 : vector<128x8xbf16> to vector<1x128x8xbf16>
      tpu.vector_store %arg30[%c3_277, %c0_278, %c0_279], %385 {strides = array<i32>} : memref<4x128x8xbf16, #tpu.memory_space<vmem>>, vector<1x128x8xbf16>,
    } else {
    }
    %c8_i32 = arith.constant 8 : i32
    %14 = arith.muli %arg1, %c8_i32 : i32
    %15 = tpu.assume_multiple %14, 8 : i32
    %c0_22 = arith.constant 0 : index
    %16 = arith.index_cast %15 : i32 to index
    %c0_23 = arith.constant 0 : index
    %17 = vector.load %arg2[%c0_22, %16, %c0_23] : memref<1x16x32xf32, #tpu.memory_space<vmem>>, vector<1x8x32xf32>
    %18 = vector.shape_cast %17 : vector<1x8x32xf32> to vector<8x32xf32>
    %cst = arith.constant dense<0.000000e+00> : vector<8xf32>
    %19 = vector.multi_reduction <add>, %18, %cst [1] : vector<8x32xf32> to vector<8xf32>
    %20 = vector.shape_cast %19 : vector<8xf32> to vector<8x1xf32>
    %cst_24 = arith.constant 3.200000e+01 : f32
    %21 = vector.broadcast %cst_24 : f32 to vector<8x1xf32>
    %22 = arith.divf %20, %21 : vector<8x1xf32>
    %23 = vector.broadcast %22 : vector<8x1xf32> to vector<8x32xf32>
    %24 = arith.subf %18, %23 : vector<8x32xf32>
    %25 = arith.mulf %24, %24 : vector<8x32xf32>
    %cst_25 = arith.constant dense<0.000000e+00> : vector<8xf32>
    %26 = vector.multi_reduction <add>, %25, %cst_25 [1] : vector<8x32xf32> to vector<8xf32>
    %27 = vector.shape_cast %26 : vector<8xf32> to vector<8x1xf32>
    %cst_26 = arith.constant 3.200000e+01 : f32
    %28 = vector.broadcast %cst_26 : f32 to vector<8x1xf32>
    %29 = arith.divf %27, %28 : vector<8x1xf32>
    %cst_27 = arith.constant 9.99999974E-6 : f32
    %30 = vector.broadcast %cst_27 : f32 to vector<8x1xf32>
    %31 = arith.addf %29, %30 : vector<8x1xf32>
    %32 = math.rsqrt %31 : vector<8x1xf32>
    %33 = vector.broadcast %32 : vector<8x1xf32> to vector<8x32xf32>
    %34 = arith.mulf %24, %33 : vector<8x32xf32>
    %35 = vector.broadcast %0 : vector<1x32xf32> to vector<8x32xf32>
    %36 = arith.mulf %34, %35 : vector<8x32xf32>
    %37 = vector.broadcast %1 : vector<1x32xf32> to vector<8x32xf32>
    %38 = arith.addf %36, %37 : vector<8x32xf32>
    %c0_28 = arith.constant 0 : index
    %c0_29 = arith.constant 0 : index
    %c0_30 = arith.constant 0 : index
    %39 = vector.load %arg27[%c0_28, %c0_29, %c0_30] : memref<4x16x8xbf16, #tpu.memory_space<vmem>>, vector<4x16x8xbf16>
    %c0_31 = arith.constant 0 : index
    %c0_32 = arith.constant 0 : index
    %c0_33 = arith.constant 0 : index
    %40 = vector.load %arg28[%c0_31, %c0_32, %c0_33] : memref<4x16x8xbf16, #tpu.memory_space<vmem>>, vector<4x16x8xbf16>
    %41 = arith.truncf %38 : vector<8x32xf32> to vector<8x32xbf16>
    %c0_34 = arith.constant 0 : index
    %c0_35 = arith.constant 0 : index
    %c0_36 = arith.constant 0 : index
    %42 = vector.load %arg6[%c0_34, %c0_35, %c0_36] : memref<4x32x8xbf16, #tpu.memory_space<vmem>>, vector<1x32x8xbf16>
    %43 = vector.shape_cast %42 : vector<1x32x8xbf16> to vector<32x8xbf16>
    %cst_37 = arith.constant dense<0.000000e+00> : vector<8x8xf32>
    %44 = tpu.matmul %41, %43, %cst_37 {dimension_numbers = #tpu.dot_dimension_numbers<[1], [0], [0], [1], [0, 0, 1, 1], [], []>} : vector<8x32xbf16>, vector<32x8xbf16>, vector<8x8xf32> -> vector<8x8xf32>
    %45 = arith.truncf %44 : vector<8x8xf32> to vector<8x8xbf16>
    %c0_38 = arith.constant 0 : index
    %c0_39 = arith.constant 0 : index
    %c0_40 = arith.constant 0 : index
    %46 = vector.load %arg31[%c0_38, %c0_39, %c0_40] : memref<4x8x8xbf16, #tpu.memory_space<vmem>>, vector<1x8x8xbf16>
    %47 = vector.shape_cast %46 : vector<1x8x8xbf16> to vector<8x8xbf16>
    %48 = vector.shape_cast %45 : vector<8x8xbf16> to vector<1x8x8xbf16>
    tpu.vector_store %arg31[%c0_38, %c0_39, %c0_40], %48 {strides = array<i32>} : memref<4x8x8xbf16, #tpu.memory_space<vmem>>, vector<1x8x8xbf16>,
    %c1 = arith.constant 1 : index
    %c0_41 = arith.constant 0 : index
    %c0_42 = arith.constant 0 : index
    %49 = vector.load %arg6[%c1, %c0_41, %c0_42] : memref<4x32x8xbf16, #tpu.memory_space<vmem>>, vector<1x32x8xbf16>
    %50 = vector.shape_cast %49 : vector<1x32x8xbf16> to vector<32x8xbf16>
    %cst_43 = arith.constant dense<0.000000e+00> : vector<8x8xf32>
    %51 = tpu.matmul %41, %50, %cst_43 {dimension_numbers = #tpu.dot_dimension_numbers<[1], [0], [0], [1], [0, 0, 1, 1], [], []>} : vector<8x32xbf16>, vector<32x8xbf16>, vector<8x8xf32> -> vector<8x8xf32>
    %52 = arith.truncf %51 : vector<8x8xf32> to vector<8x8xbf16>
    %c1_44 = arith.constant 1 : index
    %c0_45 = arith.constant 0 : index
    %c0_46 = arith.constant 0 : index
    %53 = vector.load %arg31[%c1_44, %c0_45, %c0_46] : memref<4x8x8xbf16, #tpu.memory_space<vmem>>, vector<1x8x8xbf16>
    %54 = vector.shape_cast %53 : vector<1x8x8xbf16> to vector<8x8xbf16>
    %55 = vector.shape_cast %52 : vector<8x8xbf16> to vector<1x8x8xbf16>
    tpu.vector_store %arg31[%c1_44, %c0_45, %c0_46], %55 {strides = array<i32>} : memref<4x8x8xbf16, #tpu.memory_space<vmem>>, vector<1x8x8xbf16>,
    %c2 = arith.constant 2 : index
    %c0_47 = arith.constant 0 : index
    %c0_48 = arith.constant 0 : index
    %56 = vector.load %arg6[%c2, %c0_47, %c0_48] : memref<4x32x8xbf16, #tpu.memory_space<vmem>>, vector<1x32x8xbf16>
    %57 = vector.shape_cast %56 : vector<1x32x8xbf16> to vector<32x8xbf16>
    %cst_49 = arith.constant dense<0.000000e+00> : vector<8x8xf32>
    %58 = tpu.matmul %41, %57, %cst_49 {dimension_numbers = #tpu.dot_dimension_numbers<[1], [0], [0], [1], [0, 0, 1, 1], [], []>} : vector<8x32xbf16>, vector<32x8xbf16>, vector<8x8xf32> -> vector<8x8xf32>
    %59 = arith.truncf %58 : vector<8x8xf32> to vector<8x8xbf16>
    %c2_50 = arith.constant 2 : index
    %c0_51 = arith.constant 0 : index
    %c0_52 = arith.constant 0 : index
    %60 = vector.load %arg31[%c2_50, %c0_51, %c0_52] : memref<4x8x8xbf16, #tpu.memory_space<vmem>>, vector<1x8x8xbf16>
    %61 = vector.shape_cast %60 : vector<1x8x8xbf16> to vector<8x8xbf16>
    %62 = vector.shape_cast %59 : vector<8x8xbf16> to vector<1x8x8xbf16>
    tpu.vector_store %arg31[%c2_50, %c0_51, %c0_52], %62 {strides = array<i32>} : memref<4x8x8xbf16, #tpu.memory_space<vmem>>, vector<1x8x8xbf16>,
    %c3 = arith.constant 3 : index
    %c0_53 = arith.constant 0 : index
    %c0_54 = arith.constant 0 : index
    %63 = vector.load %arg6[%c3, %c0_53, %c0_54] : memref<4x32x8xbf16, #tpu.memory_space<vmem>>, vector<1x32x8xbf16>
    %64 = vector.shape_cast %63 : vector<1x32x8xbf16> to vector<32x8xbf16>
    %cst_55 = arith.constant dense<0.000000e+00> : vector<8x8xf32>
    %65 = tpu.matmul %41, %64, %cst_55 {dimension_numbers = #tpu.dot_dimension_numbers<[1], [0], [0], [1], [0, 0, 1, 1], [], []>} : vector<8x32xbf16>, vector<32x8xbf16>, vector<8x8xf32> -> vector<8x8xf32>
    %66 = arith.truncf %65 : vector<8x8xf32> to vector<8x8xbf16>
    %c3_56 = arith.constant 3 : index
    %c0_57 = arith.constant 0 : index
    %c0_58 = arith.constant 0 : index
    %67 = vector.load %arg31[%c3_56, %c0_57, %c0_58] : memref<4x8x8xbf16, #tpu.memory_space<vmem>>, vector<1x8x8xbf16>
    %68 = vector.shape_cast %67 : vector<1x8x8xbf16> to vector<8x8xbf16>
    %69 = vector.shape_cast %66 : vector<8x8xbf16> to vector<1x8x8xbf16>
    tpu.vector_store %arg31[%c3_56, %c0_57, %c0_58], %69 {strides = array<i32>} : memref<4x8x8xbf16, #tpu.memory_space<vmem>>, vector<1x8x8xbf16>,
    %c0_59 = arith.constant 0 : index
    %c0_60 = arith.constant 0 : index
    %c0_61 = arith.constant 0 : index
    %70 = vector.load %arg31[%c0_59, %c0_60, %c0_61] : memref<4x8x8xbf16, #tpu.memory_space<vmem>>, vector<4x8x8xbf16>
    "tpu.trace_start"() <{level = 10 : i32, message = "hqd,hkd->hqk"}> : () -> ()
    %cst_62 = arith.constant dense<0.000000e+00> : vector<4x8x16xf32>
    %71 = tpu.matmul %70, %39, %cst_62 {dimension_numbers = #tpu.dot_dimension_numbers<[2], [2], [1], [1], [0, 0, 0, 1, 1, 1], [0], [0]>} : vector<4x8x8xbf16>, vector<4x16x8xbf16>, vector<4x8x16xf32> -> vector<4x8x16xf32>
    "tpu.trace_stop"() : () -> ()
    %cst_63 = arith.constant dense<0xFF800000> : vector<4x8xf32>
    %72 = vector.multi_reduction <maximumf>, %71, %cst_63 [2] : vector<4x8x16xf32> to vector<4x8xf32>
    %73 = vector.shape_cast %72 : vector<4x8xf32> to vector<4x8x1xf32>
    %74 = vector.broadcast %73 : vector<4x8x1xf32> to vector<4x8x16xf32>
    %75 = arith.subf %71, %74 : vector<4x8x16xf32>
    %76 = math.exp %75 : vector<4x8x16xf32>
    %cst_64 = arith.constant dense<0.000000e+00> : vector<4x8xf32>
    %77 = vector.multi_reduction <add>, %76, %cst_64 [2] : vector<4x8x16xf32> to vector<4x8xf32>
    %78 = vector.shape_cast %77 : vector<4x8xf32> to vector<4x8x1xf32>
    %79 = arith.truncf %76 : vector<4x8x16xf32> to vector<4x8x16xbf16>
    "tpu.trace_start"() <{level = 10 : i32, message = "hqk,hkd->hqd"}> : () -> ()
    %cst_65 = arith.constant dense<0.000000e+00> : vector<4x8x8xf32>
    %80 = tpu.matmul %79, %40, %cst_65 {dimension_numbers = #tpu.dot_dimension_numbers<[2], [1], [1], [2], [0, 0, 0, 1, 1, 2], [0], [0]>} : vector<4x8x16xbf16>, vector<4x16x8xbf16>, vector<4x8x8xf32> -> vector<4x8x8xf32>
    "tpu.trace_stop"() : () -> ()
    %81 = tpu.reciprocal %78 {approx = true} : vector<4x8x1xf32> -> vector<4x8x1xf32>
    %82 = vector.broadcast %81 : vector<4x8x1xf32> to vector<4x8x8xf32>
    %83 = arith.mulf %80, %82 : vector<4x8x8xf32>
    %84 = arith.truncf %83 : vector<4x8x8xf32> to vector<4x8x8xbf16>
    %c0_66 = arith.constant 0 : index
    %c0_67 = arith.constant 0 : index
    %c0_68 = arith.constant 0 : index
    %85 = vector.load %arg9[%c0_66, %c0_67, %c0_68] : memref<4x8x32xbf16, #tpu.memory_space<vmem>>, vector<4x8x32xbf16>
    "tpu.trace_start"() <{level = 10 : i32, message = "hqd,hde->hqe"}> : () -> ()
    %cst_69 = arith.constant dense<0.000000e+00> : vector<4x8x32xf32>
    %86 = tpu.matmul %84, %85, %cst_69 {dimension_numbers = #tpu.dot_dimension_numbers<[2], [1], [1], [2], [0, 0, 0, 1, 1, 2], [0], [0]>} : vector<4x8x8xbf16>, vector<4x8x32xbf16>, vector<4x8x32xf32> -> vector<4x8x32xf32>
    "tpu.trace_stop"() : () -> ()
    %cst_70 = arith.constant dense<0.000000e+00> : vector<8x32xf32>
    %87 = vector.multi_reduction <add>, %86, %cst_70 [0] : vector<4x8x32xf32> to vector<8x32xf32>
    %88 = vector.broadcast %6 : vector<1x32xf32> to vector<8x32xf32>
    %89 = arith.addf %87, %88 : vector<8x32xf32>
    %90 = arith.addf %18, %89 : vector<8x32xf32>
    %cst_71 = arith.constant dense<0.000000e+00> : vector<8xf32>
    %91 = vector.multi_reduction <add>, %90, %cst_71 [1] : vector<8x32xf32> to vector<8xf32>
    %92 = vector.shape_cast %91 : vector<8xf32> to vector<8x1xf32>
    %cst_72 = arith.constant 3.200000e+01 : f32
    %93 = vector.broadcast %cst_72 : f32 to vector<8x1xf32>
    %94 = arith.divf %92, %93 : vector<8x1xf32>
    %95 = vector.broadcast %94 : vector<8x1xf32> to vector<8x32xf32>
    %96 = arith.subf %90, %95 : vector<8x32xf32>
    %97 = arith.mulf %96, %96 : vector<8x32xf32>
    %cst_73 = arith.constant dense<0.000000e+00> : vector<8xf32>
    %98 = vector.multi_reduction <add>, %97, %cst_73 [1] : vector<8x32xf32> to vector<8xf32>
    %99 = vector.shape_cast %98 : vector<8xf32> to vector<8x1xf32>
    %cst_74 = arith.constant 3.200000e+01 : f32
    %100 = vector.broadcast %cst_74 : f32 to vector<8x1xf32>
    %101 = arith.divf %99, %100 : vector<8x1xf32>
    %cst_75 = arith.constant 9.99999974E-6 : f32
    %102 = vector.broadcast %cst_75 : f32 to vector<8x1xf32>
    %103 = arith.addf %101, %102 : vector<8x1xf32>
    %104 = math.rsqrt %103 : vector<8x1xf32>
    %105 = vector.broadcast %104 : vector<8x1xf32> to vector<8x32xf32>
    %106 = arith.mulf %96, %105 : vector<8x32xf32>
    %107 = vector.broadcast %2 : vector<1x32xf32> to vector<8x32xf32>
    %108 = arith.mulf %106, %107 : vector<8x32xf32>
    %109 = vector.broadcast %3 : vector<1x32xf32> to vector<8x32xf32>
    %110 = arith.addf %108, %109 : vector<8x32xf32>
    %c0_76 = arith.constant 0 : index
    %c0_77 = arith.constant 0 : index
    %c0_78 = arith.constant 0 : index
    %111 = vector.load %arg29[%c0_76, %c0_77, %c0_78] : memref<4x128x8xbf16, #tpu.memory_space<vmem>>, vector<4x128x8xbf16>
    %c0_79 = arith.constant 0 : index
    %c0_80 = arith.constant 0 : index
    %c0_81 = arith.constant 0 : index
    %112 = vector.load %arg30[%c0_79, %c0_80, %c0_81] : memref<4x128x8xbf16, #tpu.memory_space<vmem>>, vector<4x128x8xbf16>
    %113 = arith.truncf %110 : vector<8x32xf32> to vector<8x32xbf16>
    %c0_82 = arith.constant 0 : index
    %c0_83 = arith.constant 0 : index
    %c0_84 = arith.constant 0 : index
    %114 = vector.load %arg13[%c0_82, %c0_83, %c0_84] : memref<4x32x8xbf16, #tpu.memory_space<vmem>>, vector<1x32x8xbf16>
    %115 = vector.shape_cast %114 : vector<1x32x8xbf16> to vector<32x8xbf16>
    %cst_85 = arith.constant dense<0.000000e+00> : vector<8x8xf32>
    %116 = tpu.matmul %113, %115, %cst_85 {dimension_numbers = #tpu.dot_dimension_numbers<[1], [0], [0], [1], [0, 0, 1, 1], [], []>} : vector<8x32xbf16>, vector<32x8xbf16>, vector<8x8xf32> -> vector<8x8xf32>
    %117 = arith.truncf %116 : vector<8x8xf32> to vector<8x8xbf16>
    %c0_86 = arith.constant 0 : index
    %c0_87 = arith.constant 0 : index
    %c0_88 = arith.constant 0 : index
    %118 = vector.load %arg31[%c0_86, %c0_87, %c0_88] : memref<4x8x8xbf16, #tpu.memory_space<vmem>>, vector<1x8x8xbf16>
    %119 = vector.shape_cast %118 : vector<1x8x8xbf16> to vector<8x8xbf16>
    %120 = vector.shape_cast %117 : vector<8x8xbf16> to vector<1x8x8xbf16>
    tpu.vector_store %arg31[%c0_86, %c0_87, %c0_88], %120 {strides = array<i32>} : memref<4x8x8xbf16, #tpu.memory_space<vmem>>, vector<1x8x8xbf16>,
    %c1_89 = arith.constant 1 : index
    %c0_90 = arith.constant 0 : index
    %c0_91 = arith.constant 0 : index
    %121 = vector.load %arg13[%c1_89, %c0_90, %c0_91] : memref<4x32x8xbf16, #tpu.memory_space<vmem>>, vector<1x32x8xbf16>
    %122 = vector.shape_cast %121 : vector<1x32x8xbf16> to vector<32x8xbf16>
    %cst_92 = arith.constant dense<0.000000e+00> : vector<8x8xf32>
    %123 = tpu.matmul %113, %122, %cst_92 {dimension_numbers = #tpu.dot_dimension_numbers<[1], [0], [0], [1], [0, 0, 1, 1], [], []>} : vector<8x32xbf16>, vector<32x8xbf16>, vector<8x8xf32> -> vector<8x8xf32>
    %124 = arith.truncf %123 : vector<8x8xf32> to vector<8x8xbf16>
    %c1_93 = arith.constant 1 : index
    %c0_94 = arith.constant 0 : index
    %c0_95 = arith.constant 0 : index
    %125 = vector.load %arg31[%c1_93, %c0_94, %c0_95] : memref<4x8x8xbf16, #tpu.memory_space<vmem>>, vector<1x8x8xbf16>
    %126 = vector.shape_cast %125 : vector<1x8x8xbf16> to vector<8x8xbf16>
    %127 = vector.shape_cast %124 : vector<8x8xbf16> to vector<1x8x8xbf16>
    tpu.vector_store %arg31[%c1_93, %c0_94, %c0_95], %127 {strides = array<i32>} : memref<4x8x8xbf16, #tpu.memory_space<vmem>>, vector<1x8x8xbf16>,
    %c2_96 = arith.constant 2 : index
    %c0_97 = arith.constant 0 : index
    %c0_98 = arith.constant 0 : index
    %128 = vector.load %arg13[%c2_96, %c0_97, %c0_98] : memref<4x32x8xbf16, #tpu.memory_space<vmem>>, vector<1x32x8xbf16>
    %129 = vector.shape_cast %128 : vector<1x32x8xbf16> to vector<32x8xbf16>
    %cst_99 = arith.constant dense<0.000000e+00> : vector<8x8xf32>
    %130 = tpu.matmul %113, %129, %cst_99 {dimension_numbers = #tpu.dot_dimension_numbers<[1], [0], [0], [1], [0, 0, 1, 1], [], []>} : vector<8x32xbf16>, vector<32x8xbf16>, vector<8x8xf32> -> vector<8x8xf32>
    %131 = arith.truncf %130 : vector<8x8xf32> to vector<8x8xbf16>
    %c2_100 = arith.constant 2 : index
    %c0_101 = arith.constant 0 : index
    %c0_102 = arith.constant 0 : index
    %132 = vector.load %arg31[%c2_100, %c0_101, %c0_102] : memref<4x8x8xbf16, #tpu.memory_space<vmem>>, vector<1x8x8xbf16>
    %133 = vector.shape_cast %132 : vector<1x8x8xbf16> to vector<8x8xbf16>
    %134 = vector.shape_cast %131 : vector<8x8xbf16> to vector<1x8x8xbf16>
    tpu.vector_store %arg31[%c2_100, %c0_101, %c0_102], %134 {strides = array<i32>} : memref<4x8x8xbf16, #tpu.memory_space<vmem>>, vector<1x8x8xbf16>,
    %c3_103 = arith.constant 3 : index
    %c0_104 = arith.constant 0 : index
    %c0_105 = arith.constant 0 : index
    %135 = vector.load %arg13[%c3_103, %c0_104, %c0_105] : memref<4x32x8xbf16, #tpu.memory_space<vmem>>, vector<1x32x8xbf16>
    %136 = vector.shape_cast %135 : vector<1x32x8xbf16> to vector<32x8xbf16>
    %cst_106 = arith.constant dense<0.000000e+00> : vector<8x8xf32>
    %137 = tpu.matmul %113, %136, %cst_106 {dimension_numbers = #tpu.dot_dimension_numbers<[1], [0], [0], [1], [0, 0, 1, 1], [], []>} : vector<8x32xbf16>, vector<32x8xbf16>, vector<8x8xf32> -> vector<8x8xf32>
    %138 = arith.truncf %137 : vector<8x8xf32> to vector<8x8xbf16>
    %c3_107 = arith.constant 3 : index
    %c0_108 = arith.constant 0 : index
    %c0_109 = arith.constant 0 : index
    %139 = vector.load %arg31[%c3_107, %c0_108, %c0_109] : memref<4x8x8xbf16, #tpu.memory_space<vmem>>, vector<1x8x8xbf16>
    %140 = vector.shape_cast %139 : vector<1x8x8xbf16> to vector<8x8xbf16>
    %141 = vector.shape_cast %138 : vector<8x8xbf16> to vector<1x8x8xbf16>
    tpu.vector_store %arg31[%c3_107, %c0_108, %c0_109], %141 {strides = array<i32>} : memref<4x8x8xbf16, #tpu.memory_space<vmem>>, vector<1x8x8xbf16>,
    %c0_110 = arith.constant 0 : index
    %c0_111 = arith.constant 0 : index
    %c0_112 = arith.constant 0 : index
    %142 = vector.load %arg31[%c0_110, %c0_111, %c0_112] : memref<4x8x8xbf16, #tpu.memory_space<vmem>>, vector<4x8x8xbf16>
    "tpu.trace_start"() <{level = 10 : i32, message = "hqd,hkd->hqk"}> : () -> ()
    %cst_113 = arith.constant dense<0.000000e+00> : vector<4x8x128xf32>
    %143 = tpu.matmul %142, %111, %cst_113 {dimension_numbers = #tpu.dot_dimension_numbers<[2], [2], [1], [1], [0, 0, 0, 1, 1, 1], [0], [0]>} : vector<4x8x8xbf16>, vector<4x128x8xbf16>, vector<4x8x128xf32> -> vector<4x8x128xf32>
    "tpu.trace_stop"() : () -> ()
    %144 = tpu.iota {dimensions = array<i32: 2>} : vector<4x8x128xi32>
    %c8_i32_114 = arith.constant 8 : i32
    %145 = vector.broadcast %c8_i32_114 : i32 to vector<4x8x128xi32>
    %146 = arith.cmpi slt, %144, %145 : vector<4x8x128xi32>
    %cst_115 = arith.constant -1.000000e+30 : f32
    %147 = vector.broadcast %cst_115 : f32 to vector<4x8x128xf32>
    %148 = arith.select %146, %143, %147 : vector<4x8x128xi1>, vector<4x8x128xf32>
    %cst_116 = arith.constant dense<0xFF800000> : vector<4x8xf32>
    %149 = vector.multi_reduction <maximumf>, %148, %cst_116 [2] : vector<4x8x128xf32> to vector<4x8xf32>
    %150 = vector.shape_cast %149 : vector<4x8xf32> to vector<4x8x1xf32>
    %151 = vector.broadcast %150 : vector<4x8x1xf32> to vector<4x8x128xf32>
    %152 = arith.subf %148, %151 : vector<4x8x128xf32>
    %153 = math.exp %152 : vector<4x8x128xf32>
    %cst_117 = arith.constant dense<0.000000e+00> : vector<4x8xf32>
    %154 = vector.multi_reduction <add>, %153, %cst_117 [2] : vector<4x8x128xf32> to vector<4x8xf32>
    %155 = vector.shape_cast %154 : vector<4x8xf32> to vector<4x8x1xf32>
    %156 = arith.truncf %153 : vector<4x8x128xf32> to vector<4x8x128xbf16>
    "tpu.trace_start"() <{level = 10 : i32, message = "hqk,hkd->hqd"}> : () -> ()
    %cst_118 = arith.constant dense<0.000000e+00> : vector<4x8x8xf32>
    %157 = tpu.matmul %156, %112, %cst_118 {dimension_numbers = #tpu.dot_dimension_numbers<[2], [1], [1], [2], [0, 0, 0, 1, 1, 2], [0], [0]>} : vector<4x8x128xbf16>, vector<4x128x8xbf16>, vector<4x8x8xf32> -> vector<4x8x8xf32>
    "tpu.trace_stop"() : () -> ()
    %158 = tpu.reciprocal %155 {approx = true} : vector<4x8x1xf32> -> vector<4x8x1xf32>
    %159 = vector.broadcast %158 : vector<4x8x1xf32> to vector<4x8x8xf32>
    %160 = arith.mulf %157, %159 : vector<4x8x8xf32>
    %161 = arith.truncf %160 : vector<4x8x8xf32> to vector<4x8x8xbf16>
    %c0_119 = arith.constant 0 : index
    %c0_120 = arith.constant 0 : index
    %c0_121 = arith.constant 0 : index
    %162 = vector.load %arg16[%c0_119, %c0_120, %c0_121] : memref<4x8x32xbf16, #tpu.memory_space<vmem>>, vector<4x8x32xbf16>
    "tpu.trace_start"() <{level = 10 : i32, message = "hqd,hde->hqe"}> : () -> ()
    %cst_122 = arith.constant dense<0.000000e+00> : vector<4x8x32xf32>
    %163 = tpu.matmul %161, %162, %cst_122 {dimension_numbers = #tpu.dot_dimension_numbers<[2], [1], [1], [2], [0, 0, 0, 1, 1, 2], [0], [0]>} : vector<4x8x8xbf16>, vector<4x8x32xbf16>, vector<4x8x32xf32> -> vector<4x8x32xf32>
    "tpu.trace_stop"() : () -> ()
    %cst_123 = arith.constant dense<0.000000e+00> : vector<8x32xf32>
    %164 = vector.multi_reduction <add>, %163, %cst_123 [0] : vector<4x8x32xf32> to vector<8x32xf32>
    %165 = vector.broadcast %7 : vector<1x32xf32> to vector<8x32xf32>
    %166 = arith.addf %164, %165 : vector<8x32xf32>
    %167 = arith.addf %90, %166 : vector<8x32xf32>
    %cst_124 = arith.constant dense<0.000000e+00> : vector<8xf32>
    %168 = vector.multi_reduction <add>, %167, %cst_124 [1] : vector<8x32xf32> to vector<8xf32>
    %169 = vector.shape_cast %168 : vector<8xf32> to vector<8x1xf32>
    %cst_125 = arith.constant 3.200000e+01 : f32
    %170 = vector.broadcast %cst_125 : f32 to vector<8x1xf32>
    %171 = arith.divf %169, %170 : vector<8x1xf32>
    %172 = vector.broadcast %171 : vector<8x1xf32> to vector<8x32xf32>
    %173 = arith.subf %167, %172 : vector<8x32xf32>
    %174 = arith.mulf %173, %173 : vector<8x32xf32>
    %cst_126 = arith.constant dense<0.000000e+00> : vector<8xf32>
    %175 = vector.multi_reduction <add>, %174, %cst_126 [1] : vector<8x32xf32> to vector<8xf32>
    %176 = vector.shape_cast %175 : vector<8xf32> to vector<8x1xf32>
    %cst_127 = arith.constant 3.200000e+01 : f32
    %177 = vector.broadcast %cst_127 : f32 to vector<8x1xf32>
    %178 = arith.divf %176, %177 : vector<8x1xf32>
    %cst_128 = arith.constant 9.99999974E-6 : f32
    %179 = vector.broadcast %cst_128 : f32 to vector<8x1xf32>
    %180 = arith.addf %178, %179 : vector<8x1xf32>
    %181 = math.rsqrt %180 : vector<8x1xf32>
    %182 = vector.broadcast %181 : vector<8x1xf32> to vector<8x32xf32>
    %183 = arith.mulf %173, %182 : vector<8x32xf32>
    %184 = vector.broadcast %4 : vector<1x32xf32> to vector<8x32xf32>
    %185 = arith.mulf %183, %184 : vector<8x32xf32>
    %186 = vector.broadcast %5 : vector<1x32xf32> to vector<8x32xf32>
    %187 = arith.addf %185, %186 : vector<8x32xf32>
    %188 = arith.truncf %187 : vector<8x32xf32> to vector<8x32xbf16>
    %c0_129 = arith.constant 0 : index
    %c0_130 = arith.constant 0 : index
    %189 = vector.load %arg20[%c0_129, %c0_130] : memref<32x128xbf16, #tpu.memory_space<vmem>>, vector<32x128xbf16>
    %cst_131 = arith.constant dense<0.000000e+00> : vector<8x128xf32>
    %190 = tpu.matmul %188, %189, %cst_131 {dimension_numbers = #tpu.dot_dimension_numbers<[1], [0], [0], [1], [0, 0, 1, 1], [], []>} : vector<8x32xbf16>, vector<32x128xbf16>, vector<8x128xf32> -> vector<8x128xf32>
    %191 = vector.broadcast %8 : vector<1x128xf32> to vector<8x128xf32>
    %192 = arith.addf %190, %191 : vector<8x128xf32>
    %c0_132 = arith.constant 0 : index
    %c0_133 = arith.constant 0 : index
    %193 = vector.load %arg22[%c0_132, %c0_133] : memref<32x128xbf16, #tpu.memory_space<vmem>>, vector<32x128xbf16>
    %cst_134 = arith.constant dense<0.000000e+00> : vector<8x128xf32>
    %194 = tpu.matmul %188, %193, %cst_134 {dimension_numbers = #tpu.dot_dimension_numbers<[1], [0], [0], [1], [0, 0, 1, 1], [], []>} : vector<8x32xbf16>, vector<32x128xbf16>, vector<8x128xf32> -> vector<8x128xf32>
    %195 = vector.broadcast %9 : vector<1x128xf32> to vector<8x128xf32>
    %196 = arith.addf %194, %195 : vector<8x128xf32>
    %cst_135 = arith.constant 0.707106769 : f32
    %197 = vector.broadcast %cst_135 : f32 to vector<8x128xf32>
    %198 = arith.mulf %196, %197 : vector<8x128xf32>
    %cst_136 = arith.constant 0.000000e+00 : f32
    %199 = vector.broadcast %cst_136 : f32 to vector<8x128xf32>
    %200 = arith.cmpf oge, %198, %199 : vector<8x128xf32>
    %cst_137 = arith.constant 1.000000e+00 : f32
    %cst_138 = arith.constant -1.000000e+00 : f32
    %201 = vector.broadcast %cst_137 : f32 to vector<8x128xf32>
    %202 = vector.broadcast %cst_138 : f32 to vector<8x128xf32>
    %203 = arith.select %200, %201, %202 : vector<8x128xi1>, vector<8x128xf32>
    %204 = math.absf %198 : vector<8x128xf32>
    %cst_139 = arith.constant 0.327591091 : f32
    %205 = vector.broadcast %cst_139 : f32 to vector<8x128xf32>
    %206 = arith.mulf %205, %204 : vector<8x128xf32>
    %cst_140 = arith.constant 1.000000e+00 : f32
    %207 = vector.broadcast %cst_140 : f32 to vector<8x128xf32>
    %208 = arith.addf %207, %206 : vector<8x128xf32>
    %cst_141 = arith.constant 1.000000e+00 : f32
    %209 = vector.broadcast %cst_141 : f32 to vector<8x128xf32>
    %210 = arith.divf %209, %208 : vector<8x128xf32>
    %cst_142 = arith.constant 1.06140542 : f32
    %211 = vector.broadcast %cst_142 : f32 to vector<8x128xf32>
    %212 = arith.mulf %211, %210 : vector<8x128xf32>
    %cst_143 = arith.constant -1.45315206 : f32
    %213 = vector.broadcast %cst_143 : f32 to vector<8x128xf32>
    %214 = arith.addf %212, %213 : vector<8x128xf32>
    %215 = arith.mulf %214, %210 : vector<8x128xf32>
    %cst_144 = arith.constant 1.42141378 : f32
    %216 = vector.broadcast %cst_144 : f32 to vector<8x128xf32>
    %217 = arith.addf %215, %216 : vector<8x128xf32>
    %218 = arith.mulf %217, %210 : vector<8x128xf32>
    %cst_145 = arith.constant -0.284496725 : f32
    %219 = vector.broadcast %cst_145 : f32 to vector<8x128xf32>
    %220 = arith.addf %218, %219 : vector<8x128xf32>
    %221 = arith.mulf %220, %210 : vector<8x128xf32>
    %cst_146 = arith.constant 0.254829586 : f32
    %222 = vector.broadcast %cst_146 : f32 to vector<8x128xf32>
    %223 = arith.addf %221, %222 : vector<8x128xf32>
    %224 = arith.mulf %223, %210 : vector<8x128xf32>
    %cst_147 = arith.constant 0.000000e+00 : f32
    %225 = vector.broadcast %cst_147 : f32 to vector<8x128xf32>
    %226 = arith.subf %225, %204 : vector<8x128xf32>
    %227 = arith.mulf %226, %204 : vector<8x128xf32>
    %228 = math.exp %227 : vector<8x128xf32>
    %229 = arith.mulf %224, %228 : vector<8x128xf32>
    %cst_148 = arith.constant 1.000000e+00 : f32
    %230 = vector.broadcast %cst_148 : f32 to vector<8x128xf32>
    %231 = arith.subf %230, %229 : vector<8x128xf32>
    %232 = arith.mulf %203, %231 : vector<8x128xf32>
    %cst_149 = arith.constant 5.000000e-01 : f32
    %233 = vector.broadcast %cst_149 : f32 to vector<8x128xf32>
    %234 = arith.mulf %233, %196 : vector<8x128xf32>
    %cst_150 = arith.constant 1.000000e+00 : f32
    %235 = vector.broadcast %cst_150 : f32 to vector<8x128xf32>
    %236 = arith.addf %235, %232 : vector<8x128xf32>
    %237 = arith.mulf %234, %236 : vector<8x128xf32>
    %238 = arith.mulf %192, %237 : vector<8x128xf32>
    %239 = arith.truncf %238 : vector<8x128xf32> to vector<8x128xbf16>
    %c0_151 = arith.constant 0 : index
    %c0_152 = arith.constant 0 : index
    %240 = vector.load %arg24[%c0_151, %c0_152] : memref<128x32xbf16, #tpu.memory_space<vmem>>, vector<128x32xbf16>
    %cst_153 = arith.constant dense<0.000000e+00> : vector<8x32xf32>
    %241 = tpu.matmul %239, %240, %cst_153 {dimension_numbers = #tpu.dot_dimension_numbers<[1], [0], [0], [1], [0, 0, 1, 1], [], []>} : vector<8x128xbf16>, vector<128x32xbf16>, vector<8x32xf32> -> vector<8x32xf32>
    %242 = arith.addf %167, %241 : vector<8x32xf32>
    %243 = vector.broadcast %10 : vector<1x32xf32> to vector<8x32xf32>
    %244 = arith.addf %242, %243 : vector<8x32xf32>
    %c0_154 = arith.constant 0 : index
    %c0_155 = arith.constant 0 : index
    %c0_156 = arith.constant 0 : index
    %245 = vector.load %arg26[%c0_154, %c0_155, %c0_156] : memref<1x8x32xf32, #tpu.memory_space<vmem>>, vector<1x8x32xf32>
    %246 = vector.shape_cast %245 : vector<1x8x32xf32> to vector<8x32xf32>
    %247 = vector.shape_cast %244 : vector<8x32xf32> to vector<1x8x32xf32>
    tpu.vector_store %arg26[%c0_154, %c0_155, %c0_156], %247 {strides = array<i32>} : memref<1x8x32xf32, #tpu.memory_space<vmem>>, vector<1x8x32xf32>,
    return
  }
  func.func @transform_0(%arg0: i32, %arg1: i32) -> (i32, i32, i32) {
    %c0_i32 = arith.constant 0 : i32
    %c0_i32_0 = arith.constant 0 : i32
    %c0_i32_1 = arith.constant 0 : i32
    return %arg0, %c0_i32, %c0_i32_0 : i32, i32, i32
  }
  func.func @transform_1(%arg0: i32, %arg1: i32) -> (i32, i32, i32) {
    %c0_i32 = arith.constant 0 : i32
    %c0_i32_0 = arith.constant 0 : i32
    %c0_i32_1 = arith.constant 0 : i32
    return %arg0, %c0_i32, %c0_i32_0 : i32, i32, i32
  }
  func.func @transform_2(%arg0: i32, %arg1: i32) -> (i32, i32) {
    %c0_i32 = arith.constant 0 : i32
    %c0_i32_0 = arith.constant 0 : i32
    %c0_i32_1 = arith.constant 0 : i32
    return %c0_i32, %c0_i32_0 : i32, i32
  }
  func.func @transform_3(%arg0: i32, %arg1: i32) -> (i32, i32) {
    %c0_i32 = arith.constant 0 : i32
    %c0_i32_0 = arith.constant 0 : i32
    %c0_i32_1 = arith.constant 0 : i32
    return %c0_i32, %c0_i32_0 : i32, i32
  }
  func.func @transform_4(%arg0: i32, %arg1: i32) -> (i32, i32, i32) {
    %c0_i32 = arith.constant 0 : i32
    %c0_i32_0 = arith.constant 0 : i32
    %c0_i32_1 = arith.constant 0 : i32
    %c0_i32_2 = arith.constant 0 : i32
    return %c0_i32, %c0_i32_0, %c0_i32_1 : i32, i32, i32
  }
  func.func @transform_5(%arg0: i32, %arg1: i32) -> (i32, i32, i32) {
    %c0_i32 = arith.constant 0 : i32
    %c0_i32_0 = arith.constant 0 : i32
    %c0_i32_1 = arith.constant 0 : i32
    %c0_i32_2 = arith.constant 0 : i32
    return %c0_i32, %c0_i32_0, %c0_i32_1 : i32, i32, i32
  }
  func.func @transform_6(%arg0: i32, %arg1: i32) -> (i32, i32, i32) {
    %c0_i32 = arith.constant 0 : i32
    %c0_i32_0 = arith.constant 0 : i32
    %c0_i32_1 = arith.constant 0 : i32
    %c0_i32_2 = arith.constant 0 : i32
    return %c0_i32, %c0_i32_0, %c0_i32_1 : i32, i32, i32
  }
  func.func @transform_7(%arg0: i32, %arg1: i32) -> (i32, i32, i32) {
    %c0_i32 = arith.constant 0 : i32
    %c0_i32_0 = arith.constant 0 : i32
    %c0_i32_1 = arith.constant 0 : i32
    %c0_i32_2 = arith.constant 0 : i32
    return %c0_i32, %c0_i32_0, %c0_i32_1 : i32, i32, i32
  }
  func.func @transform_8(%arg0: i32, %arg1: i32) -> (i32, i32) {
    %c0_i32 = arith.constant 0 : i32
    %c0_i32_0 = arith.constant 0 : i32
    %c0_i32_1 = arith.constant 0 : i32
    return %c0_i32, %c0_i32_0 : i32, i32
  }
  func.func @transform_9(%arg0: i32, %arg1: i32) -> (i32, i32) {
    %c0_i32 = arith.constant 0 : i32
    %c0_i32_0 = arith.constant 0 : i32
    %c0_i32_1 = arith.constant 0 : i32
    return %c0_i32, %c0_i32_0 : i32, i32
  }
  func.func @transform_10(%arg0: i32, %arg1: i32) -> (i32, i32) {
    %c0_i32 = arith.constant 0 : i32
    %c0_i32_0 = arith.constant 0 : i32
    %c0_i32_1 = arith.constant 0 : i32
    return %c0_i32, %c0_i32_0 : i32, i32
  }
  func.func @transform_11(%arg0: i32, %arg1: i32) -> (i32, i32, i32) {
    %c0_i32 = arith.constant 0 : i32
    %c0_i32_0 = arith.constant 0 : i32
    %c0_i32_1 = arith.constant 0 : i32
    %c0_i32_2 = arith.constant 0 : i32
    return %c0_i32, %c0_i32_0, %c0_i32_1 : i32, i32, i32
  }
  func.func @transform_12(%arg0: i32, %arg1: i32) -> (i32, i32, i32) {
    %c0_i32 = arith.constant 0 : i32
    %c0_i32_0 = arith.constant 0 : i32
    %c0_i32_1 = arith.constant 0 : i32
    %c0_i32_2 = arith.constant 0 : i32
    return %c0_i32, %c0_i32_0, %c0_i32_1 : i32, i32, i32
  }
  func.func @transform_13(%arg0: i32, %arg1: i32) -> (i32, i32, i32) {
    %c0_i32 = arith.constant 0 : i32
    %c0_i32_0 = arith.constant 0 : i32
    %c0_i32_1 = arith.constant 0 : i32
    %c0_i32_2 = arith.constant 0 : i32
    return %c0_i32, %c0_i32_0, %c0_i32_1 : i32, i32, i32
  }
  func.func @transform_14(%arg0: i32, %arg1: i32) -> (i32, i32, i32) {
    %c0_i32 = arith.constant 0 : i32
    %c0_i32_0 = arith.constant 0 : i32
    %c0_i32_1 = arith.constant 0 : i32
    %c0_i32_2 = arith.constant 0 : i32
    return %c0_i32, %c0_i32_0, %c0_i32_1 : i32, i32, i32
  }
  func.func @transform_15(%arg0: i32, %arg1: i32) -> (i32, i32) {
    %c0_i32 = arith.constant 0 : i32
    %c0_i32_0 = arith.constant 0 : i32
    %c0_i32_1 = arith.constant 0 : i32
    return %c0_i32, %c0_i32_0 : i32, i32
  }
  func.func @transform_16(%arg0: i32, %arg1: i32) -> (i32, i32) {
    %c0_i32 = arith.constant 0 : i32
    %c0_i32_0 = arith.constant 0 : i32
    %c0_i32_1 = arith.constant 0 : i32
    return %c0_i32, %c0_i32_0 : i32, i32
  }
  func.func @transform_17(%arg0: i32, %arg1: i32) -> (i32, i32) {
    %c0_i32 = arith.constant 0 : i32
    %c0_i32_0 = arith.constant 0 : i32
    %c0_i32_1 = arith.constant 0 : i32
    return %c0_i32, %c0_i32_0 : i32, i32
  }
  func.func @transform_18(%arg0: i32, %arg1: i32) -> (i32, i32) {
    %c0_i32 = arith.constant 0 : i32
    %c0_i32_0 = arith.constant 0 : i32
    %c0_i32_1 = arith.constant 0 : i32
    return %c0_i32, %c0_i32_0 : i32, i32
  }
  func.func @transform_19(%arg0: i32, %arg1: i32) -> (i32, i32) {
    %c0_i32 = arith.constant 0 : i32
    %c0_i32_0 = arith.constant 0 : i32
    %c0_i32_1 = arith.constant 0 : i32
    return %c0_i32, %c0_i32_0 : i32, i32
  }
  func.func @transform_20(%arg0: i32, %arg1: i32) -> (i32, i32) {
    %c0_i32 = arith.constant 0 : i32
    %c0_i32_0 = arith.constant 0 : i32
    %c0_i32_1 = arith.constant 0 : i32
    return %c0_i32, %c0_i32_0 : i32, i32
  }
  func.func @transform_21(%arg0: i32, %arg1: i32) -> (i32, i32) {
    %c0_i32 = arith.constant 0 : i32
    %c0_i32_0 = arith.constant 0 : i32
    %c0_i32_1 = arith.constant 0 : i32
    return %c0_i32, %c0_i32_0 : i32, i32
  }
  func.func @transform_22(%arg0: i32, %arg1: i32) -> (i32, i32) {
    %c0_i32 = arith.constant 0 : i32
    %c0_i32_0 = arith.constant 0 : i32
    %c0_i32_1 = arith.constant 0 : i32
    return %c0_i32, %c0_i32_0 : i32, i32
  }
  func.func @transform_23(%arg0: i32, %arg1: i32) -> (i32, i32) {
    %c0_i32 = arith.constant 0 : i32
    %c0_i32_0 = arith.constant 0 : i32
    %c0_i32_1 = arith.constant 0 : i32
    return %c0_i32, %c0_i32_0 : i32, i32
  }
  func.func @transform_24(%arg0: i32, %arg1: i32) -> (i32, i32, i32) {
    %c0_i32 = arith.constant 0 : i32
    %c0_i32_0 = arith.constant 0 : i32
    return %arg0, %arg1, %c0_i32 : i32, i32, i32
  }
}

</mosaic_0001>

<llo_original>
// kernel: tpu_custom_call.1
$region0: #{tpu_custom_call.1}
  #allocation0 [shape = 'u32[]', space=smem, size = 0x4, offset = 0x4, fixed_abs, tag = 'smem constant byte address 0x4 - core index']
  #allocation1 [shape = 'u32[144,128]{1,0:T(1,128)}', space=vmem, size = 0x12000, scoped, tag = 'internal scratch']
  #allocation2 [shape = 'bf16[4,16,8]{2,1,0:T(16,128)(2,1)}', space=vmem, size = 0x4000, scoped, tag = 'scratch operand']
  #allocation3 [shape = 'bf16[4,16,8]{2,1,0:T(16,128)(2,1)}', space=vmem, size = 0x4000, scoped, tag = 'scratch operand']
  #allocation4 [shape = 'bf16[4,128,8]{2,1,0:T(16,128)(2,1)}', space=vmem, size = 0x20000, scoped, tag = 'scratch operand']
  #allocation5 [shape = 'bf16[4,128,8]{2,1,0:T(16,128)(2,1)}', space=vmem, size = 0x20000, scoped, tag = 'scratch operand']
  #allocation6 [shape = 'bf16[4,8,8]{2,1,0:T(8,128)(2,1)}', space=vmem, size = 0x2000, scoped, tag = 'scratch operand']
  %s0 = inlined_call_operand.vmem [shape: f32[2,16,32], index: 0, kind: input, shape index: {}]
  %s1 = inlined_call_operand.vmem [shape: f32[2,128,16], index: 1, kind: input, shape index: {}]
  %s2 = inlined_call_operand.vmem [shape: f32[1,32], index: 2, kind: input, shape index: {}]
  %s3 = inlined_call_operand.vmem [shape: f32[1,32], index: 3, kind: input, shape index: {}]
  %s4 = inlined_call_operand.vmem [shape: bf16[4,32,8], index: 4, kind: input, shape index: {}]
  %s5 = inlined_call_operand.vmem [shape: bf16[4,32,8], index: 5, kind: input, shape index: {}]
  %s6 = inlined_call_operand.vmem [shape: bf16[4,32,8], index: 6, kind: input, shape index: {}]
  %s7 = inlined_call_operand.vmem [shape: bf16[4,8,32], index: 7, kind: input, shape index: {}]
  %s8 = inlined_call_operand.vmem [shape: f32[1,32], index: 8, kind: input, shape index: {}]
  %s9 = inlined_call_operand.vmem [shape: f32[1,32], index: 9, kind: input, shape index: {}]
  %s10 = inlined_call_operand.vmem [shape: f32[1,32], index: 10, kind: input, shape index: {}]
  %s11 = inlined_call_operand.vmem [shape: bf16[4,32,8], index: 11, kind: input, shape index: {}]
  %s12 = inlined_call_operand.vmem [shape: bf16[4,16,8], index: 12, kind: input, shape index: {}]
  %s13 = inlined_call_operand.vmem [shape: bf16[4,16,8], index: 13, kind: input, shape index: {}]
  %s14 = inlined_call_operand.vmem [shape: bf16[4,8,32], index: 14, kind: input, shape index: {}]
  %s15 = inlined_call_operand.vmem [shape: f32[1,32], index: 15, kind: input, shape index: {}]
  %s16 = inlined_call_operand.vmem [shape: f32[1,32], index: 16, kind: input, shape index: {}]
  %s17 = inlined_call_operand.vmem [shape: f32[1,32], index: 17, kind: input, shape index: {}]
  %s18 = inlined_call_operand.vmem [shape: bf16[32,128], index: 18, kind: input, shape index: {}]
  %s19 = inlined_call_operand.vmem [shape: f32[1,128], index: 19, kind: input, shape index: {}]
  %s20 = inlined_call_operand.vmem [shape: bf16[32,128], index: 20, kind: input, shape index: {}]
  %s21 = inlined_call_operand.vmem [shape: f32[1,128], index: 21, kind: input, shape index: {}]
  %s22 = inlined_call_operand.vmem [shape: bf16[128,32], index: 22, kind: input, shape index: {}]
  %s23 = inlined_call_operand.vmem [shape: f32[1,32], index: 23, kind: input, shape index: {}]
  %s24 = inlined_call_operand.hbm [shape: f32[2,16,32], index: 24, kind: output, shape index: {}]
  %s25 = sld [smem:[#allocation0]]
  $region133: #{tpu_custom_call.1} parent=0
    _
  %s27 = ssub.s32 1, %s25
  %s28 = scalar_select 0, %s27, %s25
  $region1: #{tpu_custom_call.1} parent=0
    #allocation7 [shape = 'u8[8192]{0}', space=vmem, size = 0x2000, scoped, tag = 'output window, operand 0']
    #allocation8 [shape = 's32[2]{0}', space=sflag, size = 0x8, scoped, tag = 'scoped memory for tpu_custom_call.1']
    %29 = vsyncpa [#allocation8], 0
    %s30 = scalar_lea.sflag [#allocation8], 1
    %31 = vsyncpa %s30, 0
    loop: start=0, step=1, limit=6
    $region2: #{tpu_custom_call.1} parent=1 // loop_pre_header
      _
    $region3: #{tpu_custom_call.1} parent=1 // loop_header
      %s33 = sphi 0, %s37
      %p34 = scmp.ge.s32.totalorder %s33, 6
      %s40 = sphi 0, %s52
      %s41 = sphi 0, %s48
      %s42 = sphi 0, %s40
      %s43 = sphi 0, %s41
      %s44 = sphi 0, %s42
      %s45 = sphi 0, %s43
      %s55 = sphi 0, %s57
      %s58 = sphi 0, %s55
      %s59 = sphi 0, %s58
      %s75 = sphi 0, %s59
      %s81 = sphi 0, %s83
      %s84 = sphi 0, %s81
      %s85 = sphi 0, %s84
      %s101 = sphi 0, %s85
      %s105 = sphi 0, %s105
      %s107 = sphi 0, %s105
      %s108 = sphi 0, %s107
      %s122 = sphi 0, %s108
      %s126 = sphi 0, %s126
      %s128 = sphi 0, %s126
      %s129 = sphi 0, %s128
      %s143 = sphi 0, %s129
      %s147 = sphi 0, %s147
      %s149 = sphi 0, %s147
      %s150 = sphi 0, %s149
      %s164 = sphi 0, %s150
      %s168 = sphi 0, %s168
      %s170 = sphi 0, %s168
      %s171 = sphi 0, %s170
      %s185 = sphi 0, %s171
      %s189 = sphi 0, %s189
      %s191 = sphi 0, %s189
      %s192 = sphi 0, %s191
      %s206 = sphi 0, %s192
      %s210 = sphi 0, %s210
      %s212 = sphi 0, %s210
      %s213 = sphi 0, %s212
      %s227 = sphi 0, %s213
      %s231 = sphi 0, %s231
      %s233 = sphi 0, %s231
      %s234 = sphi 0, %s233
      %s248 = sphi 0, %s234
      %s252 = sphi 0, %s252
      %s254 = sphi 0, %s252
      %s255 = sphi 0, %s254
      %s269 = sphi 0, %s255
      %s273 = sphi 0, %s273
      %s275 = sphi 0, %s273
      %s276 = sphi 0, %s275
      %s290 = sphi 0, %s276
      %s294 = sphi 0, %s294
      %s296 = sphi 0, %s294
      %s297 = sphi 0, %s296
      %s311 = sphi 0, %s297
      %s315 = sphi 0, %s315
      %s317 = sphi 0, %s315
      %s318 = sphi 0, %s317
      %s332 = sphi 0, %s318
      %s336 = sphi 0, %s336
      %s338 = sphi 0, %s336
      %s339 = sphi 0, %s338
      %s353 = sphi 0, %s339
      %s357 = sphi 0, %s357
      %s359 = sphi 0, %s357
      %s360 = sphi 0, %s359
      %s374 = sphi 0, %s360
      %s378 = sphi 0, %s378
      %s380 = sphi 0, %s378
      %s381 = sphi 0, %s380
      %s395 = sphi 0, %s381
      %s399 = sphi 0, %s399
      %s401 = sphi 0, %s399
      %s402 = sphi 0, %s401
      %s416 = sphi 0, %s402
      %s420 = sphi 0, %s420
      %s422 = sphi 0, %s420
      %s423 = sphi 0, %s422
      %s437 = sphi 0, %s423
      %s441 = sphi 0, %s441
      %s443 = sphi 0, %s441
      %s444 = sphi 0, %s443
      %s458 = sphi 0, %s444
      %s462 = sphi 0, %s462
      %s464 = sphi 0, %s462
      %s465 = sphi 0, %s464
      %s479 = sphi 0, %s465
      %s483 = sphi 0, %s483
      %s485 = sphi 0, %s483
      %s486 = sphi 0, %s485
      %s500 = sphi 0, %s486
      %s504 = sphi 0, %s504
      %s506 = sphi 0, %s504
      %s507 = sphi 0, %s506
      %s521 = sphi 0, %s507
      %s525 = sphi 0, %s525
      %s527 = sphi 0, %s525
      %s528 = sphi 0, %s527
      %s542 = sphi 0, %s528
      %s546 = sphi 0, %s546
      %s548 = sphi 0, %s546
      %s549 = sphi 0, %s548
      %s563 = sphi 0, %s549
      %s571 = sphi 0, %s573
      %s574 = sphi 0, %s571
      %s575 = sphi 0, %s574
      %s591 = sphi 0, %s575
    $region4: #{tpu_custom_call.1} parent=1 // loop_header_branch
      %36 = sbr.rel (%p34) target = $region8
    $region5: #{tpu_custom_call.1} parent=1 // loop_body
      %s38 = ssub.s32 %s33, 1
      %s39 = ssub.s32 %s33, 2
      %s46 = sadd.s32 1, %s41
      %p47 = scmp.ge.s32.totalorder %s46, 2
      %s48 = scalar_select %p47, 0, %s46
      %s49 = sadd.s32 1, %s40
      %s50 = scalar_select %p47, %s49, %s40
      %p51 = scmp.ge.s32.totalorder %s50, 2
      %s52 = scalar_select %p51, 0, %s50
      %s53 = ssub.s32 %s40, %s52
      %p54 = scmp.eq.s32.totalorder %s53, 0
      %s56 = sadd.s32 %s55, 1
      %s57 = scalar_select %p54, %s55, %s56
      %p60 = pneg %p54
      %p61 = scmp.eq.s32.totalorder %s33, 3
      %p62 = por %p60, %p61
      %p63 = scmp.ne.s32.totalorder %s55, %s58
      %p64 = scmp.eq.s32.totalorder %s33, 0
      %p65 = por %p63, %p64
      %p66 = scmp.ne.s32.totalorder %s55, %s58
      %p67 = scmp.eq.s32.totalorder %s38, 3
      %p68 = por %p66, %p67
      %p69 = scmp.ne.s32.totalorder %s58, %s59
      %p70 = scmp.eq.s32.totalorder %s38, 0
      %p71 = por %p69, %p70
      %p72 = scmp.ne.s32.totalorder %s58, %s59
      %p73 = scmp.eq.s32.totalorder %s39, 3
      %p74 = por %p72, %p73
      %p76 = scmp.ne.s32.totalorder %s59, %s75
      %p77 = scmp.eq.s32.totalorder %s39, 0
      %p78 = por %p76, %p77
      %s79 = ssub.s32 %s40, %s52
      %p80 = scmp.eq.s32.totalorder %s79, 0
      %s82 = sadd.s32 %s81, 1
      %s83 = scalar_select %p80, %s81, %s82
      %p86 = pneg %p80
      %p87 = scmp.eq.s32.totalorder %s33, 3
      %p88 = por %p86, %p87
      %p89 = scmp.ne.s32.totalorder %s81, %s84
      %p90 = scmp.eq.s32.totalorder %s33, 0
      %p91 = por %p89, %p90
      %p92 = scmp.ne.s32.totalorder %s81, %s84
      %p93 = scmp.eq.s32.totalorder %s38, 3
      %p94 = por %p92, %p93
      %p95 = scmp.ne.s32.totalorder %s84, %s85
      %p96 = scmp.eq.s32.totalorder %s38, 0
      %p97 = por %p95, %p96
      %p98 = scmp.ne.s32.totalorder %s84, %s85
      %p99 = scmp.eq.s32.totalorder %s39, 3
      %p100 = por %p98, %p99
      %p102 = scmp.ne.s32.totalorder %s85, %s101
      %p103 = scmp.eq.s32.totalorder %s39, 0
      %p104 = por %p102, %p103
      %s106 = sadd.s32 %s105, 1
      %p109 = scmp.eq.s32.totalorder %s33, 3
      %p110 = scmp.ne.s32.totalorder %s105, %s107
      %p111 = scmp.eq.s32.totalorder %s33, 0
      %p112 = por %p110, %p111
      %p113 = scmp.ne.s32.totalorder %s105, %s107
      %p114 = scmp.eq.s32.totalorder %s38, 3
      %p115 = por %p113, %p114
      %p116 = scmp.ne.s32.totalorder %s107, %s108
      %p117 = scmp.eq.s32.totalorder %s38, 0
      %p118 = por %p116, %p117
      %p119 = scmp.ne.s32.totalorder %s107, %s108
      %p120 = scmp.eq.s32.totalorder %s39, 3
      %p121 = por %p119, %p120
      %p123 = scmp.ne.s32.totalorder %s108, %s122
      %p124 = scmp.eq.s32.totalorder %s39, 0
      %p125 = por %p123, %p124
      %s127 = sadd.s32 %s126, 1
      %p130 = scmp.eq.s32.totalorder %s33, 3
      %p131 = scmp.ne.s32.totalorder %s126, %s128
      %p132 = scmp.eq.s32.totalorder %s33, 0
      %p133 = por %p131, %p132
      %p134 = scmp.ne.s32.totalorder %s126, %s128
      %p135 = scmp.eq.s32.totalorder %s38, 3
      %p136 = por %p134, %p135
      %p137 = scmp.ne.s32.totalorder %s128, %s129
      %p138 = scmp.eq.s32.totalorder %s38, 0
      %p139 = por %p137, %p138
      %p140 = scmp.ne.s32.totalorder %s128, %s129
      %p141 = scmp.eq.s32.totalorder %s39, 3
      %p142 = por %p140, %p141
      %p144 = scmp.ne.s32.totalorder %s129, %s143
      %p145 = scmp.eq.s32.totalorder %s39, 0
      %p146 = por %p144, %p145
      %s148 = sadd.s32 %s147, 1
      %p151 = scmp.eq.s32.totalorder %s33, 3
      %p152 = scmp.ne.s32.totalorder %s147, %s149
      %p153 = scmp.eq.s32.totalorder %s33, 0
      %p154 = por %p152, %p153
      %p155 = scmp.ne.s32.totalorder %s147, %s149
      %p156 = scmp.eq.s32.totalorder %s38, 3
      %p157 = por %p155, %p156
      %p158 = scmp.ne.s32.totalorder %s149, %s150
      %p159 = scmp.eq.s32.totalorder %s38, 0
      %p160 = por %p158, %p159
      %p161 = scmp.ne.s32.totalorder %s149, %s150
      %p162 = scmp.eq.s32.totalorder %s39, 3
      %p163 = por %p161, %p162
      %p165 = scmp.ne.s32.totalorder %s150, %s164
      %p166 = scmp.eq.s32.totalorder %s39, 0
      %p167 = por %p165, %p166
      %s169 = sadd.s32 %s168, 1
      %p172 = scmp.eq.s32.totalorder %s33, 3
      %p173 = scmp.ne.s32.totalorder %s168, %s170
      %p174 = scmp.eq.s32.totalorder %s33, 0
      %p175 = por %p173, %p174
      %p176 = scmp.ne.s32.totalorder %s168, %s170
      %p177 = scmp.eq.s32.totalorder %s38, 3
      %p178 = por %p176, %p177
      %p179 = scmp.ne.s32.totalorder %s170, %s171
      %p180 = scmp.eq.s32.totalorder %s38, 0
      %p181 = por %p179, %p180
      %p182 = scmp.ne.s32.totalorder %s170, %s171
      %p183 = scmp.eq.s32.totalorder %s39, 3
      %p184 = por %p182, %p183
      %p186 = scmp.ne.s32.totalorder %s171, %s185
      %p187 = scmp.eq.s32.totalorder %s39, 0
      %p188 = por %p186, %p187
      %s190 = sadd.s32 %s189, 1
      %p193 = scmp.eq.s32.totalorder %s33, 3
      %p194 = scmp.ne.s32.totalorder %s189, %s191
      %p195 = scmp.eq.s32.totalorder %s33, 0
      %p196 = por %p194, %p195
      %p197 = scmp.ne.s32.totalorder %s189, %s191
      %p198 = scmp.eq.s32.totalorder %s38, 3
      %p199 = por %p197, %p198
      %p200 = scmp.ne.s32.totalorder %s191, %s192
      %p201 = scmp.eq.s32.totalorder %s38, 0
      %p202 = por %p200, %p201
      %p203 = scmp.ne.s32.totalorder %s191, %s192
      %p204 = scmp.eq.s32.totalorder %s39, 3
      %p205 = por %p203, %p204
      %p207 = scmp.ne.s32.totalorder %s192, %s206
      %p208 = scmp.eq.s32.totalorder %s39, 0
      %p209 = por %p207, %p208
      %s211 = sadd.s32 %s210, 1
      %p214 = scmp.eq.s32.totalorder %s33, 3
      %p215 = scmp.ne.s32.totalorder %s210, %s212
      %p216 = scmp.eq.s32.totalorder %s33, 0
      %p217 = por %p215, %p216
      %p218 = scmp.ne.s32.totalorder %s210, %s212
      %p219 = scmp.eq.s32.totalorder %s38, 3
      %p220 = por %p218, %p219
      %p221 = scmp.ne.s32.totalorder %s212, %s213
      %p222 = scmp.eq.s32.totalorder %s38, 0
      %p223 = por %p221, %p222
      %p224 = scmp.ne.s32.totalorder %s212, %s213
      %p225 = scmp.eq.s32.totalorder %s39, 3
      %p226 = por %p224, %p225
      %p228 = scmp.ne.s32.totalorder %s213, %s227
      %p229 = scmp.eq.s32.totalorder %s39, 0
      %p230 = por %p228, %p229
      %s232 = sadd.s32 %s231, 1
      %p235 = scmp.eq.s32.totalorder %s33, 3
      %p236 = scmp.ne.s32.totalorder %s231, %s233
      %p237 = scmp.eq.s32.totalorder %s33, 0
      %p238 = por %p236, %p237
      %p239 = scmp.ne.s32.totalorder %s231, %s233
      %p240 = scmp.eq.s32.totalorder %s38, 3
      %p241 = por %p239, %p240
      %p242 = scmp.ne.s32.totalorder %s233, %s234
      %p243 = scmp.eq.s32.totalorder %s38, 0
      %p244 = por %p242, %p243
      %p245 = scmp.ne.s32.totalorder %s233, %s234
      %p246 = scmp.eq.s32.totalorder %s39, 3
      %p247 = por %p245, %p246
      %p249 = scmp.ne.s32.totalorder %s234, %s248
      %p250 = scmp.eq.s32.totalorder %s39, 0
      %p251 = por %p249, %p250
      %s253 = sadd.s32 %s252, 1
      %p256 = scmp.eq.s32.totalorder %s33, 3
      %p257 = scmp.ne.s32.totalorder %s252, %s254
      %p258 = scmp.eq.s32.totalorder %s33, 0
      %p259 = por %p257, %p258
      %p260 = scmp.ne.s32.totalorder %s252, %s254
      %p261 = scmp.eq.s32.totalorder %s38, 3
      %p262 = por %p260, %p261
      %p263 = scmp.ne.s32.totalorder %s254, %s255
      %p264 = scmp.eq.s32.totalorder %s38, 0
      %p265 = por %p263, %p264
      %p266 = scmp.ne.s32.totalorder %s254, %s255
      %p267 = scmp.eq.s32.totalorder %s39, 3
      %p268 = por %p266, %p267
      %p270 = scmp.ne.s32.totalorder %s255, %s269
      %p271 = scmp.eq.s32.totalorder %s39, 0
      %p272 = por %p270, %p271
      %s274 = sadd.s32 %s273, 1
      %p277 = scmp.eq.s32.totalorder %s33, 3
      %p278 = scmp.ne.s32.totalorder %s273, %s275
      %p279 = scmp.eq.s32.totalorder %s33, 0
      %p280 = por %p278, %p279
      %p281 = scmp.ne.s32.totalorder %s273, %s275
      %p282 = scmp.eq.s32.totalorder %s38, 3
      %p283 = por %p281, %p282
      %p284 = scmp.ne.s32.totalorder %s275, %s276
      %p285 = scmp.eq.s32.totalorder %s38, 0
      %p286 = por %p284, %p285
      %p287 = scmp.ne.s32.totalorder %s275, %s276
      %p288 = scmp.eq.s32.totalorder %s39, 3
      %p289 = por %p287, %p288
      %p291 = scmp.ne.s32.totalorder %s276, %s290
      %p292 = scmp.eq.s32.totalorder %s39, 0
      %p293 = por %p291, %p292
      %s295 = sadd.s32 %s294, 1
      %p298 = scmp.eq.s32.totalorder %s33, 3
      %p299 = scmp.ne.s32.totalorder %s294, %s296
      %p300 = scmp.eq.s32.totalorder %s33, 0
      %p301 = por %p299, %p300
      %p302 = scmp.ne.s32.totalorder %s294, %s296
      %p303 = scmp.eq.s32.totalorder %s38, 3
      %p304 = por %p302, %p303
      %p305 = scmp.ne.s32.totalorder %s296, %s297
      %p306 = scmp.eq.s32.totalorder %s38, 0
      %p307 = por %p305, %p306
      %p308 = scmp.ne.s32.totalorder %s296, %s297
      %p309 = scmp.eq.s32.totalorder %s39, 3
      %p310 = por %p308, %p309
      %p312 = scmp.ne.s32.totalorder %s297, %s311
      %p313 = scmp.eq.s32.totalorder %s39, 0
      %p314 = por %p312, %p313
      %s316 = sadd.s32 %s315, 1
      %p319 = scmp.eq.s32.totalorder %s33, 3
      %p320 = scmp.ne.s32.totalorder %s315, %s317
      %p321 = scmp.eq.s32.totalorder %s33, 0
      %p322 = por %p320, %p321
      %p323 = scmp.ne.s32.totalorder %s315, %s317
      %p324 = scmp.eq.s32.totalorder %s38, 3
      %p325 = por %p323, %p324
      %p326 = scmp.ne.s32.totalorder %s317, %s318
      %p327 = scmp.eq.s32.totalorder %s38, 0
      %p328 = por %p326, %p327
      %p329 = scmp.ne.s32.totalorder %s317, %s318
      %p330 = scmp.eq.s32.totalorder %s39, 3
      %p331 = por %p329, %p330
      %p333 = scmp.ne.s32.totalorder %s318, %s332
      %p334 = scmp.eq.s32.totalorder %s39, 0
      %p335 = por %p333, %p334
      %s337 = sadd.s32 %s336, 1
      %p340 = scmp.eq.s32.totalorder %s33, 3
      %p341 = scmp.ne.s32.totalorder %s336, %s338
      %p342 = scmp.eq.s32.totalorder %s33, 0
      %p343 = por %p341, %p342
      %p344 = scmp.ne.s32.totalorder %s336, %s338
      %p345 = scmp.eq.s32.totalorder %s38, 3
      %p346 = por %p344, %p345
      %p347 = scmp.ne.s32.totalorder %s338, %s339
      %p348 = scmp.eq.s32.totalorder %s38, 0
      %p349 = por %p347, %p348
      %p350 = scmp.ne.s32.totalorder %s338, %s339
      %p351 = scmp.eq.s32.totalorder %s39, 3
      %p352 = por %p350, %p351
      %p354 = scmp.ne.s32.totalorder %s339, %s353
      %p355 = scmp.eq.s32.totalorder %s39, 0
      %p356 = por %p354, %p355
      %s358 = sadd.s32 %s357, 1
      %p361 = scmp.eq.s32.totalorder %s33, 3
      %p362 = scmp.ne.s32.totalorder %s357, %s359
      %p363 = scmp.eq.s32.totalorder %s33, 0
      %p364 = por %p362, %p363
      %p365 = scmp.ne.s32.totalorder %s357, %s359
      %p366 = scmp.eq.s32.totalorder %s38, 3
      %p367 = por %p365, %p366
      %p368 = scmp.ne.s32.totalorder %s359, %s360
      %p369 = scmp.eq.s32.totalorder %s38, 0
      %p370 = por %p368, %p369
      %p371 = scmp.ne.s32.totalorder %s359, %s360
      %p372 = scmp.eq.s32.totalorder %s39, 3
      %p373 = por %p371, %p372
      %p375 = scmp.ne.s32.totalorder %s360, %s374
      %p376 = scmp.eq.s32.totalorder %s39, 0
      %p377 = por %p375, %p376
      %s379 = sadd.s32 %s378, 1
      %p382 = scmp.eq.s32.totalorder %s33, 3
      %p383 = scmp.ne.s32.totalorder %s378, %s380
      %p384 = scmp.eq.s32.totalorder %s33, 0
      %p385 = por %p383, %p384
      %p386 = scmp.ne.s32.totalorder %s378, %s380
      %p387 = scmp.eq.s32.totalorder %s38, 3
      %p388 = por %p386, %p387
      %p389 = scmp.ne.s32.totalorder %s380, %s381
      %p390 = scmp.eq.s32.totalorder %s38, 0
      %p391 = por %p389, %p390
      %p392 = scmp.ne.s32.totalorder %s380, %s381
      %p393 = scmp.eq.s32.totalorder %s39, 3
      %p394 = por %p392, %p393
      %p396 = scmp.ne.s32.totalorder %s381, %s395
      %p397 = scmp.eq.s32.totalorder %s39, 0
      %p398 = por %p396, %p397
      %s400 = sadd.s32 %s399, 1
      %p403 = scmp.eq.s32.totalorder %s33, 3
      %p404 = scmp.ne.s32.totalorder %s399, %s401
      %p405 = scmp.eq.s32.totalorder %s33, 0
      %p406 = por %p404, %p405
      %p407 = scmp.ne.s32.totalorder %s399, %s401
      %p408 = scmp.eq.s32.totalorder %s38, 3
      %p409 = por %p407, %p408
      %p410 = scmp.ne.s32.totalorder %s401, %s402
      %p411 = scmp.eq.s32.totalorder %s38, 0
      %p412 = por %p410, %p411
      %p413 = scmp.ne.s32.totalorder %s401, %s402
      %p414 = scmp.eq.s32.totalorder %s39, 3
      %p415 = por %p413, %p414
      %p417 = scmp.ne.s32.totalorder %s402, %s416
      %p418 = scmp.eq.s32.totalorder %s39, 0
      %p419 = por %p417, %p418
      %s421 = sadd.s32 %s420, 1
      %p424 = scmp.eq.s32.totalorder %s33, 3
      %p425 = scmp.ne.s32.totalorder %s420, %s422
      %p426 = scmp.eq.s32.totalorder %s33, 0
      %p427 = por %p425, %p426
      %p428 = scmp.ne.s32.totalorder %s420, %s422
      %p429 = scmp.eq.s32.totalorder %s38, 3
      %p430 = por %p428, %p429
      %p431 = scmp.ne.s32.totalorder %s422, %s423
      %p432 = scmp.eq.s32.totalorder %s38, 0
      %p433 = por %p431, %p432
      %p434 = scmp.ne.s32.totalorder %s422, %s423
      %p435 = scmp.eq.s32.totalorder %s39, 3
      %p436 = por %p434, %p435
      %p438 = scmp.ne.s32.totalorder %s423, %s437
      %p439 = scmp.eq.s32.totalorder %s39, 0
      %p440 = por %p438, %p439
      %s442 = sadd.s32 %s441, 1
      %p445 = scmp.eq.s32.totalorder %s33, 3
      %p446 = scmp.ne.s32.totalorder %s441, %s443
      %p447 = scmp.eq.s32.totalorder %s33, 0
      %p448 = por %p446, %p447
      %p449 = scmp.ne.s32.totalorder %s441, %s443
      %p450 = scmp.eq.s32.totalorder %s38, 3
      %p451 = por %p449, %p450
      %p452 = scmp.ne.s32.totalorder %s443, %s444
      %p453 = scmp.eq.s32.totalorder %s38, 0
      %p454 = por %p452, %p453
      %p455 = scmp.ne.s32.totalorder %s443, %s444
      %p456 = scmp.eq.s32.totalorder %s39, 3
      %p457 = por %p455, %p456
      %p459 = scmp.ne.s32.totalorder %s444, %s458
      %p460 = scmp.eq.s32.totalorder %s39, 0
      %p461 = por %p459, %p460
      %s463 = sadd.s32 %s462, 1
      %p466 = scmp.eq.s32.totalorder %s33, 3
      %p467 = scmp.ne.s32.totalorder %s462, %s464
      %p468 = scmp.eq.s32.totalorder %s33, 0
      %p469 = por %p467, %p468
      %p470 = scmp.ne.s32.totalorder %s462, %s464
      %p471 = scmp.eq.s32.totalorder %s38, 3
      %p472 = por %p470, %p471
      %p473 = scmp.ne.s32.totalorder %s464, %s465
      %p474 = scmp.eq.s32.totalorder %s38, 0
      %p475 = por %p473, %p474
      %p476 = scmp.ne.s32.totalorder %s464, %s465
      %p477 = scmp.eq.s32.totalorder %s39, 3
      %p478 = por %p476, %p477
      %p480 = scmp.ne.s32.totalorder %s465, %s479
      %p481 = scmp.eq.s32.totalorder %s39, 0
      %p482 = por %p480, %p481
      %s484 = sadd.s32 %s483, 1
      %p487 = scmp.eq.s32.totalorder %s33, 3
      %p488 = scmp.ne.s32.totalorder %s483, %s485
      %p489 = scmp.eq.s32.totalorder %s33, 0
      %p490 = por %p488, %p489
      %p491 = scmp.ne.s32.totalorder %s483, %s485
      %p492 = scmp.eq.s32.totalorder %s38, 3
      %p493 = por %p491, %p492
      %p494 = scmp.ne.s32.totalorder %s485, %s486
      %p495 = scmp.eq.s32.totalorder %s38, 0
      %p496 = por %p494, %p495
      %p497 = scmp.ne.s32.totalorder %s485, %s486
      %p498 = scmp.eq.s32.totalorder %s39, 3
      %p499 = por %p497, %p498
      %p501 = scmp.ne.s32.totalorder %s486, %s500
      %p502 = scmp.eq.s32.totalorder %s39, 0
      %p503 = por %p501, %p502
      %s505 = sadd.s32 %s504, 1
      %p508 = scmp.eq.s32.totalorder %s33, 3
      %p509 = scmp.ne.s32.totalorder %s504, %s506
      %p510 = scmp.eq.s32.totalorder %s33, 0
      %p511 = por %p509, %p510
      %p512 = scmp.ne.s32.totalorder %s504, %s506
      %p513 = scmp.eq.s32.totalorder %s38, 3
      %p514 = por %p512, %p513
      %p515 = scmp.ne.s32.totalorder %s506, %s507
      %p516 = scmp.eq.s32.totalorder %s38, 0
      %p517 = por %p515, %p516
      %p518 = scmp.ne.s32.totalorder %s506, %s507
      %p519 = scmp.eq.s32.totalorder %s39, 3
      %p520 = por %p518, %p519
      %p522 = scmp.ne.s32.totalorder %s507, %s521
      %p523 = scmp.eq.s32.totalorder %s39, 0
      %p524 = por %p522, %p523
      %s526 = sadd.s32 %s525, 1
      %p529 = scmp.eq.s32.totalorder %s33, 3
      %p530 = scmp.ne.s32.totalorder %s525, %s527
      %p531 = scmp.eq.s32.totalorder %s33, 0
      %p532 = por %p530, %p531
      %p533 = scmp.ne.s32.totalorder %s525, %s527
      %p534 = scmp.eq.s32.totalorder %s38, 3
      %p535 = por %p533, %p534
      %p536 = scmp.ne.s32.totalorder %s527, %s528
      %p537 = scmp.eq.s32.totalorder %s38, 0
      %p538 = por %p536, %p537
      %p539 = scmp.ne.s32.totalorder %s527, %s528
      %p540 = scmp.eq.s32.totalorder %s39, 3
      %p541 = por %p539, %p540
      %p543 = scmp.ne.s32.totalorder %s528, %s542
      %p544 = scmp.eq.s32.totalorder %s39, 0
      %p545 = por %p543, %p544
      %s547 = sadd.s32 %s546, 1
      %p550 = scmp.eq.s32.totalorder %s33, 3
      %p551 = scmp.ne.s32.totalorder %s546, %s548
      %p552 = scmp.eq.s32.totalorder %s33, 0
      %p553 = por %p551, %p552
      %p554 = scmp.ne.s32.totalorder %s546, %s548
      %p555 = scmp.eq.s32.totalorder %s38, 3
      %p556 = por %p554, %p555
      %p557 = scmp.ne.s32.totalorder %s548, %s549
      %p558 = scmp.eq.s32.totalorder %s38, 0
      %p559 = por %p557, %p558
      %p560 = scmp.ne.s32.totalorder %s548, %s549
      %p561 = scmp.eq.s32.totalorder %s39, 3
      %p562 = por %p560, %p561
      %p564 = scmp.ne.s32.totalorder %s549, %s563
      %p565 = scmp.eq.s32.totalorder %s39, 0
      %p566 = por %p564, %p565
      %s567 = ssub.s32 %s40, %s52
      %s568 = ssub.s32 %s41, %s48
      %s569 = sor.u32 %s567, %s568
      %p570 = scmp.eq.s32.totalorder %s569, 0
      %s572 = sadd.s32 %s571, 1
      %s573 = scalar_select %p570, %s571, %s572
      %p576 = pneg %p570
      %p577 = scmp.eq.s32.totalorder %s33, 3
      %p578 = por %p576, %p577
      %p579 = scmp.ne.s32.totalorder %s571, %s574
      %p580 = scmp.eq.s32.totalorder %s33, 0
      %p581 = por %p579, %p580
      %p582 = scmp.ne.s32.totalorder %s571, %s574
      %p583 = scmp.eq.s32.totalorder %s38, 3
      %p584 = por %p582, %p583
      %p585 = scmp.ne.s32.totalorder %s574, %s575
      %p586 = scmp.eq.s32.totalorder %s38, 0
      %p587 = por %p585, %p586
      %p588 = scmp.ne.s32.totalorder %s574, %s575
      %p589 = scmp.eq.s32.totalorder %s39, 3
      %p590 = por %p588, %p589
      %p592 = scmp.ne.s32.totalorder %s575, %s591
      %p593 = scmp.eq.s32.totalorder %s39, 0
      %p594 = por %p592, %p593
      %p595 = scmp.le.s32.totalorder 1, %s33
      %p596 = scmp.lt.s32.totalorder %s33, 5
      %p597 = pnand %p595, %p596
      %p598 = pneg %p597
      // Predicated region
      $region9: #{tpu_custom_call.1} parent=5 // pred_check
        _
      $region10: #{tpu_custom_call.1} parent=5 // pred_check_branch
        %600 = sbr.rel (%p597) target = $region12
      $region11: #{tpu_custom_call.1} parent=5 // pred_region
        %s601 = ssub.s32 %s33, 1
        // Predicated region
        $region13: #{tpu_custom_call.1} parent=11 // pred_check
          %p602 = pneg %p118
        $region14: #{tpu_custom_call.1} parent=11 // pred_check_branch
          %604 = sbr.rel (%p602) target = $region16
        $region15: #{tpu_custom_call.1} parent=11 // pred_region
          _
        $region16: #{tpu_custom_call.1} parent=11 // pred_fallthru
          _
        // Predicated region
        $region17: #{tpu_custom_call.1} parent=11 // pred_check
          %p605 = pneg %p139
        $region18: #{tpu_custom_call.1} parent=11 // pred_check_branch
          %607 = sbr.rel (%p605) target = $region20
        $region19: #{tpu_custom_call.1} parent=11 // pred_region
          _
        $region20: #{tpu_custom_call.1} parent=11 // pred_fallthru
          _
        // Predicated region
        $region21: #{tpu_custom_call.1} parent=11 // pred_check
          %p608 = pneg %p160
        $region22: #{tpu_custom_call.1} parent=11 // pred_check_branch
          %610 = sbr.rel (%p608) target = $region24
        $region23: #{tpu_custom_call.1} parent=11 // pred_region
          _
        $region24: #{tpu_custom_call.1} parent=11 // pred_fallthru
          _
        // Predicated region
        $region25: #{tpu_custom_call.1} parent=11 // pred_check
          %p611 = pneg %p181
        $region26: #{tpu_custom_call.1} parent=11 // pred_check_branch
          %613 = sbr.rel (%p611) target = $region28
        $region27: #{tpu_custom_call.1} parent=11 // pred_region
          _
        $region28: #{tpu_custom_call.1} parent=11 // pred_fallthru
          _
        // Predicated region
        $region29: #{tpu_custom_call.1} parent=11 // pred_check
          %p614 = pneg %p202
        $region30: #{tpu_custom_call.1} parent=11 // pred_check_branch
          %616 = sbr.rel (%p614) target = $region32
        $region31: #{tpu_custom_call.1} parent=11 // pred_region
          _
        $region32: #{tpu_custom_call.1} parent=11 // pred_fallthru
          _
        // Predicated region
        $region33: #{tpu_custom_call.1} parent=11 // pred_check
          %p617 = pneg %p223
        $region34: #{tpu_custom_call.1} parent=11 // pred_check_branch
          %619 = sbr.rel (%p617) target = $region36
        $region35: #{tpu_custom_call.1} parent=11 // pred_region
          _
        $region36: #{tpu_custom_call.1} parent=11 // pred_fallthru
          _
        // Predicated region
        $region37: #{tpu_custom_call.1} parent=11 // pred_check
          %p620 = pneg %p244
        $region38: #{tpu_custom_call.1} parent=11 // pred_check_branch
          %622 = sbr.rel (%p620) target = $region40
        $region39: #{tpu_custom_call.1} parent=11 // pred_region
          _
        $region40: #{tpu_custom_call.1} parent=11 // pred_fallthru
          _
        // Predicated region
        $region41: #{tpu_custom_call.1} parent=11 // pred_check
          %p623 = pneg %p265
        $region42: #{tpu_custom_call.1} parent=11 // pred_check_branch
          %625 = sbr.rel (%p623) target = $region44
        $region43: #{tpu_custom_call.1} parent=11 // pred_region
          _
        $region44: #{tpu_custom_call.1} parent=11 // pred_fallthru
          _
        // Predicated region
        $region45: #{tpu_custom_call.1} parent=11 // pred_check
          %p626 = pneg %p286
        $region46: #{tpu_custom_call.1} parent=11 // pred_check_branch
          %628 = sbr.rel (%p626) target = $region48
        $region47: #{tpu_custom_call.1} parent=11 // pred_region
          _
        $region48: #{tpu_custom_call.1} parent=11 // pred_fallthru
          _
        // Predicated region
        $region49: #{tpu_custom_call.1} parent=11 // pred_check
          %p629 = pneg %p307
        $region50: #{tpu_custom_call.1} parent=11 // pred_check_branch
          %631 = sbr.rel (%p629) target = $region52
        $region51: #{tpu_custom_call.1} parent=11 // pred_region
          _
        $region52: #{tpu_custom_call.1} parent=11 // pred_fallthru
          _
        // Predicated region
        $region53: #{tpu_custom_call.1} parent=11 // pred_check
          %p632 = pneg %p328
        $region54: #{tpu_custom_call.1} parent=11 // pred_check_branch
          %634 = sbr.rel (%p632) target = $region56
        $region55: #{tpu_custom_call.1} parent=11 // pred_region
          _
        $region56: #{tpu_custom_call.1} parent=11 // pred_fallthru
          _
        // Predicated region
        $region57: #{tpu_custom_call.1} parent=11 // pred_check
          %p635 = pneg %p349
        $region58: #{tpu_custom_call.1} parent=11 // pred_check_branch
          %637 = sbr.rel (%p635) target = $region60
        $region59: #{tpu_custom_call.1} parent=11 // pred_region
          _
        $region60: #{tpu_custom_call.1} parent=11 // pred_fallthru
          _
        // Predicated region
        $region61: #{tpu_custom_call.1} parent=11 // pred_check
          %p638 = pneg %p370
        $region62: #{tpu_custom_call.1} parent=11 // pred_check_branch
          %640 = sbr.rel (%p638) target = $region64
        $region63: #{tpu_custom_call.1} parent=11 // pred_region
          _
        $region64: #{tpu_custom_call.1} parent=11 // pred_fallthru
          _
        // Predicated region
        $region65: #{tpu_custom_call.1} parent=11 // pred_check
          %p641 = pneg %p391
        $region66: #{tpu_custom_call.1} parent=11 // pred_check_branch
          %643 = sbr.rel (%p641) target = $region68
        $region67: #{tpu_custom_call.1} parent=11 // pred_region
          _
        $region68: #{tpu_custom_call.1} parent=11 // pred_fallthru
          _
        // Predicated region
        $region69: #{tpu_custom_call.1} parent=11 // pred_check
          %p644 = pneg %p412
        $region70: #{tpu_custom_call.1} parent=11 // pred_check_branch
          %646 = sbr.rel (%p644) target = $region72
        $region71: #{tpu_custom_call.1} parent=11 // pred_region
          _
        $region72: #{tpu_custom_call.1} parent=11 // pred_fallthru
          _
        // Predicated region
        $region73: #{tpu_custom_call.1} parent=11 // pred_check
          %p647 = pneg %p433
        $region74: #{tpu_custom_call.1} parent=11 // pred_check_branch
          %649 = sbr.rel (%p647) target = $region76
        $region75: #{tpu_custom_call.1} parent=11 // pred_region
          _
        $region76: #{tpu_custom_call.1} parent=11 // pred_fallthru
          _
        // Predicated region
        $region77: #{tpu_custom_call.1} parent=11 // pred_check
          %p650 = pneg %p454
        $region78: #{tpu_custom_call.1} parent=11 // pred_check_branch
          %652 = sbr.rel (%p650) target = $region80
        $region79: #{tpu_custom_call.1} parent=11 // pred_region
          _
        $region80: #{tpu_custom_call.1} parent=11 // pred_fallthru
          _
        // Predicated region
        $region81: #{tpu_custom_call.1} parent=11 // pred_check
          %p653 = pneg %p475
        $region82: #{tpu_custom_call.1} parent=11 // pred_check_branch
          %655 = sbr.rel (%p653) target = $region84
        $region83: #{tpu_custom_call.1} parent=11 // pred_region
          _
        $region84: #{tpu_custom_call.1} parent=11 // pred_fallthru
          _
        // Predicated region
        $region85: #{tpu_custom_call.1} parent=11 // pred_check
          %p656 = pneg %p496
        $region86: #{tpu_custom_call.1} parent=11 // pred_check_branch
          %658 = sbr.rel (%p656) target = $region88
        $region87: #{tpu_custom_call.1} parent=11 // pred_region
          _
        $region88: #{tpu_custom_call.1} parent=11 // pred_fallthru
          _
        // Predicated region
        $region89: #{tpu_custom_call.1} parent=11 // pred_check
          %p659 = pneg %p517
        $region90: #{tpu_custom_call.1} parent=11 // pred_check_branch
          %661 = sbr.rel (%p659) target = $region92
        $region91: #{tpu_custom_call.1} parent=11 // pred_region
          _
        $region92: #{tpu_custom_call.1} parent=11 // pred_fallthru
          _
        // Predicated region
        $region93: #{tpu_custom_call.1} parent=11 // pred_check
          %p662 = pneg %p538
        $region94: #{tpu_custom_call.1} parent=11 // pred_check_branch
          %664 = sbr.rel (%p662) target = $region96
        $region95: #{tpu_custom_call.1} parent=11 // pred_region
          _
        $region96: #{tpu_custom_call.1} parent=11 // pred_fallthru
          _
        // Predicated region
        $region97: #{tpu_custom_call.1} parent=11 // pred_check
          %p665 = pneg %p559
        $region98: #{tpu_custom_call.1} parent=11 // pred_check_branch
          %667 = sbr.rel (%p665) target = $region100
        $region99: #{tpu_custom_call.1} parent=11 // pred_region
          _
        $region100: #{tpu_custom_call.1} parent=11 // pred_fallthru
          _
      $region12: #{tpu_custom_call.1} parent=5 // pred_fallthru
        _
      %p668 = scmp.lt.s32.totalorder %s33, 4
      // Predicated region
      $region101: #{tpu_custom_call.1} parent=5 // pred_check
        %p669 = pneg %p668
      $region102: #{tpu_custom_call.1} parent=5 // pred_check_branch
        %671 = sbr.rel (%p669) target = $region104
      $region103: #{tpu_custom_call.1} parent=5 // pred_region
        // Predicated region
        $region105: #{tpu_custom_call.1} parent=103 // pred_check
          %p672 = pneg %p65
        $region106: #{tpu_custom_call.1} parent=103 // pred_check_branch
          %674 = sbr.rel (%p672) target = $region108
        $region107: #{tpu_custom_call.1} parent=103 // pred_region
          %p675 = scmp.lt.s32.totalorder %s40, 1
          %s676 = scalar_select %p675, %s40, 1
          %s677 = smul.addr %s676, 2
          %s678 = smul.addr %s677, 8
          %s679 = scalar_lea.vmem %s0, %s678
        $region108: #{tpu_custom_call.1} parent=103 // pred_fallthru
          _
        // Predicated region
        $region109: #{tpu_custom_call.1} parent=103 // pred_check
          %p680 = pneg %p91
        $region110: #{tpu_custom_call.1} parent=103 // pred_check_branch
          %682 = sbr.rel (%p680) target = $region112
        $region111: #{tpu_custom_call.1} parent=103 // pred_region
          %p683 = scmp.lt.s32.totalorder %s40, 1
          %s684 = scalar_select %p683, %s40, 1
          %s685 = smul.addr %s684, 16
          %s686 = smul.addr %s685, 8
          %s687 = scalar_lea.vmem %s1, %s686
        $region112: #{tpu_custom_call.1} parent=103 // pred_fallthru
          _
      $region104: #{tpu_custom_call.1} parent=5 // pred_fallthru
        _
      %p688 = scmp.le.s32.totalorder 1, %s33
      %p689 = scmp.lt.s32.totalorder %s33, 5
      %p690 = pnand %p688, %p689
      %p691 = pneg %p690
      // Predicated region
      $region113: #{tpu_custom_call.1} parent=5 // pred_check
        _
      $region114: #{tpu_custom_call.1} parent=5 // pred_check_branch
        %693 = sbr.rel (%p690) target = $region116
      $region115: #{tpu_custom_call.1} parent=5 // pred_region
        %s694 = ssub.s32 %s33, 1
        %p695 = scmp.lt.s32.totalorder %s42, 1
        %s696 = scalar_select %p695, %s42, 1
        %s697 = smul.addr %s696, 2
        %s698 = smul.addr %s697, 8
        %s699 = scalar_lea.vmem %s0, %s698
        %p700 = pneg %p71
        %p701 = pneg %p68
        %p702 = scmp.lt.s32.totalorder %s42, 1
        %s703 = scalar_select %p702, %s42, 1
        %s704 = smul.addr %s703, 16
        %s705 = smul.addr %s704, 8
        %s706 = scalar_lea.vmem %s1, %s705
        %p707 = pneg %p97
        %p708 = pneg %p94
        %p709 = pneg %p118
        %p710 = pneg %p115
        %p711 = pneg %p139
        %p712 = pneg %p136
        %p713 = pneg %p160
        %p714 = pneg %p157
        %p715 = pneg %p181
        %p716 = pneg %p178
        %p717 = pneg %p202
        %p718 = pneg %p199
        %p719 = pneg %p223
        %p720 = pneg %p220
        %p721 = pneg %p244
        %p722 = pneg %p241
        %p723 = pneg %p265
        %p724 = pneg %p262
        %p725 = pneg %p286
        %p726 = pneg %p283
        %p727 = pneg %p307
        %p728 = pneg %p304
        %p729 = pneg %p328
        %p730 = pneg %p325
        %p731 = pneg %p349
        %p732 = pneg %p346
        %p733 = pneg %p370
        %p734 = pneg %p367
        %p735 = pneg %p391
        %p736 = pneg %p388
        %p737 = pneg %p412
        %p738 = pneg %p409
        %p739 = pneg %p433
        %p740 = pneg %p430
        %p741 = pneg %p454
        %p742 = pneg %p451
        %p743 = pneg %p475
        %p744 = pneg %p472
        %p745 = pneg %p496
        %p746 = pneg %p493
        %p747 = pneg %p517
        %p748 = pneg %p514
        %p749 = pneg %p538
        %p750 = pneg %p535
        %p751 = pneg %p559
        %p752 = pneg %p556
        %p753 = pneg %p587
        %p754 = pneg %p584
        %s755 = sand.u32 %s574, 1
        %s756 = scalar_lea.sflag [#allocation8], %s755
        %s757 = sand.u32 %s574, 1
        %s758 = smul.addr %s757, 8
        %s759 = scalar_lea.vmem [#allocation7], %s758
        %p760 = scmp.lt.s32.totalorder %s42, 1
        %s761 = scalar_select %p760, %s42, 1
        %s762 = smul.addr %s761, 2
        %s763 = smul.addr %s762, 8
        %s764 = scalar_lea.vmem %s0, %s763
        %p765 = scmp.lt.s32.totalorder %s42, 1
        %s766 = scalar_select %p765, %s42, 1
        %s767 = smul.addr %s766, 16
        %s768 = smul.addr %s767, 8
        %s769 = scalar_lea.vmem %s1, %s768
        %v771 = vld [vmem:[%s2] sm:$0x1]
        %v772 = vld [vmem:[%s3] sm:$0x1]
        %v773 = vld [vmem:[%s9] sm:$0x1]
        %v774 = vld [vmem:[%s10] sm:$0x1]
        %v775 = vld [vmem:[%s16] sm:$0x1]
        %v776 = vld [vmem:[%s17] sm:$0x1]
        %v777 = vld [vmem:[%s8] sm:$0x1]
        %v778 = vld [vmem:[%s15] sm:$0x1]
        %v779 = vld [vmem:[%s19] sm:$0x1]
        %v780 = vld [vmem:[%s21] sm:$0x1]
        %v781 = vld [vmem:[%s23] sm:$0x1]
        %p782 = scmp.eq.s32.totalorder %s43, 0
        // Predicated region
        $region117: #{tpu_custom_call.1} parent=115 // pred_check
          %p783 = pneg %p782
        $region118: #{tpu_custom_call.1} parent=115 // pred_check_branch
          %785 = sbr.rel (%p783) target = $region120
        $region119: #{tpu_custom_call.1} parent=115 // pred_region
          %v786 = vld [vmem:[%s764] sm:$0xff]
          %v787 = vld [vmem:[%s764 + $0x8] sm:$0xff]
          %vm788 = vcmask 261120
          %v789 = vsel %vm788, %v786, 0.0
          %790 = vadd.xlane.f32.xlu0 %v789
          %v791 = vpop.xlane.xlu0 %790
          %v792 = vsel %vm788, %v787, 0.0
          %793 = vadd.xlane.f32.xlu0 %v792
          %v794 = vpop.xlane.xlu0 %793
          %v795 = vrcp.pop 32.0
          %v796 = vmul.f32 %v791, %v795
          %v797 = vmul.f32 %v794, %v795
          %v798 = vsub.f32 %v786, %v796
          %v799 = vsub.f32 %v787, %v797
          %v800 = vmul.f32 %v798, %v798
          %v801 = vmul.f32 %v799, %v799
          %v802 = vsel %vm788, %v800, 0.0
          %803 = vadd.xlane.f32.xlu0 %v802
          %v804 = vpop.xlane.xlu0 %803
          %v805 = vsel %vm788, %v801, 0.0
          %806 = vadd.xlane.f32.xlu0 %v805
          %v807 = vpop.xlane.xlu0 %806
          %v808 = vmul.f32 %v804, %v795
          %v809 = vmul.f32 %v807, %v795
          %v810 = vadd.f32 %v808, 1e-05
          %v811 = vadd.f32 %v809, 1e-05
          %v812 = vrsqrt.pop %v810
          %v813 = vrsqrt.pop %v811
          %v814 = vmul.f32 %v798, %v812
          %v815 = vmul.f32 %v799, %v813
          %v817 = vlaneseq
          %v818 = vshrl.u32 %v817, 7
          %v819 = vsub.s32 0, %v818
          %v820 = vrot.slane %v771, %v819
          %v822 = vmul.f32 %v814, %v820
          %v823 = vmul.f32 %v815, %v820
          %v825 = vlaneseq
          %v826 = vshrl.u32 %v825, 7
          %v827 = vsub.s32 0, %v826
          %v828 = vrot.slane %v772, %v827
          %v830 = vadd.f32 %v822, %v828
          %v831 = vadd.f32 %v823, %v828
          %v832 = vpack.c.bf16 %v831, %v830
          %v833 = vld [vmem:[%s769] sm:$0xff]
          %v834 = vld [vmem:[%s769 + $0x8] sm:$0xff]
          %v835 = vld [vmem:[%s769 + $0x10] sm:$0xff]
          %v836 = vld [vmem:[%s769 + $0x18] sm:$0xff]
          %v837 = vld [vmem:[%s769 + $0x20] sm:$0xff]
          %v838 = vld [vmem:[%s769 + $0x28] sm:$0xff]
          %v839 = vld [vmem:[%s769 + $0x30] sm:$0xff]
          %v840 = vld [vmem:[%s769 + $0x38] sm:$0xff]
          %v841 = vld [vmem:[%s769 + $0x40] sm:$0xff]
          %v842 = vld [vmem:[%s769 + $0x48] sm:$0xff]
          %v843 = vld [vmem:[%s769 + $0x50] sm:$0xff]
          %v844 = vld [vmem:[%s769 + $0x58] sm:$0xff]
          %v845 = vld [vmem:[%s769 + $0x60] sm:$0xff]
          %v846 = vld [vmem:[%s769 + $0x68] sm:$0xff]
          %v847 = vld [vmem:[%s769 + $0x70] sm:$0xff]
          %v848 = vld [vmem:[%s769 + $0x78] sm:$0xff]
          %v849 = vpack.c.bf16 %v834, %v833
          %v850 = vpack.c.bf16 %v836, %v835
          %v851 = vpack.c.bf16 %v838, %v837
          %v852 = vpack.c.bf16 %v840, %v839
          %v853 = vpack.c.bf16 %v842, %v841
          %v854 = vpack.c.bf16 %v844, %v843
          %v855 = vpack.c.bf16 %v846, %v845
          %v856 = vpack.c.bf16 %v848, %v847
          %v857 = vld [vmem:[%s5] sm:$0xf]
          %v858 = vld [vmem:[%s5 + $0x4] sm:$0xf]
          %v859 = vld [vmem:[%s5 + $0x8] sm:$0xf]
          %v860 = vld [vmem:[%s5 + $0xc] sm:$0xf]
          %v865 = vunpack.c.l.b16 %v857
          %v866 = vunpack.c.l.b16 %v858
          %v867 = vunpack.c.l.b16 %v859
          %v868 = vunpack.c.l.b16 %v860
          %v869 = vpack.c.b16 %v866, %v865
          %v870 = vpack.c.b16 %v868, %v867
          %v874 = vsel %vm788, %v832, 0
          %876 = vmatprep.subr.bf16.mxu0 0
          %877 = vmatpush1.bf16.msra.mxu0 %v869
          %878 = vmatprep.subr.bf16.mxu0 0
          %879 = vmatpush1.bf16.msra.mxu0 %v870
          %880 = vmatprep.subr.bf16.mxu0 0
          %881 = vmatpush1.bf16.msra.mxu0 0
          %882 = vmatprep.subr.bf16.mxu0 0
          %883 = vmatpush1.bf16.msra.mxu0 0
          %884 = vmatprep.subr.bf16.mxu0 0
          %885 = vmatpush1.bf16.msra.mxu0 0
          %886 = vmatprep.subr.bf16.mxu0 0
          %887 = vmatpush1.bf16.msra.mxu0 0
          %888 = vmatprep.subr.bf16.mxu0 0
          %889 = vmatpush1.bf16.msra.mxu0 0
          %890 = vmatprep.subr.bf16.mxu0 0
          %891 = vmatpush1.bf16.msra.mxu0 0
          %892 = vmatprep.subr.bf16.mxu0 0
          %893 = vmatpush1.bf16.msra.mxu0 0
          %894 = vmatprep.subr.bf16.mxu0 0
          %895 = vmatpush1.bf16.msra.mxu0 0
          %896 = vmatprep.subr.bf16.mxu0 0
          %897 = vmatpush1.bf16.msra.mxu0 0
          %898 = vmatprep.subr.bf16.mxu0 0
          %899 = vmatpush1.bf16.msra.mxu0 0
          %900 = vmatprep.subr.bf16.mxu0 0
          %901 = vmatpush1.bf16.msra.mxu0 0
          %902 = vmatprep.subr.bf16.mxu0 0
          %903 = vmatpush1.bf16.msra.mxu0 0
          %904 = vmatprep.subr.bf16.mxu0 0
          %905 = vmatpush1.bf16.msra.mxu0 0
          %906 = vmatprep.subr.bf16.mxu0 0
          %907 = vmatpush1.bf16.msra.mxu0 0
          %908 = vmatprep.mubr.bf16.mxu0 0
          %909 = vmatmul.mubr.bf16.gmra.mrb[0].mxu0 %v874
          %v910 = vpop.f32.mrb[0].mxu0
          %v911 = vadd.f32 0.0, %v910
          %v912 = vpop.f32.mrb[0].mxu0
          %v913 = vpop.f32.mrb[0].mxu0
          %v914 = vadd.f32 0.0, %v913
          %v915 = vpop.f32.mrb[0].mxu0
          %916 = vdwg.mxu0
          %v917 = vpack.c.bf16 %v914, %v911
          %vm918 = vcmask 64512
          %919 = vst.msk [vmem:[#allocation2] sm:$0xff] %vm918, %v917
          %v920 = vld [vmem:[%s6] sm:$0xf]
          %v921 = vld [vmem:[%s6 + $0x4] sm:$0xf]
          %v922 = vld [vmem:[%s6 + $0x8] sm:$0xf]
          %v923 = vld [vmem:[%s6 + $0xc] sm:$0xf]
          %v928 = vunpack.c.l.b16 %v920
          %v929 = vunpack.c.l.b16 %v921
          %v930 = vunpack.c.l.b16 %v922
          %v931 = vunpack.c.l.b16 %v923
          %v932 = vpack.c.b16 %v929, %v928
          %v933 = vpack.c.b16 %v931, %v930
          %936 = vmatprep.subr.bf16.mxu0 0
          %937 = vmatpush1.bf16.msra.mxu0 %v932
          %938 = vmatprep.subr.bf16.mxu0 0
          %939 = vmatpush1.bf16.msra.mxu0 %v933
          %940 = vmatprep.subr.bf16.mxu0 0
          %941 = vmatpush1.bf16.msra.mxu0 0
          %942 = vmatprep.subr.bf16.mxu0 0
          %943 = vmatpush1.bf16.msra.mxu0 0
          %944 = vmatprep.subr.bf16.mxu0 0
          %945 = vmatpush1.bf16.msra.mxu0 0
          %946 = vmatprep.subr.bf16.mxu0 0
          %947 = vmatpush1.bf16.msra.mxu0 0
          %948 = vmatprep.subr.bf16.mxu0 0
          %949 = vmatpush1.bf16.msra.mxu0 0
          %950 = vmatprep.subr.bf16.mxu0 0
          %951 = vmatpush1.bf16.msra.mxu0 0
          %952 = vmatprep.subr.bf16.mxu0 0
          %953 = vmatpush1.bf16.msra.mxu0 0
          %954 = vmatprep.subr.bf16.mxu0 0
          %955 = vmatpush1.bf16.msra.mxu0 0
          %956 = vmatprep.subr.bf16.mxu0 0
          %957 = vmatpush1.bf16.msra.mxu0 0
          %958 = vmatprep.subr.bf16.mxu0 0
          %959 = vmatpush1.bf16.msra.mxu0 0
          %960 = vmatprep.subr.bf16.mxu0 0
          %961 = vmatpush1.bf16.msra.mxu0 0
          %962 = vmatprep.subr.bf16.mxu0 0
          %963 = vmatpush1.bf16.msra.mxu0 0
          %964 = vmatprep.subr.bf16.mxu0 0
          %965 = vmatpush1.bf16.msra.mxu0 0
          %966 = vmatprep.subr.bf16.mxu0 0
          %967 = vmatpush1.bf16.msra.mxu0 0
          %968 = vmatprep.mubr.bf16.mxu0 0
          %969 = vmatmul.mubr.bf16.gmra.mrb[0].mxu0 %v874
          %v970 = vpop.f32.mrb[0].mxu0
          %v971 = vadd.f32 0.0, %v970
          %v972 = vpop.f32.mrb[0].mxu0
          %v973 = vpop.f32.mrb[0].mxu0
          %v974 = vadd.f32 0.0, %v973
          %v975 = vpop.f32.mrb[0].mxu0
          %976 = vdwg.mxu0
          %v977 = vpack.c.bf16 %v974, %v971
          %978 = vst.msk [vmem:[#allocation3] sm:$0xff] %vm918, %v977
          %v979 = vld [vmem:[%s12] sm:$0xf]
          %v980 = vld [vmem:[%s12 + $0x4] sm:$0xf]
          %v983 = vunpack.c.l.b16 %v979
          %v984 = vunpack.c.l.b16 %v980
          %v985 = vpack.c.b16 %v984, %v983
          %vm987 = vcmask 130048
          %v989 = vsel %vm987, %v849, 0
          %v992 = vsel %vm987, %v850, 0
          %v995 = vsel %vm987, %v851, 0
          %v998 = vsel %vm987, %v852, 0
          %v1001 = vsel %vm987, %v853, 0
          %v1004 = vsel %vm987, %v854, 0
          %v1007 = vsel %vm987, %v855, 0
          %v1010 = vsel %vm987, %v856, 0
          %1012 = vmatprep.subr.bf16.mxu0 0
          %1013 = vmatpush1.bf16.msra.mxu0 %v985
          %1014 = vmatprep.subr.bf16.mxu0 0
          %1015 = vmatpush1.bf16.msra.mxu0 0
          %1016 = vmatprep.subr.bf16.mxu0 0
          %1017 = vmatpush1.bf16.msra.mxu0 0
          %1018 = vmatprep.subr.bf16.mxu0 0
          %1019 = vmatpush1.bf16.msra.mxu0 0
          %1020 = vmatprep.subr.bf16.mxu0 0
          %1021 = vmatpush1.bf16.msra.mxu0 0
          %1022 = vmatprep.subr.bf16.mxu0 0
          %1023 = vmatpush1.bf16.msra.mxu0 0
          %1024 = vmatprep.subr.bf16.mxu0 0
          %1025 = vmatpush1.bf16.msra.mxu0 0
          %1026 = vmatprep.subr.bf16.mxu0 0
          %1027 = vmatpush1.bf16.msra.mxu0 0
          %1028 = vmatprep.subr.bf16.mxu0 0
          %1029 = vmatpush1.bf16.msra.mxu0 0
          %1030 = vmatprep.subr.bf16.mxu0 0
          %1031 = vmatpush1.bf16.msra.mxu0 0
          %1032 = vmatprep.subr.bf16.mxu0 0
          %1033 = vmatpush1.bf16.msra.mxu0 0
          %1034 = vmatprep.subr.bf16.mxu0 0
          %1035 = vmatpush1.bf16.msra.mxu0 0
          %1036 = vmatprep.subr.bf16.mxu0 0
          %1037 = vmatpush1.bf16.msra.mxu0 0
          %1038 = vmatprep.subr.bf16.mxu0 0
          %1039 = vmatpush1.bf16.msra.mxu0 0
          %1040 = vmatprep.subr.bf16.mxu0 0
          %1041 = vmatpush1.bf16.msra.mxu0 0
          %1042 = vmatprep.subr.bf16.mxu0 0
          %1043 = vmatpush1.bf16.msra.mxu0 0
          %1044 = vmatprep.mubr.bf16.mxu0 0
          %1045 = vmatmul.mubr.bf16.gmra.mrb[0].mxu0 %v989
          %v1046 = vpop.f32.mrb[0].mxu0
          %v1047 = vadd.f32 0.0, %v1046
          %v1048 = vpop.f32.mrb[0].mxu0
          %v1049 = vpop.f32.mrb[0].mxu0
          %v1050 = vadd.f32 0.0, %v1049
          %v1051 = vpop.f32.mrb[0].mxu0
          %1052 = vmatprep.mubr.bf16.mxu0 0
          %1053 = vmatmul.mubr.bf16.gmra.mrb[0].mxu0 %v992
          %v1054 = vpop.f32.mrb[0].mxu0
          %v1055 = vadd.f32 0.0, %v1054
          %v1056 = vpop.f32.mrb[0].mxu0
          %v1057 = vpop.f32.mrb[0].mxu0
          %v1058 = vadd.f32 0.0, %v1057
          %v1059 = vpop.f32.mrb[0].mxu0
          %1060 = vmatprep.mubr.bf16.mxu0 0
          %1061 = vmatmul.mubr.bf16.gmra.mrb[0].mxu0 %v995
          %v1062 = vpop.f32.mrb[0].mxu0
          %v1063 = vadd.f32 0.0, %v1062
          %v1064 = vpop.f32.mrb[0].mxu0
          %v1065 = vpop.f32.mrb[0].mxu0
          %v1066 = vadd.f32 0.0, %v1065
          %v1067 = vpop.f32.mrb[0].mxu0
          %1068 = vmatprep.mubr.bf16.mxu0 0
          %1069 = vmatmul.mubr.bf16.gmra.mrb[0].mxu0 %v998
          %v1070 = vpop.f32.mrb[0].mxu0
          %v1071 = vadd.f32 0.0, %v1070
          %v1072 = vpop.f32.mrb[0].mxu0
          %v1073 = vpop.f32.mrb[0].mxu0
          %v1074 = vadd.f32 0.0, %v1073
          %v1075 = vpop.f32.mrb[0].mxu0
          %1076 = vmatprep.mubr.bf16.mxu0 0
          %1077 = vmatmul.mubr.bf16.gmra.mrb[0].mxu0 %v1001
          %v1078 = vpop.f32.mrb[0].mxu0
          %v1079 = vadd.f32 0.0, %v1078
          %v1080 = vpop.f32.mrb[0].mxu0
          %v1081 = vpop.f32.mrb[0].mxu0
          %v1082 = vadd.f32 0.0, %v1081
          %v1083 = vpop.f32.mrb[0].mxu0
          %1084 = vmatprep.mubr.bf16.mxu0 0
          %1085 = vmatmul.mubr.bf16.gmra.mrb[0].mxu0 %v1004
          %v1086 = vpop.f32.mrb[0].mxu0
          %v1087 = vadd.f32 0.0, %v1086
          %v1088 = vpop.f32.mrb[0].mxu0
          %v1089 = vpop.f32.mrb[0].mxu0
          %v1090 = vadd.f32 0.0, %v1089
          %v1091 = vpop.f32.mrb[0].mxu0
          %1092 = vmatprep.mubr.bf16.mxu0 0
          %1093 = vmatmul.mubr.bf16.gmra.mrb[0].mxu0 %v1007
          %v1094 = vpop.f32.mrb[0].mxu0
          %v1095 = vadd.f32 0.0, %v1094
          %v1096 = vpop.f32.mrb[0].mxu0
          %v1097 = vpop.f32.mrb[0].mxu0
          %v1098 = vadd.f32 0.0, %v1097
          %v1099 = vpop.f32.mrb[0].mxu0
          %1100 = vmatprep.mubr.bf16.mxu0 0
          %1101 = vmatmul.mubr.bf16.gmra.mrb[0].mxu0 %v1010
          %v1102 = vpop.f32.mrb[0].mxu0
          %v1103 = vadd.f32 0.0, %v1102
          %v1104 = vpop.f32.mrb[0].mxu0
          %v1105 = vpop.f32.mrb[0].mxu0
          %v1106 = vadd.f32 0.0, %v1105
          %v1107 = vpop.f32.mrb[0].mxu0
          %1108 = vdwg.mxu0
          %v1109 = vpack.c.bf16 %v1050, %v1047
          %v1110 = vpack.c.bf16 %v1058, %v1055
          %v1111 = vpack.c.bf16 %v1066, %v1063
          %v1112 = vpack.c.bf16 %v1074, %v1071
          %v1113 = vpack.c.bf16 %v1082, %v1079
          %v1114 = vpack.c.bf16 %v1090, %v1087
          %v1115 = vpack.c.bf16 %v1098, %v1095
          %v1116 = vpack.c.bf16 %v1106, %v1103
          %1117 = vst.msk [vmem:[#allocation4] sm:$0xff] %vm918, %v1109
          %1118 = vst.msk [vmem:[#allocation4 + $0x8] sm:$0xff] %vm918, %v1110
          %1119 = vst.msk [vmem:[#allocation4 + $0x10] sm:$0xff] %vm918, %v1111
          %1120 = vst.msk [vmem:[#allocation4 + $0x18] sm:$0xff] %vm918, %v1112
          %1121 = vst.msk [vmem:[#allocation4 + $0x20] sm:$0xff] %vm918, %v1113
          %1122 = vst.msk [vmem:[#allocation4 + $0x28] sm:$0xff] %vm918, %v1114
          %1123 = vst.msk [vmem:[#allocation4 + $0x30] sm:$0xff] %vm918, %v1115
          %1124 = vst.msk [vmem:[#allocation4 + $0x38] sm:$0xff] %vm918, %v1116
          %v1125 = vld [vmem:[%s13] sm:$0xf]
          %v1126 = vld [vmem:[%s13 + $0x4] sm:$0xf]
          %v1129 = vunpack.c.l.b16 %v1125
          %v1130 = vunpack.c.l.b16 %v1126
          %v1131 = vpack.c.b16 %v1130, %v1129
          %1133 = vmatprep.subr.bf16.mxu0 0
          %1134 = vmatpush1.bf16.msra.mxu0 %v1131
          %1135 = vmatprep.subr.bf16.mxu0 0
          %1136 = vmatpush1.bf16.msra.mxu0 0
          %1137 = vmatprep.subr.bf16.mxu0 0
          %1138 = vmatpush1.bf16.msra.mxu0 0
          %1139 = vmatprep.subr.bf16.mxu0 0
          %1140 = vmatpush1.bf16.msra.mxu0 0
          %1141 = vmatprep.subr.bf16.mxu0 0
          %1142 = vmatpush1.bf16.msra.mxu0 0
          %1143 = vmatprep.subr.bf16.mxu0 0
          %1144 = vmatpush1.bf16.msra.mxu0 0
          %1145 = vmatprep.subr.bf16.mxu0 0
          %1146 = vmatpush1.bf16.msra.mxu0 0
          %1147 = vmatprep.subr.bf16.mxu0 0
          %1148 = vmatpush1.bf16.msra.mxu0 0
          %1149 = vmatprep.subr.bf16.mxu0 0
          %1150 = vmatpush1.bf16.msra.mxu0 0
          %1151 = vmatprep.subr.bf16.mxu0 0
          %1152 = vmatpush1.bf16.msra.mxu0 0
          %1153 = vmatprep.subr.bf16.mxu0 0
          %1154 = vmatpush1.bf16.msra.mxu0 0
          %1155 = vmatprep.subr.bf16.mxu0 0
          %1156 = vmatpush1.bf16.msra.mxu0 0
          %1157 = vmatprep.subr.bf16.mxu0 0
          %1158 = vmatpush1.bf16.msra.mxu0 0
          %1159 = vmatprep.subr.bf16.mxu0 0
          %1160 = vmatpush1.bf16.msra.mxu0 0
          %1161 = vmatprep.subr.bf16.mxu0 0
          %1162 = vmatpush1.bf16.msra.mxu0 0
          %1163 = vmatprep.subr.bf16.mxu0 0
          %1164 = vmatpush1.bf16.msra.mxu0 0
          %1165 = vmatprep.mubr.bf16.mxu0 0
          %1166 = vmatmul.mubr.bf16.gmra.mrb[0].mxu0 %v989
          %v1167 = vpop.f32.mrb[0].mxu0
          %v1168 = vadd.f32 0.0, %v1167
          %v1169 = vpop.f32.mrb[0].mxu0
          %v1170 = vpop.f32.mrb[0].mxu0
          %v1171 = vadd.f32 0.0, %v1170
          %v1172 = vpop.f32.mrb[0].mxu0
          %1173 = vmatprep.mubr.bf16.mxu0 0
          %1174 = vmatmul.mubr.bf16.gmra.mrb[0].mxu0 %v992
          %v1175 = vpop.f32.mrb[0].mxu0
          %v1176 = vadd.f32 0.0, %v1175
          %v1177 = vpop.f32.mrb[0].mxu0
          %v1178 = vpop.f32.mrb[0].mxu0
          %v1179 = vadd.f32 0.0, %v1178
          %v1180 = vpop.f32.mrb[0].mxu0
          %1181 = vmatprep.mubr.bf16.mxu0 0
          %1182 = vmatmul.mubr.bf16.gmra.mrb[0].mxu0 %v995
          %v1183 = vpop.f32.mrb[0].mxu0
          %v1184 = vadd.f32 0.0, %v1183
          %v1185 = vpop.f32.mrb[0].mxu0
          %v1186 = vpop.f32.mrb[0].mxu0
          %v1187 = vadd.f32 0.0, %v1186
          %v1188 = vpop.f32.mrb[0].mxu0
          %1189 = vmatprep.mubr.bf16.mxu0 0
          %1190 = vmatmul.mubr.bf16.gmra.mrb[0].mxu0 %v998
          %v1191 = vpop.f32.mrb[0].mxu0
          %v1192 = vadd.f32 0.0, %v1191
          %v1193 = vpop.f32.mrb[0].mxu0
          %v1194 = vpop.f32.mrb[0].mxu0
          %v1195 = vadd.f32 0.0, %v1194
          %v1196 = vpop.f32.mrb[0].mxu0
          %1197 = vmatprep.mubr.bf16.mxu0 0
          %1198 = vmatmul.mubr.bf16.gmra.mrb[0].mxu0 %v1001
          %v1199 = vpop.f32.mrb[0].mxu0
          %v1200 = vadd.f32 0.0, %v1199
          %v1201 = vpop.f32.mrb[0].mxu0
          %v1202 = vpop.f32.mrb[0].mxu0
          %v1203 = vadd.f32 0.0, %v1202
          %v1204 = vpop.f32.mrb[0].mxu0
          %1205 = vmatprep.mubr.bf16.mxu0 0
          %1206 = vmatmul.mubr.bf16.gmra.mrb[0].mxu0 %v1004
          %v1207 = vpop.f32.mrb[0].mxu0
          %v1208 = vadd.f32 0.0, %v1207
          %v1209 = vpop.f32.mrb[0].mxu0
          %v1210 = vpop.f32.mrb[0].mxu0
          %v1211 = vadd.f32 0.0, %v1210
          %v1212 = vpop.f32.mrb[0].mxu0
          %1213 = vmatprep.mubr.bf16.mxu0 0
          %1214 = vmatmul.mubr.bf16.gmra.mrb[0].mxu0 %v1007
          %v1215 = vpop.f32.mrb[0].mxu0
          %v1216 = vadd.f32 0.0, %v1215
          %v1217 = vpop.f32.mrb[0].mxu0
          %v1218 = vpop.f32.mrb[0].mxu0
          %v1219 = vadd.f32 0.0, %v1218
          %v1220 = vpop.f32.mrb[0].mxu0
          %1221 = vmatprep.mubr.bf16.mxu0 0
          %1222 = vmatmul.mubr.bf16.gmra.mrb[0].mxu0 %v1010
          %v1223 = vpop.f32.mrb[0].mxu0
          %v1224 = vadd.f32 0.0, %v1223
          %v1225 = vpop.f32.mrb[0].mxu0
          %v1226 = vpop.f32.mrb[0].mxu0
          %v1227 = vadd.f32 0.0, %v1226
          %v1228 = vpop.f32.mrb[0].mxu0
          %1229 = vdwg.mxu0
          %v1230 = vpack.c.bf16 %v1171, %v1168
          %v1231 = vpack.c.bf16 %v1179, %v1176
          %v1232 = vpack.c.bf16 %v1187, %v1184
          %v1233 = vpack.c.bf16 %v1195, %v1192
          %v1234 = vpack.c.bf16 %v1203, %v1200
          %v1235 = vpack.c.bf16 %v1211, %v1208
          %v1236 = vpack.c.bf16 %v1219, %v1216
          %v1237 = vpack.c.bf16 %v1227, %v1224
          %1238 = vst.msk [vmem:[#allocation5] sm:$0xff] %vm918, %v1230
          %1239 = vst.msk [vmem:[#allocation5 + $0x8] sm:$0xff] %vm918, %v1231
          %1240 = vst.msk [vmem:[#allocation5 + $0x10] sm:$0xff] %vm918, %v1232
          %1241 = vst.msk [vmem:[#allocation5 + $0x18] sm:$0xff] %vm918, %v1233
          %1242 = vst.msk [vmem:[#allocation5 + $0x20] sm:$0xff] %vm918, %v1234
          %1243 = vst.msk [vmem:[#allocation5 + $0x28] sm:$0xff] %vm918, %v1235
          %1244 = vst.msk [vmem:[#allocation5 + $0x30] sm:$0xff] %vm918, %v1236
          %1245 = vst.msk [vmem:[#allocation5 + $0x38] sm:$0xff] %vm918, %v1237
          %s1246 = scalar_lea.vmem %s5, 16
          %v1247 = vld [vmem:[%s1246] sm:$0xf]
          %v1248 = vld [vmem:[%s1246 + $0x4] sm:$0xf]
          %v1249 = vld [vmem:[%s1246 + $0x8] sm:$0xf]
          %v1250 = vld [vmem:[%s1246 + $0xc] sm:$0xf]
          %v1255 = vunpack.c.l.b16 %v1247
          %v1256 = vunpack.c.l.b16 %v1248
          %v1257 = vunpack.c.l.b16 %v1249
          %v1258 = vunpack.c.l.b16 %v1250
          %v1259 = vpack.c.b16 %v1256, %v1255
          %v1260 = vpack.c.b16 %v1258, %v1257
          %1263 = vmatprep.subr.bf16.mxu0 0
          %1264 = vmatpush1.bf16.msra.mxu0 %v1259
          %1265 = vmatprep.subr.bf16.mxu0 0
          %1266 = vmatpush1.bf16.msra.mxu0 %v1260
          %1267 = vmatprep.subr.bf16.mxu0 0
          %1268 = vmatpush1.bf16.msra.mxu0 0
          %1269 = vmatprep.subr.bf16.mxu0 0
          %1270 = vmatpush1.bf16.msra.mxu0 0
          %1271 = vmatprep.subr.bf16.mxu0 0
          %1272 = vmatpush1.bf16.msra.mxu0 0
          %1273 = vmatprep.subr.bf16.mxu0 0
          %1274 = vmatpush1.bf16.msra.mxu0 0
          %1275 = vmatprep.subr.bf16.mxu0 0
          %1276 = vmatpush1.bf16.msra.mxu0 0
          %1277 = vmatprep.subr.bf16.mxu0 0
          %1278 = vmatpush1.bf16.msra.mxu0 0
          %1279 = vmatprep.subr.bf16.mxu0 0
          %1280 = vmatpush1.bf16.msra.mxu0 0
          %1281 = vmatprep.subr.bf16.mxu0 0
          %1282 = vmatpush1.bf16.msra.mxu0 0
          %1283 = vmatprep.subr.bf16.mxu0 0
          %1284 = vmatpush1.bf16.msra.mxu0 0
          %1285 = vmatprep.subr.bf16.mxu0 0
          %1286 = vmatpush1.bf16.msra.mxu0 0
          %1287 = vmatprep.subr.bf16.mxu0 0
          %1288 = vmatpush1.bf16.msra.mxu0 0
          %1289 = vmatprep.subr.bf16.mxu0 0
          %1290 = vmatpush1.bf16.msra.mxu0 0
          %1291 = vmatprep.subr.bf16.mxu0 0
          %1292 = vmatpush1.bf16.msra.mxu0 0
          %1293 = vmatprep.subr.bf16.mxu0 0
          %1294 = vmatpush1.bf16.msra.mxu0 0
          %1295 = vmatprep.mubr.bf16.mxu0 0
          %1296 = vmatmul.mubr.bf16.gmra.mrb[0].mxu0 %v874
          %v1297 = vpop.f32.mrb[0].mxu0
          %v1298 = vadd.f32 0.0, %v1297
          %v1299 = vpop.f32.mrb[0].mxu0
          %v1300 = vpop.f32.mrb[0].mxu0
          %v1301 = vadd.f32 0.0, %v1300
          %v1302 = vpop.f32.mrb[0].mxu0
          %1303 = vdwg.mxu0
          %v1304 = vpack.c.bf16 %v1301, %v1298
          %s1305 = scalar_lea.vmem [#allocation2], 8
          %1306 = vst.msk [vmem:[%s1305] sm:$0xff] %vm918, %v1304
          %s1307 = scalar_lea.vmem %s6, 16
          %v1308 = vld [vmem:[%s1307] sm:$0xf]
          %v1309 = vld [vmem:[%s1307 + $0x4] sm:$0xf]
          %v1310 = vld [vmem:[%s1307 + $0x8] sm:$0xf]
          %v1311 = vld [vmem:[%s1307 + $0xc] sm:$0xf]
          %v1316 = vunpack.c.l.b16 %v1308
          %v1317 = vunpack.c.l.b16 %v1309
          %v1318 = vunpack.c.l.b16 %v1310
          %v1319 = vunpack.c.l.b16 %v1311
          %v1320 = vpack.c.b16 %v1317, %v1316
          %v1321 = vpack.c.b16 %v1319, %v1318
          %1324 = vmatprep.subr.bf16.mxu0 0
          %1325 = vmatpush1.bf16.msra.mxu0 %v1320
          %1326 = vmatprep.subr.bf16.mxu0 0
          %1327 = vmatpush1.bf16.msra.mxu0 %v1321
          %1328 = vmatprep.subr.bf16.mxu0 0
          %1329 = vmatpush1.bf16.msra.mxu0 0
          %1330 = vmatprep.subr.bf16.mxu0 0
          %1331 = vmatpush1.bf16.msra.mxu0 0
          %1332 = vmatprep.subr.bf16.mxu0 0
          %1333 = vmatpush1.bf16.msra.mxu0 0
          %1334 = vmatprep.subr.bf16.mxu0 0
          %1335 = vmatpush1.bf16.msra.mxu0 0
          %1336 = vmatprep.subr.bf16.mxu0 0
          %1337 = vmatpush1.bf16.msra.mxu0 0
          %1338 = vmatprep.subr.bf16.mxu0 0
          %1339 = vmatpush1.bf16.msra.mxu0 0
          %1340 = vmatprep.subr.bf16.mxu0 0
          %1341 = vmatpush1.bf16.msra.mxu0 0
          %1342 = vmatprep.subr.bf16.mxu0 0
          %1343 = vmatpush1.bf16.msra.mxu0 0
          %1344 = vmatprep.subr.bf16.mxu0 0
          %1345 = vmatpush1.bf16.msra.mxu0 0
          %1346 = vmatprep.subr.bf16.mxu0 0
          %1347 = vmatpush1.bf16.msra.mxu0 0
          %1348 = vmatprep.subr.bf16.mxu0 0
          %1349 = vmatpush1.bf16.msra.mxu0 0
          %1350 = vmatprep.subr.bf16.mxu0 0
          %1351 = vmatpush1.bf16.msra.mxu0 0
          %1352 = vmatprep.subr.bf16.mxu0 0
          %1353 = vmatpush1.bf16.msra.mxu0 0
          %1354 = vmatprep.subr.bf16.mxu0 0
          %1355 = vmatpush1.bf16.msra.mxu0 0
          %1356 = vmatprep.mubr.bf16.mxu0 0
          %1357 = vmatmul.mubr.bf16.gmra.mrb[0].mxu0 %v874
          %v1358 = vpop.f32.mrb[0].mxu0
          %v1359 = vadd.f32 0.0, %v1358
          %v1360 = vpop.f32.mrb[0].mxu0
          %v1361 = vpop.f32.mrb[0].mxu0
          %v1362 = vadd.f32 0.0, %v1361
          %v1363 = vpop.f32.mrb[0].mxu0
          %1364 = vdwg.mxu0
          %v1365 = vpack.c.bf16 %v1362, %v1359
          %s1366 = scalar_lea.vmem [#allocation3], 8
          %1367 = vst.msk [vmem:[%s1366] sm:$0xff] %vm918, %v1365
          %s1368 = scalar_lea.vmem %s12, 8
          %v1369 = vld [vmem:[%s1368] sm:$0xf]
          %v1370 = vld [vmem:[%s1368 + $0x4] sm:$0xf]
          %v1373 = vunpack.c.l.b16 %v1369
          %v1374 = vunpack.c.l.b16 %v1370
          %v1375 = vpack.c.b16 %v1374, %v1373
          %1377 = vmatprep.subr.bf16.mxu0 0
          %1378 = vmatpush1.bf16.msra.mxu0 %v1375
          %1379 = vmatprep.subr.bf16.mxu0 0
          %1380 = vmatpush1.bf16.msra.mxu0 0
          %1381 = vmatprep.subr.bf16.mxu0 0
          %1382 = vmatpush1.bf16.msra.mxu0 0
          %1383 = vmatprep.subr.bf16.mxu0 0
          %1384 = vmatpush1.bf16.msra.mxu0 0
          %1385 = vmatprep.subr.bf16.mxu0 0
          %1386 = vmatpush1.bf16.msra.mxu0 0
          %1387 = vmatprep.subr.bf16.mxu0 0
          %1388 = vmatpush1.bf16.msra.mxu0 0
          %1389 = vmatprep.subr.bf16.mxu0 0
          %1390 = vmatpush1.bf16.msra.mxu0 0
          %1391 = vmatprep.subr.bf16.mxu0 0
          %1392 = vmatpush1.bf16.msra.mxu0 0
          %1393 = vmatprep.subr.bf16.mxu0 0
          %1394 = vmatpush1.bf16.msra.mxu0 0
          %1395 = vmatprep.subr.bf16.mxu0 0
          %1396 = vmatpush1.bf16.msra.mxu0 0
          %1397 = vmatprep.subr.bf16.mxu0 0
          %1398 = vmatpush1.bf16.msra.mxu0 0
          %1399 = vmatprep.subr.bf16.mxu0 0
          %1400 = vmatpush1.bf16.msra.mxu0 0
          %1401 = vmatprep.subr.bf16.mxu0 0
          %1402 = vmatpush1.bf16.msra.mxu0 0
          %1403 = vmatprep.subr.bf16.mxu0 0
          %1404 = vmatpush1.bf16.msra.mxu0 0
          %1405 = vmatprep.subr.bf16.mxu0 0
          %1406 = vmatpush1.bf16.msra.mxu0 0
          %1407 = vmatprep.subr.bf16.mxu0 0
          %1408 = vmatpush1.bf16.msra.mxu0 0
          %1409 = vmatprep.mubr.bf16.mxu0 0
          %1410 = vmatmul.mubr.bf16.gmra.mrb[0].mxu0 %v989
          %v1411 = vpop.f32.mrb[0].mxu0
          %v1412 = vadd.f32 0.0, %v1411
          %v1413 = vpop.f32.mrb[0].mxu0
          %v1414 = vpop.f32.mrb[0].mxu0
          %v1415 = vadd.f32 0.0, %v1414
          %v1416 = vpop.f32.mrb[0].mxu0
          %1417 = vmatprep.mubr.bf16.mxu0 0
          %1418 = vmatmul.mubr.bf16.gmra.mrb[0].mxu0 %v992
          %v1419 = vpop.f32.mrb[0].mxu0
          %v1420 = vadd.f32 0.0, %v1419
          %v1421 = vpop.f32.mrb[0].mxu0
          %v1422 = vpop.f32.mrb[0].mxu0
          %v1423 = vadd.f32 0.0, %v1422
          %v1424 = vpop.f32.mrb[0].mxu0
          %1425 = vmatprep.mubr.bf16.mxu0 0
          %1426 = vmatmul.mubr.bf16.gmra.mrb[0].mxu0 %v995
          %v1427 = vpop.f32.mrb[0].mxu0
          %v1428 = vadd.f32 0.0, %v1427
          %v1429 = vpop.f32.mrb[0].mxu0
          %v1430 = vpop.f32.mrb[0].mxu0
          %v1431 = vadd.f32 0.0, %v1430
          %v1432 = vpop.f32.mrb[0].mxu0
          %1433 = vmatprep.mubr.bf16.mxu0 0
          %1434 = vmatmul.mubr.bf16.gmra.mrb[0].mxu0 %v998
          %v1435 = vpop.f32.mrb[0].mxu0
          %v1436 = vadd.f32 0.0, %v1435
          %v1437 = vpop.f32.mrb[0].mxu0
          %v1438 = vpop.f32.mrb[0].mxu0
          %v1439 = vadd.f32 0.0, %v1438
          %v1440 = vpop.f32.mrb[0].mxu0
          %1441 = vmatprep.mubr.bf16.mxu0 0
          %1442 = vmatmul.mubr.bf16.gmra.mrb[0].mxu0 %v1001
          %v1443 = vpop.f32.mrb[0].mxu0
          %v1444 = vadd.f32 0.0, %v1443
          %v1445 = vpop.f32.mrb[0].mxu0
          %v1446 = vpop.f32.mrb[0].mxu0
          %v1447 = vadd.f32 0.0, %v1446
          %v1448 = vpop.f32.mrb[0].mxu0
          %1449 = vmatprep.mubr.bf16.mxu0 0
          %1450 = vmatmul.mubr.bf16.gmra.mrb[0].mxu0 %v1004
          %v1451 = vpop.f32.mrb[0].mxu0
          %v1452 = vadd.f32 0.0, %v1451
          %v1453 = vpop.f32.mrb[0].mxu0
          %v1454 = vpop.f32.mrb[0].mxu0
          %v1455 = vadd.f32 0.0, %v1454
          %v1456 = vpop.f32.mrb[0].mxu0
          %1457 = vmatprep.mubr.bf16.mxu0 0
          %1458 = vmatmul.mubr.bf16.gmra.mrb[0].mxu0 %v1007
          %v1459 = vpop.f32.mrb[0].mxu0
          %v1460 = vadd.f32 0.0, %v1459
          %v1461 = vpop.f32.mrb[0].mxu0
          %v1462 = vpop.f32.mrb[0].mxu0
          %v1463 = vadd.f32 0.0, %v1462
          %v1464 = vpop.f32.mrb[0].mxu0
          %1465 = vmatprep.mubr.bf16.mxu0 0
          %1466 = vmatmul.mubr.bf16.gmra.mrb[0].mxu0 %v1010
          %v1467 = vpop.f32.mrb[0].mxu0
          %v1468 = vadd.f32 0.0, %v1467
          %v1469 = vpop.f32.mrb[0].mxu0
          %v1470 = vpop.f32.mrb[0].mxu0
          %v1471 = vadd.f32 0.0, %v1470
          %v1472 = vpop.f32.mrb[0].mxu0
          %1473 = vdwg.mxu0
          %v1474 = vpack.c.bf16 %v1415, %v1412
          %v1475 = vpack.c.bf16 %v1423, %v1420
          %v1476 = vpack.c.bf16 %v1431, %v1428
          %v1477 = vpack.c.bf16 %v1439, %v1436
          %v1478 = vpack.c.bf16 %v1447, %v1444
          %v1479 = vpack.c.bf16 %v1455, %v1452
          %v1480 = vpack.c.bf16 %v1463, %v1460
          %v1481 = vpack.c.bf16 %v1471, %v1468
          %s1482 = scalar_lea.vmem [#allocation4], 64
          %1483 = vst.msk [vmem:[%s1482] sm:$0xff] %vm918, %v1474
          %1484 = vst.msk [vmem:[%s1482 + $0x8] sm:$0xff] %vm918, %v1475
          %1485 = vst.msk [vmem:[%s1482 + $0x10] sm:$0xff] %vm918, %v1476
          %1486 = vst.msk [vmem:[%s1482 + $0x18] sm:$0xff] %vm918, %v1477
          %1487 = vst.msk [vmem:[%s1482 + $0x20] sm:$0xff] %vm918, %v1478
          %1488 = vst.msk [vmem:[%s1482 + $0x28] sm:$0xff] %vm918, %v1479
          %1489 = vst.msk [vmem:[%s1482 + $0x30] sm:$0xff] %vm918, %v1480
          %1490 = vst.msk [vmem:[%s1482 + $0x38] sm:$0xff] %vm918, %v1481
          %s1491 = scalar_lea.vmem %s13, 8
          %v1492 = vld [vmem:[%s1491] sm:$0xf]
          %v1493 = vld [vmem:[%s1491 + $0x4] sm:$0xf]
          %v1496 = vunpack.c.l.b16 %v1492
          %v1497 = vunpack.c.l.b16 %v1493
          %v1498 = vpack.c.b16 %v1497, %v1496
          %1500 = vmatprep.subr.bf16.mxu0 0
          %1501 = vmatpush1.bf16.msra.mxu0 %v1498
          %1502 = vmatprep.subr.bf16.mxu0 0
          %1503 = vmatpush1.bf16.msra.mxu0 0
          %1504 = vmatprep.subr.bf16.mxu0 0
          %1505 = vmatpush1.bf16.msra.mxu0 0
          %1506 = vmatprep.subr.bf16.mxu0 0
          %1507 = vmatpush1.bf16.msra.mxu0 0
          %1508 = vmatprep.subr.bf16.mxu0 0
          %1509 = vmatpush1.bf16.msra.mxu0 0
          %1510 = vmatprep.subr.bf16.mxu0 0
          %1511 = vmatpush1.bf16.msra.mxu0 0
          %1512 = vmatprep.subr.bf16.mxu0 0
          %1513 = vmatpush1.bf16.msra.mxu0 0
          %1514 = vmatprep.subr.bf16.mxu0 0
          %1515 = vmatpush1.bf16.msra.mxu0 0
          %1516 = vmatprep.subr.bf16.mxu0 0
          %1517 = vmatpush1.bf16.msra.mxu0 0
          %1518 = vmatprep.subr.bf16.mxu0 0
          %1519 = vmatpush1.bf16.msra.mxu0 0
          %1520 = vmatprep.subr.bf16.mxu0 0
          %1521 = vmatpush1.bf16.msra.mxu0 0
          %1522 = vmatprep.subr.bf16.mxu0 0
          %1523 = vmatpush1.bf16.msra.mxu0 0
          %1524 = vmatprep.subr.bf16.mxu0 0
          %1525 = vmatpush1.bf16.msra.mxu0 0
          %1526 = vmatprep.subr.bf16.mxu0 0
          %1527 = vmatpush1.bf16.msra.mxu0 0
          %1528 = vmatprep.subr.bf16.mxu0 0
          %1529 = vmatpush1.bf16.msra.mxu0 0
          %1530 = vmatprep.subr.bf16.mxu0 0
          %1531 = vmatpush1.bf16.msra.mxu0 0
          %1532 = vmatprep.mubr.bf16.mxu0 0
          %1533 = vmatmul.mubr.bf16.gmra.mrb[0].mxu0 %v989
          %v1534 = vpop.f32.mrb[0].mxu0
          %v1535 = vadd.f32 0.0, %v1534
          %v1536 = vpop.f32.mrb[0].mxu0
          %v1537 = vpop.f32.mrb[0].mxu0
          %v1538 = vadd.f32 0.0, %v1537
          %v1539 = vpop.f32.mrb[0].mxu0
          %1540 = vmatprep.mubr.bf16.mxu0 0
          %1541 = vmatmul.mubr.bf16.gmra.mrb[0].mxu0 %v992
          %v1542 = vpop.f32.mrb[0].mxu0
          %v1543 = vadd.f32 0.0, %v1542
          %v1544 = vpop.f32.mrb[0].mxu0
          %v1545 = vpop.f32.mrb[0].mxu0
          %v1546 = vadd.f32 0.0, %v1545
          %v1547 = vpop.f32.mrb[0].mxu0
          %1548 = vmatprep.mubr.bf16.mxu0 0
          %1549 = vmatmul.mubr.bf16.gmra.mrb[0].mxu0 %v995
          %v1550 = vpop.f32.mrb[0].mxu0
          %v1551 = vadd.f32 0.0, %v1550
          %v1552 = vpop.f32.mrb[0].mxu0
          %v1553 = vpop.f32.mrb[0].mxu0
          %v1554 = vadd.f32 0.0, %v1553
          %v1555 = vpop.f32.mrb[0].mxu0
          %1556 = vmatprep.mubr.bf16.mxu0 0
          %1557 = vmatmul.mubr.bf16.gmra.mrb[0].mxu0 %v998
          %v1558 = vpop.f32.mrb[0].mxu0
          %v1559 = vadd.f32 0.0, %v1558
          %v1560 = vpop.f32.mrb[0].mxu0
          %v1561 = vpop.f32.mrb[0].mxu0
          %v1562 = vadd.f32 0.0, %v1561
          %v1563 = vpop.f32.mrb[0].mxu0
          %1564 = vmatprep.mubr.bf16.mxu0 0
          %1565 = vmatmul.mubr.bf16.gmra.mrb[0].mxu0 %v1001
          %v1566 = vpop.f32.mrb[0].mxu0
          %v1567 = vadd.f32 0.0, %v1566
          %v1568 = vpop.f32.mrb[0].mxu0
          %v1569 = vpop.f32.mrb[0].mxu0
          %v1570 = vadd.f32 0.0, %v1569
          %v1571 = vpop.f32.mrb[0].mxu0
          %1572 = vmatprep.mubr.bf16.mxu0 0
          %1573 = vmatmul.mubr.bf16.gmra.mrb[0].mxu0 %v1004
          %v1574 = vpop.f32.mrb[0].mxu0
          %v1575 = vadd.f32 0.0, %v1574
          %v1576 = vpop.f32.mrb[0].mxu0
          %v1577 = vpop.f32.mrb[0].mxu0
          %v1578 = vadd.f32 0.0, %v1577
          %v1579 = vpop.f32.mrb[0].mxu0
          %1580 = vmatprep.mubr.bf16.mxu0 0
          %1581 = vmatmul.mubr.bf16.gmra.mrb[0].mxu0 %v1007
          %v1582 = vpop.f32.mrb[0].mxu0
          %v1583 = vadd.f32 0.0, %v1582
          %v1584 = vpop.f32.mrb[0].mxu0
          %v1585 = vpop.f32.mrb[0].mxu0
          %v1586 = vadd.f32 0.0, %v1585
          %v1587 = vpop.f32.mrb[0].mxu0
          %1588 = vmatprep.mubr.bf16.mxu0 0
          %1589 = vmatmul.mubr.bf16.gmra.mrb[0].mxu0 %v1010
          %v1590 = vpop.f32.mrb[0].mxu0
          %v1591 = vadd.f32 0.0, %v1590
          %v1592 = vpop.f32.mrb[0].mxu0
          %v1593 = vpop.f32.mrb[0].mxu0
          %v1594 = vadd.f32 0.0, %v1593
          %v1595 = vpop.f32.mrb[0].mxu0
          %1596 = vdwg.mxu0
          %v1597 = vpack.c.bf16 %v1538, %v1535
          %v1598 = vpack.c.bf16 %v1546, %v1543
          %v1599 = vpack.c.bf16 %v1554, %v1551
          %v1600 = vpack.c.bf16 %v1562, %v1559
          %v1601 = vpack.c.bf16 %v1570, %v1567
          %v1602 = vpack.c.bf16 %v1578, %v1575
          %v1603 = vpack.c.bf16 %v1586, %v1583
          %v1604 = vpack.c.bf16 %v1594, %v1591
          %s1605 = scalar_lea.vmem [#allocation5], 64
          %1606 = vst.msk [vmem:[%s1605] sm:$0xff] %vm918, %v1597
          %1607 = vst.msk [vmem:[%s1605 + $0x8] sm:$0xff] %vm918, %v1598
          %1608 = vst.msk [vmem:[%s1605 + $0x10] sm:$0xff] %vm918, %v1599
          %1609 = vst.msk [vmem:[%s1605 + $0x18] sm:$0xff] %vm918, %v1600
          %1610 = vst.msk [vmem:[%s1605 + $0x20] sm:$0xff] %vm918, %v1601
          %1611 = vst.msk [vmem:[%s1605 + $0x28] sm:$0xff] %vm918, %v1602
          %1612 = vst.msk [vmem:[%s1605 + $0x30] sm:$0xff] %vm918, %v1603
          %1613 = vst.msk [vmem:[%s1605 + $0x38] sm:$0xff] %vm918, %v1604
          %s1614 = scalar_lea.vmem %s5, 32
          %v1615 = vld [vmem:[%s1614] sm:$0xf]
          %v1616 = vld [vmem:[%s1614 + $0x4] sm:$0xf]
          %v1617 = vld [vmem:[%s1614 + $0x8] sm:$0xf]
          %v1618 = vld [vmem:[%s1614 + $0xc] sm:$0xf]
          %v1623 = vunpack.c.l.b16 %v1615
          %v1624 = vunpack.c.l.b16 %v1616
          %v1625 = vunpack.c.l.b16 %v1617
          %v1626 = vunpack.c.l.b16 %v1618
          %v1627 = vpack.c.b16 %v1624, %v1623
          %v1628 = vpack.c.b16 %v1626, %v1625
          %1631 = vmatprep.subr.bf16.mxu0 0
          %1632 = vmatpush1.bf16.msra.mxu0 %v1627
          %1633 = vmatprep.subr.bf16.mxu0 0
          %1634 = vmatpush1.bf16.msra.mxu0 %v1628
          %1635 = vmatprep.subr.bf16.mxu0 0
          %1636 = vmatpush1.bf16.msra.mxu0 0
          %1637 = vmatprep.subr.bf16.mxu0 0
          %1638 = vmatpush1.bf16.msra.mxu0 0
          %1639 = vmatprep.subr.bf16.mxu0 0
          %1640 = vmatpush1.bf16.msra.mxu0 0
          %1641 = vmatprep.subr.bf16.mxu0 0
          %1642 = vmatpush1.bf16.msra.mxu0 0
          %1643 = vmatprep.subr.bf16.mxu0 0
          %1644 = vmatpush1.bf16.msra.mxu0 0
          %1645 = vmatprep.subr.bf16.mxu0 0
          %1646 = vmatpush1.bf16.msra.mxu0 0
          %1647 = vmatprep.subr.bf16.mxu0 0
          %1648 = vmatpush1.bf16.msra.mxu0 0
          %1649 = vmatprep.subr.bf16.mxu0 0
          %1650 = vmatpush1.bf16.msra.mxu0 0
          %1651 = vmatprep.subr.bf16.mxu0 0
          %1652 = vmatpush1.bf16.msra.mxu0 0
          %1653 = vmatprep.subr.bf16.mxu0 0
          %1654 = vmatpush1.bf16.msra.mxu0 0
          %1655 = vmatprep.subr.bf16.mxu0 0
          %1656 = vmatpush1.bf16.msra.mxu0 0
          %1657 = vmatprep.subr.bf16.mxu0 0
          %1658 = vmatpush1.bf16.msra.mxu0 0
          %1659 = vmatprep.subr.bf16.mxu0 0
          %1660 = vmatpush1.bf16.msra.mxu0 0
          %1661 = vmatprep.subr.bf16.mxu0 0
          %1662 = vmatpush1.bf16.msra.mxu0 0
          %1663 = vmatprep.mubr.bf16.mxu0 0
          %1664 = vmatmul.mubr.bf16.gmra.mrb[0].mxu0 %v874
          %v1665 = vpop.f32.mrb[0].mxu0
          %v1666 = vadd.f32 0.0, %v1665
          %v1667 = vpop.f32.mrb[0].mxu0
          %v1668 = vpop.f32.mrb[0].mxu0
          %v1669 = vadd.f32 0.0, %v1668
          %v1670 = vpop.f32.mrb[0].mxu0
          %1671 = vdwg.mxu0
          %v1672 = vpack.c.bf16 %v1669, %v1666
          %s1673 = scalar_lea.vmem [#allocation2], 16
          %1674 = vst.msk [vmem:[%s1673] sm:$0xff] %vm918, %v1672
          %s1675 = scalar_lea.vmem %s6, 32
          %v1676 = vld [vmem:[%s1675] sm:$0xf]
          %v1677 = vld [vmem:[%s1675 + $0x4] sm:$0xf]
          %v1678 = vld [vmem:[%s1675 + $0x8] sm:$0xf]
          %v1679 = vld [vmem:[%s1675 + $0xc] sm:$0xf]
          %v1684 = vunpack.c.l.b16 %v1676
          %v1685 = vunpack.c.l.b16 %v1677
          %v1686 = vunpack.c.l.b16 %v1678
          %v1687 = vunpack.c.l.b16 %v1679
          %v1688 = vpack.c.b16 %v1685, %v1684
          %v1689 = vpack.c.b16 %v1687, %v1686
          %1692 = vmatprep.subr.bf16.mxu0 0
          %1693 = vmatpush1.bf16.msra.mxu0 %v1688
          %1694 = vmatprep.subr.bf16.mxu0 0
          %1695 = vmatpush1.bf16.msra.mxu0 %v1689
          %1696 = vmatprep.subr.bf16.mxu0 0
          %1697 = vmatpush1.bf16.msra.mxu0 0
          %1698 = vmatprep.subr.bf16.mxu0 0
          %1699 = vmatpush1.bf16.msra.mxu0 0
          %1700 = vmatprep.subr.bf16.mxu0 0
          %1701 = vmatpush1.bf16.msra.mxu0 0
          %1702 = vmatprep.subr.bf16.mxu0 0
          %1703 = vmatpush1.bf16.msra.mxu0 0
          %1704 = vmatprep.subr.bf16.mxu0 0
          %1705 = vmatpush1.bf16.msra.mxu0 0
          %1706 = vmatprep.subr.bf16.mxu0 0
          %1707 = vmatpush1.bf16.msra.mxu0 0
          %1708 = vmatprep.subr.bf16.mxu0 0
          %1709 = vmatpush1.bf16.msra.mxu0 0
          %1710 = vmatprep.subr.bf16.mxu0 0
          %1711 = vmatpush1.bf16.msra.mxu0 0
          %1712 = vmatprep.subr.bf16.mxu0 0
          %1713 = vmatpush1.bf16.msra.mxu0 0
          %1714 = vmatprep.subr.bf16.mxu0 0
          %1715 = vmatpush1.bf16.msra.mxu0 0
          %1716 = vmatprep.subr.bf16.mxu0 0
          %1717 = vmatpush1.bf16.msra.mxu0 0
          %1718 = vmatprep.subr.bf16.mxu0 0
          %1719 = vmatpush1.bf16.msra.mxu0 0
          %1720 = vmatprep.subr.bf16.mxu0 0
          %1721 = vmatpush1.bf16.msra.mxu0 0
          %1722 = vmatprep.subr.bf16.mxu0 0
          %1723 = vmatpush1.bf16.msra.mxu0 0
          %1724 = vmatprep.mubr.bf16.mxu0 0
          %1725 = vmatmul.mubr.bf16.gmra.mrb[0].mxu0 %v874
          %v1726 = vpop.f32.mrb[0].mxu0
          %v1727 = vadd.f32 0.0, %v1726
          %v1728 = vpop.f32.mrb[0].mxu0
          %v1729 = vpop.f32.mrb[0].mxu0
          %v1730 = vadd.f32 0.0, %v1729
          %v1731 = vpop.f32.mrb[0].mxu0
          %1732 = vdwg.mxu0
          %v1733 = vpack.c.bf16 %v1730, %v1727
          %s1734 = scalar_lea.vmem [#allocation3], 16
          %1735 = vst.msk [vmem:[%s1734] sm:$0xff] %vm918, %v1733
          %s1736 = scalar_lea.vmem %s12, 16
          %v1737 = vld [vmem:[%s1736] sm:$0xf]
          %v1738 = vld [vmem:[%s1736 + $0x4] sm:$0xf]
          %v1741 = vunpack.c.l.b16 %v1737
          %v1742 = vunpack.c.l.b16 %v1738
          %v1743 = vpack.c.b16 %v1742, %v1741
          %1745 = vmatprep.subr.bf16.mxu0 0
          %1746 = vmatpush1.bf16.msra.mxu0 %v1743
          %1747 = vmatprep.subr.bf16.mxu0 0
          %1748 = vmatpush1.bf16.msra.mxu0 0
          %1749 = vmatprep.subr.bf16.mxu0 0
          %1750 = vmatpush1.bf16.msra.mxu0 0
          %1751 = vmatprep.subr.bf16.mxu0 0
          %1752 = vmatpush1.bf16.msra.mxu0 0
          %1753 = vmatprep.subr.bf16.mxu0 0
          %1754 = vmatpush1.bf16.msra.mxu0 0
          %1755 = vmatprep.subr.bf16.mxu0 0
          %1756 = vmatpush1.bf16.msra.mxu0 0
          %1757 = vmatprep.subr.bf16.mxu0 0
          %1758 = vmatpush1.bf16.msra.mxu0 0
          %1759 = vmatprep.subr.bf16.mxu0 0
          %1760 = vmatpush1.bf16.msra.mxu0 0
          %1761 = vmatprep.subr.bf16.mxu0 0
          %1762 = vmatpush1.bf16.msra.mxu0 0
          %1763 = vmatprep.subr.bf16.mxu0 0
          %1764 = vmatpush1.bf16.msra.mxu0 0
          %1765 = vmatprep.subr.bf16.mxu0 0
          %1766 = vmatpush1.bf16.msra.mxu0 0
          %1767 = vmatprep.subr.bf16.mxu0 0
          %1768 = vmatpush1.bf16.msra.mxu0 0
          %1769 = vmatprep.subr.bf16.mxu0 0
          %1770 = vmatpush1.bf16.msra.mxu0 0
          %1771 = vmatprep.subr.bf16.mxu0 0
          %1772 = vmatpush1.bf16.msra.mxu0 0
          %1773 = vmatprep.subr.bf16.mxu0 0
          %1774 = vmatpush1.bf16.msra.mxu0 0
          %1775 = vmatprep.subr.bf16.mxu0 0
          %1776 = vmatpush1.bf16.msra.mxu0 0
          %1777 = vmatprep.mubr.bf16.mxu0 0
          %1778 = vmatmul.mubr.bf16.gmra.mrb[0].mxu0 %v989
          %v1779 = vpop.f32.mrb[0].mxu0
          %v1780 = vadd.f32 0.0, %v1779
          %v1781 = vpop.f32.mrb[0].mxu0
          %v1782 = vpop.f32.mrb[0].mxu0
          %v1783 = vadd.f32 0.0, %v1782
          %v1784 = vpop.f32.mrb[0].mxu0
          %1785 = vmatprep.mubr.bf16.mxu0 0
          %1786 = vmatmul.mubr.bf16.gmra.mrb[0].mxu0 %v992
          %v1787 = vpop.f32.mrb[0].mxu0
          %v1788 = vadd.f32 0.0, %v1787
          %v1789 = vpop.f32.mrb[0].mxu0
          %v1790 = vpop.f32.mrb[0].mxu0
          %v1791 = vadd.f32 0.0, %v1790
          %v1792 = vpop.f32.mrb[0].mxu0
          %1793 = vmatprep.mubr.bf16.mxu0 0
          %1794 = vmatmul.mubr.bf16.gmra.mrb[0].mxu0 %v995
          %v1795 = vpop.f32.mrb[0].mxu0
          %v1796 = vadd.f32 0.0, %v1795
          %v1797 = vpop.f32.mrb[0].mxu0
          %v1798 = vpop.f32.mrb[0].mxu0
          %v1799 = vadd.f32 0.0, %v1798
          %v1800 = vpop.f32.mrb[0].mxu0
          %1801 = vmatprep.mubr.bf16.mxu0 0
          %1802 = vmatmul.mubr.bf16.gmra.mrb[0].mxu0 %v998
          %v1803 = vpop.f32.mrb[0].mxu0
          %v1804 = vadd.f32 0.0, %v1803
          %v1805 = vpop.f32.mrb[0].mxu0
          %v1806 = vpop.f32.mrb[0].mxu0
          %v1807 = vadd.f32 0.0, %v1806
          %v1808 = vpop.f32.mrb[0].mxu0
          %1809 = vmatprep.mubr.bf16.mxu0 0
          %1810 = vmatmul.mubr.bf16.gmra.mrb[0].mxu0 %v1001
          %v1811 = vpop.f32.mrb[0].mxu0
          %v1812 = vadd.f32 0.0, %v1811
          %v1813 = vpop.f32.mrb[0].mxu0
          %v1814 = vpop.f32.mrb[0].mxu0
          %v1815 = vadd.f32 0.0, %v1814
          %v1816 = vpop.f32.mrb[0].mxu0
          %1817 = vmatprep.mubr.bf16.mxu0 0
          %1818 = vmatmul.mubr.bf16.gmra.mrb[0].mxu0 %v1004
          %v1819 = vpop.f32.mrb[0].mxu0
          %v1820 = vadd.f32 0.0, %v1819
          %v1821 = vpop.f32.mrb[0].mxu0
          %v1822 = vpop.f32.mrb[0].mxu0
          %v1823 = vadd.f32 0.0, %v1822
          %v1824 = vpop.f32.mrb[0].mxu0
          %1825 = vmatprep.mubr.bf16.mxu0 0
          %1826 = vmatmul.mubr.bf16.gmra.mrb[0].mxu0 %v1007
          %v1827 = vpop.f32.mrb[0].mxu0
          %v1828 = vadd.f32 0.0, %v1827
          %v1829 = vpop.f32.mrb[0].mxu0
          %v1830 = vpop.f32.mrb[0].mxu0
          %v1831 = vadd.f32 0.0, %v1830
          %v1832 = vpop.f32.mrb[0].mxu0
          %1833 = vmatprep.mubr.bf16.mxu0 0
          %1834 = vmatmul.mubr.bf16.gmra.mrb[0].mxu0 %v1010
          %v1835 = vpop.f32.mrb[0].mxu0
          %v1836 = vadd.f32 0.0, %v1835
          %v1837 = vpop.f32.mrb[0].mxu0
          %v1838 = vpop.f32.mrb[0].mxu0
          %v1839 = vadd.f32 0.0, %v1838
          %v1840 = vpop.f32.mrb[0].mxu0
          %1841 = vdwg.mxu0
          %v1842 = vpack.c.bf16 %v1783, %v1780
          %v1843 = vpack.c.bf16 %v1791, %v1788
          %v1844 = vpack.c.bf16 %v1799, %v1796
          %v1845 = vpack.c.bf16 %v1807, %v1804
          %v1846 = vpack.c.bf16 %v1815, %v1812
          %v1847 = vpack.c.bf16 %v1823, %v1820
          %v1848 = vpack.c.bf16 %v1831, %v1828
          %v1849 = vpack.c.bf16 %v1839, %v1836
          %s1850 = scalar_lea.vmem [#allocation4], 128
          %1851 = vst.msk [vmem:[%s1850] sm:$0xff] %vm918, %v1842
          %1852 = vst.msk [vmem:[%s1850 + $0x8] sm:$0xff] %vm918, %v1843
          %1853 = vst.msk [vmem:[%s1850 + $0x10] sm:$0xff] %vm918, %v1844
          %1854 = vst.msk [vmem:[%s1850 + $0x18] sm:$0xff] %vm918, %v1845
          %1855 = vst.msk [vmem:[%s1850 + $0x20] sm:$0xff] %vm918, %v1846
          %1856 = vst.msk [vmem:[%s1850 + $0x28] sm:$0xff] %vm918, %v1847
          %1857 = vst.msk [vmem:[%s1850 + $0x30] sm:$0xff] %vm918, %v1848
          %1858 = vst.msk [vmem:[%s1850 + $0x38] sm:$0xff] %vm918, %v1849
          %s1859 = scalar_lea.vmem %s13, 16
          %v1860 = vld [vmem:[%s1859] sm:$0xf]
          %v1861 = vld [vmem:[%s1859 + $0x4] sm:$0xf]
          %v1864 = vunpack.c.l.b16 %v1860
          %v1865 = vunpack.c.l.b16 %v1861
          %v1866 = vpack.c.b16 %v1865, %v1864
          %1868 = vmatprep.subr.bf16.mxu0 0
          %1869 = vmatpush1.bf16.msra.mxu0 %v1866
          %1870 = vmatprep.subr.bf16.mxu0 0
          %1871 = vmatpush1.bf16.msra.mxu0 0
          %1872 = vmatprep.subr.bf16.mxu0 0
          %1873 = vmatpush1.bf16.msra.mxu0 0
          %1874 = vmatprep.subr.bf16.mxu0 0
          %1875 = vmatpush1.bf16.msra.mxu0 0
          %1876 = vmatprep.subr.bf16.mxu0 0
          %1877 = vmatpush1.bf16.msra.mxu0 0
          %1878 = vmatprep.subr.bf16.mxu0 0
          %1879 = vmatpush1.bf16.msra.mxu0 0
          %1880 = vmatprep.subr.bf16.mxu0 0
          %1881 = vmatpush1.bf16.msra.mxu0 0
          %1882 = vmatprep.subr.bf16.mxu0 0
          %1883 = vmatpush1.bf16.msra.mxu0 0
          %1884 = vmatprep.subr.bf16.mxu0 0
          %1885 = vmatpush1.bf16.msra.mxu0 0
          %1886 = vmatprep.subr.bf16.mxu0 0
          %1887 = vmatpush1.bf16.msra.mxu0 0
          %1888 = vmatprep.subr.bf16.mxu0 0
          %1889 = vmatpush1.bf16.msra.mxu0 0
          %1890 = vmatprep.subr.bf16.mxu0 0
          %1891 = vmatpush1.bf16.msra.mxu0 0
          %1892 = vmatprep.subr.bf16.mxu0 0
          %1893 = vmatpush1.bf16.msra.mxu0 0
          %1894 = vmatprep.subr.bf16.mxu0 0
          %1895 = vmatpush1.bf16.msra.mxu0 0
          %1896 = vmatprep.subr.bf16.mxu0 0
          %1897 = vmatpush1.bf16.msra.mxu0 0
          %1898 = vmatprep.subr.bf16.mxu0 0
          %1899 = vmatpush1.bf16.msra.mxu0 0
          %1900 = vmatprep.mubr.bf16.mxu0 0
          %1901 = vmatmul.mubr.bf16.gmra.mrb[0].mxu0 %v989
          %v1902 = vpop.f32.mrb[0].mxu0
          %v1903 = vadd.f32 0.0, %v1902
          %v1904 = vpop.f32.mrb[0].mxu0
          %v1905 = vpop.f32.mrb[0].mxu0
          %v1906 = vadd.f32 0.0, %v1905
          %v1907 = vpop.f32.mrb[0].mxu0
          %1908 = vmatprep.mubr.bf16.mxu0 0
          %1909 = vmatmul.mubr.bf16.gmra.mrb[0].mxu0 %v992
          %v1910 = vpop.f32.mrb[0].mxu0
          %v1911 = vadd.f32 0.0, %v1910
          %v1912 = vpop.f32.mrb[0].mxu0
          %v1913 = vpop.f32.mrb[0].mxu0
          %v1914 = vadd.f32 0.0, %v1913
          %v1915 = vpop.f32.mrb[0].mxu0
          %1916 = vmatprep.mubr.bf16.mxu0 0
          %1917 = vmatmul.mubr.bf16.gmra.mrb[0].mxu0 %v995
          %v1918 = vpop.f32.mrb[0].mxu0
          %v1919 = vadd.f32 0.0, %v1918
          %v1920 = vpop.f32.mrb[0].mxu0
          %v1921 = vpop.f32.mrb[0].mxu0
          %v1922 = vadd.f32 0.0, %v1921
          %v1923 = vpop.f32.mrb[0].mxu0
          %1924 = vmatprep.mubr.bf16.mxu0 0
          %1925 = vmatmul.mubr.bf16.gmra.mrb[0].mxu0 %v998
          %v1926 = vpop.f32.mrb[0].mxu0
          %v1927 = vadd.f32 0.0, %v1926
          %v1928 = vpop.f32.mrb[0].mxu0
          %v1929 = vpop.f32.mrb[0].mxu0
          %v1930 = vadd.f32 0.0, %v1929
          %v1931 = vpop.f32.mrb[0].mxu0
          %1932 = vmatprep.mubr.bf16.mxu0 0
          %1933 = vmatmul.mubr.bf16.gmra.mrb[0].mxu0 %v1001
          %v1934 = vpop.f32.mrb[0].mxu0
          %v1935 = vadd.f32 0.0, %v1934
          %v1936 = vpop.f32.mrb[0].mxu0
          %v1937 = vpop.f32.mrb[0].mxu0
          %v1938 = vadd.f32 0.0, %v1937
          %v1939 = vpop.f32.mrb[0].mxu0
          %1940 = vmatprep.mubr.bf16.mxu0 0
          %1941 = vmatmul.mubr.bf16.gmra.mrb[0].mxu0 %v1004
          %v1942 = vpop.f32.mrb[0].mxu0
          %v1943 = vadd.f32 0.0, %v1942
          %v1944 = vpop.f32.mrb[0].mxu0
          %v1945 = vpop.f32.mrb[0].mxu0
          %v1946 = vadd.f32 0.0, %v1945
          %v1947 = vpop.f32.mrb[0].mxu0
          %1948 = vmatprep.mubr.bf16.mxu0 0
          %1949 = vmatmul.mubr.bf16.gmra.mrb[0].mxu0 %v1007
          %v1950 = vpop.f32.mrb[0].mxu0
          %v1951 = vadd.f32 0.0, %v1950
          %v1952 = vpop.f32.mrb[0].mxu0
          %v1953 = vpop.f32.mrb[0].mxu0
          %v1954 = vadd.f32 0.0, %v1953
          %v1955 = vpop.f32.mrb[0].mxu0
          %1956 = vmatprep.mubr.bf16.mxu0 0
          %1957 = vmatmul.mubr.bf16.gmra.mrb[0].mxu0 %v1010
          %v1958 = vpop.f32.mrb[0].mxu0
          %v1959 = vadd.f32 0.0, %v1958
          %v1960 = vpop.f32.mrb[0].mxu0
          %v1961 = vpop.f32.mrb[0].mxu0
          %v1962 = vadd.f32 0.0, %v1961
          %v1963 = vpop.f32.mrb[0].mxu0
          %1964 = vdwg.mxu0
          %v1965 = vpack.c.bf16 %v1906, %v1903
          %v1966 = vpack.c.bf16 %v1914, %v1911
          %v1967 = vpack.c.bf16 %v1922, %v1919
          %v1968 = vpack.c.bf16 %v1930, %v1927
          %v1969 = vpack.c.bf16 %v1938, %v1935
          %v1970 = vpack.c.bf16 %v1946, %v1943
          %v1971 = vpack.c.bf16 %v1954, %v1951
          %v1972 = vpack.c.bf16 %v1962, %v1959
          %s1973 = scalar_lea.vmem [#allocation5], 128
          %1974 = vst.msk [vmem:[%s1973] sm:$0xff] %vm918, %v1965
          %1975 = vst.msk [vmem:[%s1973 + $0x8] sm:$0xff] %vm918, %v1966
          %1976 = vst.msk [vmem:[%s1973 + $0x10] sm:$0xff] %vm918, %v1967
          %1977 = vst.msk [vmem:[%s1973 + $0x18] sm:$0xff] %vm918, %v1968
          %1978 = vst.msk [vmem:[%s1973 + $0x20] sm:$0xff] %vm918, %v1969
          %1979 = vst.msk [vmem:[%s1973 + $0x28] sm:$0xff] %vm918, %v1970
          %1980 = vst.msk [vmem:[%s1973 + $0x30] sm:$0xff] %vm918, %v1971
          %1981 = vst.msk [vmem:[%s1973 + $0x38] sm:$0xff] %vm918, %v1972
          %s1982 = scalar_lea.vmem %s5, 48
          %v1983 = vld [vmem:[%s1982] sm:$0xf]
          %v1984 = vld [vmem:[%s1982 + $0x4] sm:$0xf]
          %v1985 = vld [vmem:[%s1982 + $0x8] sm:$0xf]
          %v1986 = vld [vmem:[%s1982 + $0xc] sm:$0xf]
          %v1991 = vunpack.c.l.b16 %v1983
          %v1992 = vunpack.c.l.b16 %v1984
          %v1993 = vunpack.c.l.b16 %v1985
          %v1994 = vunpack.c.l.b16 %v1986
          %v1995 = vpack.c.b16 %v1992, %v1991
          %v1996 = vpack.c.b16 %v1994, %v1993
          %1999 = vmatprep.subr.bf16.mxu0 0
          %2000 = vmatpush1.bf16.msra.mxu0 %v1995
          %2001 = vmatprep.subr.bf16.mxu0 0
          %2002 = vmatpush1.bf16.msra.mxu0 %v1996
          %2003 = vmatprep.subr.bf16.mxu0 0
          %2004 = vmatpush1.bf16.msra.mxu0 0
          %2005 = vmatprep.subr.bf16.mxu0 0
          %2006 = vmatpush1.bf16.msra.mxu0 0
          %2007 = vmatprep.subr.bf16.mxu0 0
          %2008 = vmatpush1.bf16.msra.mxu0 0
          %2009 = vmatprep.subr.bf16.mxu0 0
          %2010 = vmatpush1.bf16.msra.mxu0 0
          %2011 = vmatprep.subr.bf16.mxu0 0
          %2012 = vmatpush1.bf16.msra.mxu0 0
          %2013 = vmatprep.subr.bf16.mxu0 0
          %2014 = vmatpush1.bf16.msra.mxu0 0
          %2015 = vmatprep.subr.bf16.mxu0 0
          %2016 = vmatpush1.bf16.msra.mxu0 0
          %2017 = vmatprep.subr.bf16.mxu0 0
          %2018 = vmatpush1.bf16.msra.mxu0 0
          %2019 = vmatprep.subr.bf16.mxu0 0
          %2020 = vmatpush1.bf16.msra.mxu0 0
          %2021 = vmatprep.subr.bf16.mxu0 0
          %2022 = vmatpush1.bf16.msra.mxu0 0
          %2023 = vmatprep.subr.bf16.mxu0 0
          %2024 = vmatpush1.bf16.msra.mxu0 0
          %2025 = vmatprep.subr.bf16.mxu0 0
          %2026 = vmatpush1.bf16.msra.mxu0 0
          %2027 = vmatprep.subr.bf16.mxu0 0
          %2028 = vmatpush1.bf16.msra.mxu0 0
          %2029 = vmatprep.subr.bf16.mxu0 0
          %2030 = vmatpush1.bf16.msra.mxu0 0
          %2031 = vmatprep.mubr.bf16.mxu0 0
          %2032 = vmatmul.mubr.bf16.gmra.mrb[0].mxu0 %v874
          %v2033 = vpop.f32.mrb[0].mxu0
          %v2034 = vadd.f32 0.0, %v2033
          %v2035 = vpop.f32.mrb[0].mxu0
          %v2036 = vpop.f32.mrb[0].mxu0
          %v2037 = vadd.f32 0.0, %v2036
          %v2038 = vpop.f32.mrb[0].mxu0
          %2039 = vdwg.mxu0
          %v2040 = vpack.c.bf16 %v2037, %v2034
          %s2041 = scalar_lea.vmem [#allocation2], 24
          %2042 = vst.msk [vmem:[%s2041] sm:$0xff] %vm918, %v2040
          %s2043 = scalar_lea.vmem %s6, 48
          %v2044 = vld [vmem:[%s2043] sm:$0xf]
          %v2045 = vld [vmem:[%s2043 + $0x4] sm:$0xf]
          %v2046 = vld [vmem:[%s2043 + $0x8] sm:$0xf]
          %v2047 = vld [vmem:[%s2043 + $0xc] sm:$0xf]
          %v2052 = vunpack.c.l.b16 %v2044
          %v2053 = vunpack.c.l.b16 %v2045
          %v2054 = vunpack.c.l.b16 %v2046
          %v2055 = vunpack.c.l.b16 %v2047
          %v2056 = vpack.c.b16 %v2053, %v2052
          %v2057 = vpack.c.b16 %v2055, %v2054
          %2060 = vmatprep.subr.bf16.mxu0 0
          %2061 = vmatpush1.bf16.msra.mxu0 %v2056
          %2062 = vmatprep.subr.bf16.mxu0 0
          %2063 = vmatpush1.bf16.msra.mxu0 %v2057
          %2064 = vmatprep.subr.bf16.mxu0 0
          %2065 = vmatpush1.bf16.msra.mxu0 0
          %2066 = vmatprep.subr.bf16.mxu0 0
          %2067 = vmatpush1.bf16.msra.mxu0 0
          %2068 = vmatprep.subr.bf16.mxu0 0
          %2069 = vmatpush1.bf16.msra.mxu0 0
          %2070 = vmatprep.subr.bf16.mxu0 0
          %2071 = vmatpush1.bf16.msra.mxu0 0
          %2072 = vmatprep.subr.bf16.mxu0 0
          %2073 = vmatpush1.bf16.msra.mxu0 0
          %2074 = vmatprep.subr.bf16.mxu0 0
          %2075 = vmatpush1.bf16.msra.mxu0 0
          %2076 = vmatprep.subr.bf16.mxu0 0
          %2077 = vmatpush1.bf16.msra.mxu0 0
          %2078 = vmatprep.subr.bf16.mxu0 0
          %2079 = vmatpush1.bf16.msra.mxu0 0
          %2080 = vmatprep.subr.bf16.mxu0 0
          %2081 = vmatpush1.bf16.msra.mxu0 0
          %2082 = vmatprep.subr.bf16.mxu0 0
          %2083 = vmatpush1.bf16.msra.mxu0 0
          %2084 = vmatprep.subr.bf16.mxu0 0
          %2085 = vmatpush1.bf16.msra.mxu0 0
          %2086 = vmatprep.subr.bf16.mxu0 0
          %2087 = vmatpush1.bf16.msra.mxu0 0
          %2088 = vmatprep.subr.bf16.mxu0 0
          %2089 = vmatpush1.bf16.msra.mxu0 0
          %2090 = vmatprep.subr.bf16.mxu0 0
          %2091 = vmatpush1.bf16.msra.mxu0 0
          %2092 = vmatprep.mubr.bf16.mxu0 0
          %2093 = vmatmul.mubr.bf16.gmra.mrb[0].mxu0 %v874
          %v2094 = vpop.f32.mrb[0].mxu0
          %v2095 = vadd.f32 0.0, %v2094
          %v2096 = vpop.f32.mrb[0].mxu0
          %v2097 = vpop.f32.mrb[0].mxu0
          %v2098 = vadd.f32 0.0, %v2097
          %v2099 = vpop.f32.mrb[0].mxu0
          %2100 = vdwg.mxu0
          %v2101 = vpack.c.bf16 %v2098, %v2095
          %s2102 = scalar_lea.vmem [#allocation3], 24
          %2103 = vst.msk [vmem:[%s2102] sm:$0xff] %vm918, %v2101
          %s2104 = scalar_lea.vmem %s12, 24
          %v2105 = vld [vmem:[%s2104] sm:$0xf]
          %v2106 = vld [vmem:[%s2104 + $0x4] sm:$0xf]
          %v2109 = vunpack.c.l.b16 %v2105
          %v2110 = vunpack.c.l.b16 %v2106
          %v2111 = vpack.c.b16 %v2110, %v2109
          %2113 = vmatprep.subr.bf16.mxu0 0
          %2114 = vmatpush1.bf16.msra.mxu0 %v2111
          %2115 = vmatprep.subr.bf16.mxu0 0
          %2116 = vmatpush1.bf16.msra.mxu0 0
          %2117 = vmatprep.subr.bf16.mxu0 0
          %2118 = vmatpush1.bf16.msra.mxu0 0
          %2119 = vmatprep.subr.bf16.mxu0 0
          %2120 = vmatpush1.bf16.msra.mxu0 0
          %2121 = vmatprep.subr.bf16.mxu0 0
          %2122 = vmatpush1.bf16.msra.mxu0 0
          %2123 = vmatprep.subr.bf16.mxu0 0
          %2124 = vmatpush1.bf16.msra.mxu0 0
          %2125 = vmatprep.subr.bf16.mxu0 0
          %2126 = vmatpush1.bf16.msra.mxu0 0
          %2127 = vmatprep.subr.bf16.mxu0 0
          %2128 = vmatpush1.bf16.msra.mxu0 0
          %2129 = vmatprep.subr.bf16.mxu0 0
          %2130 = vmatpush1.bf16.msra.mxu0 0
          %2131 = vmatprep.subr.bf16.mxu0 0
          %2132 = vmatpush1.bf16.msra.mxu0 0
          %2133 = vmatprep.subr.bf16.mxu0 0
          %2134 = vmatpush1.bf16.msra.mxu0 0
          %2135 = vmatprep.subr.bf16.mxu0 0
          %2136 = vmatpush1.bf16.msra.mxu0 0
          %2137 = vmatprep.subr.bf16.mxu0 0
          %2138 = vmatpush1.bf16.msra.mxu0 0
          %2139 = vmatprep.subr.bf16.mxu0 0
          %2140 = vmatpush1.bf16.msra.mxu0 0
          %2141 = vmatprep.subr.bf16.mxu0 0
          %2142 = vmatpush1.bf16.msra.mxu0 0
          %2143 = vmatprep.subr.bf16.mxu0 0
          %2144 = vmatpush1.bf16.msra.mxu0 0
          %2145 = vmatprep.mubr.bf16.mxu0 0
          %2146 = vmatmul.mubr.bf16.gmra.mrb[0].mxu0 %v989
          %v2147 = vpop.f32.mrb[0].mxu0
          %v2148 = vadd.f32 0.0, %v2147
          %v2149 = vpop.f32.mrb[0].mxu0
          %v2150 = vpop.f32.mrb[0].mxu0
          %v2151 = vadd.f32 0.0, %v2150
          %v2152 = vpop.f32.mrb[0].mxu0
          %2153 = vmatprep.mubr.bf16.mxu0 0
          %2154 = vmatmul.mubr.bf16.gmra.mrb[0].mxu0 %v992
          %v2155 = vpop.f32.mrb[0].mxu0
          %v2156 = vadd.f32 0.0, %v2155
          %v2157 = vpop.f32.mrb[0].mxu0
          %v2158 = vpop.f32.mrb[0].mxu0
          %v2159 = vadd.f32 0.0, %v2158
          %v2160 = vpop.f32.mrb[0].mxu0
          %2161 = vmatprep.mubr.bf16.mxu0 0
          %2162 = vmatmul.mubr.bf16.gmra.mrb[0].mxu0 %v995
          %v2163 = vpop.f32.mrb[0].mxu0
          %v2164 = vadd.f32 0.0, %v2163
          %v2165 = vpop.f32.mrb[0].mxu0
          %v2166 = vpop.f32.mrb[0].mxu0
          %v2167 = vadd.f32 0.0, %v2166
          %v2168 = vpop.f32.mrb[0].mxu0
          %2169 = vmatprep.mubr.bf16.mxu0 0
          %2170 = vmatmul.mubr.bf16.gmra.mrb[0].mxu0 %v998
          %v2171 = vpop.f32.mrb[0].mxu0
          %v2172 = vadd.f32 0.0, %v2171
          %v2173 = vpop.f32.mrb[0].mxu0
          %v2174 = vpop.f32.mrb[0].mxu0
          %v2175 = vadd.f32 0.0, %v2174
          %v2176 = vpop.f32.mrb[0].mxu0
          %2177 = vmatprep.mubr.bf16.mxu0 0
          %2178 = vmatmul.mubr.bf16.gmra.mrb[0].mxu0 %v1001
          %v2179 = vpop.f32.mrb[0].mxu0
          %v2180 = vadd.f32 0.0, %v2179
          %v2181 = vpop.f32.mrb[0].mxu0
          %v2182 = vpop.f32.mrb[0].mxu0
          %v2183 = vadd.f32 0.0, %v2182
          %v2184 = vpop.f32.mrb[0].mxu0
          %2185 = vmatprep.mubr.bf16.mxu0 0
          %2186 = vmatmul.mubr.bf16.gmra.mrb[0].mxu0 %v1004
          %v2187 = vpop.f32.mrb[0].mxu0
          %v2188 = vadd.f32 0.0, %v2187
          %v2189 = vpop.f32.mrb[0].mxu0
          %v2190 = vpop.f32.mrb[0].mxu0
          %v2191 = vadd.f32 0.0, %v2190
          %v2192 = vpop.f32.mrb[0].mxu0
          %2193 = vmatprep.mubr.bf16.mxu0 0
          %2194 = vmatmul.mubr.bf16.gmra.mrb[0].mxu0 %v1007
          %v2195 = vpop.f32.mrb[0].mxu0
          %v2196 = vadd.f32 0.0, %v2195
          %v2197 = vpop.f32.mrb[0].mxu0
          %v2198 = vpop.f32.mrb[0].mxu0
          %v2199 = vadd.f32 0.0, %v2198
          %v2200 = vpop.f32.mrb[0].mxu0
          %2201 = vmatprep.mubr.bf16.mxu0 0
          %2202 = vmatmul.mubr.bf16.gmra.mrb[0].mxu0 %v1010
          %v2203 = vpop.f32.mrb[0].mxu0
          %v2204 = vadd.f32 0.0, %v2203
          %v2205 = vpop.f32.mrb[0].mxu0
          %v2206 = vpop.f32.mrb[0].mxu0
          %v2207 = vadd.f32 0.0, %v2206
          %v2208 = vpop.f32.mrb[0].mxu0
          %2209 = vdwg.mxu0
          %v2210 = vpack.c.bf16 %v2151, %v2148
          %v2211 = vpack.c.bf16 %v2159, %v2156
          %v2212 = vpack.c.bf16 %v2167, %v2164
          %v2213 = vpack.c.bf16 %v2175, %v2172
          %v2214 = vpack.c.bf16 %v2183, %v2180
          %v2215 = vpack.c.bf16 %v2191, %v2188
          %v2216 = vpack.c.bf16 %v2199, %v2196
          %v2217 = vpack.c.bf16 %v2207, %v2204
          %s2218 = scalar_lea.vmem [#allocation4], 192
          %2219 = vst.msk [vmem:[%s2218] sm:$0xff] %vm918, %v2210
          %2220 = vst.msk [vmem:[%s2218 + $0x8] sm:$0xff] %vm918, %v2211
          %2221 = vst.msk [vmem:[%s2218 + $0x10] sm:$0xff] %vm918, %v2212
          %2222 = vst.msk [vmem:[%s2218 + $0x18] sm:$0xff] %vm918, %v2213
          %2223 = vst.msk [vmem:[%s2218 + $0x20] sm:$0xff] %vm918, %v2214
          %2224 = vst.msk [vmem:[%s2218 + $0x28] sm:$0xff] %vm918, %v2215
          %2225 = vst.msk [vmem:[%s2218 + $0x30] sm:$0xff] %vm918, %v2216
          %2226 = vst.msk [vmem:[%s2218 + $0x38] sm:$0xff] %vm918, %v2217
          %s2227 = scalar_lea.vmem %s13, 24
          %v2228 = vld [vmem:[%s2227] sm:$0xf]
          %v2229 = vld [vmem:[%s2227 + $0x4] sm:$0xf]
          %v2232 = vunpack.c.l.b16 %v2228
          %v2233 = vunpack.c.l.b16 %v2229
          %v2234 = vpack.c.b16 %v2233, %v2232
          %2236 = vmatprep.subr.bf16.mxu0 0
          %2237 = vmatpush1.bf16.msra.mxu0 %v2234
          %2238 = vmatprep.subr.bf16.mxu0 0
          %2239 = vmatpush1.bf16.msra.mxu0 0
          %2240 = vmatprep.subr.bf16.mxu0 0
          %2241 = vmatpush1.bf16.msra.mxu0 0
          %2242 = vmatprep.subr.bf16.mxu0 0
          %2243 = vmatpush1.bf16.msra.mxu0 0
          %2244 = vmatprep.subr.bf16.mxu0 0
          %2245 = vmatpush1.bf16.msra.mxu0 0
          %2246 = vmatprep.subr.bf16.mxu0 0
          %2247 = vmatpush1.bf16.msra.mxu0 0
          %2248 = vmatprep.subr.bf16.mxu0 0
          %2249 = vmatpush1.bf16.msra.mxu0 0
          %2250 = vmatprep.subr.bf16.mxu0 0
          %2251 = vmatpush1.bf16.msra.mxu0 0
          %2252 = vmatprep.subr.bf16.mxu0 0
          %2253 = vmatpush1.bf16.msra.mxu0 0
          %2254 = vmatprep.subr.bf16.mxu0 0
          %2255 = vmatpush1.bf16.msra.mxu0 0
          %2256 = vmatprep.subr.bf16.mxu0 0
          %2257 = vmatpush1.bf16.msra.mxu0 0
          %2258 = vmatprep.subr.bf16.mxu0 0
          %2259 = vmatpush1.bf16.msra.mxu0 0
          %2260 = vmatprep.subr.bf16.mxu0 0
          %2261 = vmatpush1.bf16.msra.mxu0 0
          %2262 = vmatprep.subr.bf16.mxu0 0
          %2263 = vmatpush1.bf16.msra.mxu0 0
          %2264 = vmatprep.subr.bf16.mxu0 0
          %2265 = vmatpush1.bf16.msra.mxu0 0
          %2266 = vmatprep.subr.bf16.mxu0 0
          %2267 = vmatpush1.bf16.msra.mxu0 0
          %2268 = vmatprep.mubr.bf16.mxu0 0
          %2269 = vmatmul.mubr.bf16.gmra.mrb[0].mxu0 %v989
          %v2270 = vpop.f32.mrb[0].mxu0
          %v2271 = vadd.f32 0.0, %v2270
          %v2272 = vpop.f32.mrb[0].mxu0
          %v2273 = vpop.f32.mrb[0].mxu0
          %v2274 = vadd.f32 0.0, %v2273
          %v2275 = vpop.f32.mrb[0].mxu0
          %2276 = vmatprep.mubr.bf16.mxu0 0
          %2277 = vmatmul.mubr.bf16.gmra.mrb[0].mxu0 %v992
          %v2278 = vpop.f32.mrb[0].mxu0
          %v2279 = vadd.f32 0.0, %v2278
          %v2280 = vpop.f32.mrb[0].mxu0
          %v2281 = vpop.f32.mrb[0].mxu0
          %v2282 = vadd.f32 0.0, %v2281
          %v2283 = vpop.f32.mrb[0].mxu0
          %2284 = vmatprep.mubr.bf16.mxu0 0
          %2285 = vmatmul.mubr.bf16.gmra.mrb[0].mxu0 %v995
          %v2286 = vpop.f32.mrb[0].mxu0
          %v2287 = vadd.f32 0.0, %v2286
          %v2288 = vpop.f32.mrb[0].mxu0
          %v2289 = vpop.f32.mrb[0].mxu0
          %v2290 = vadd.f32 0.0, %v2289
          %v2291 = vpop.f32.mrb[0].mxu0
          %2292 = vmatprep.mubr.bf16.mxu0 0
          %2293 = vmatmul.mubr.bf16.gmra.mrb[0].mxu0 %v998
          %v2294 = vpop.f32.mrb[0].mxu0
          %v2295 = vadd.f32 0.0, %v2294
          %v2296 = vpop.f32.mrb[0].mxu0
          %v2297 = vpop.f32.mrb[0].mxu0
          %v2298 = vadd.f32 0.0, %v2297
          %v2299 = vpop.f32.mrb[0].mxu0
          %2300 = vmatprep.mubr.bf16.mxu0 0
          %2301 = vmatmul.mubr.bf16.gmra.mrb[0].mxu0 %v1001
          %v2302 = vpop.f32.mrb[0].mxu0
          %v2303 = vadd.f32 0.0, %v2302
          %v2304 = vpop.f32.mrb[0].mxu0
          %v2305 = vpop.f32.mrb[0].mxu0
          %v2306 = vadd.f32 0.0, %v2305
          %v2307 = vpop.f32.mrb[0].mxu0
          %2308 = vmatprep.mubr.bf16.mxu0 0
          %2309 = vmatmul.mubr.bf16.gmra.mrb[0].mxu0 %v1004
          %v2310 = vpop.f32.mrb[0].mxu0
          %v2311 = vadd.f32 0.0, %v2310
          %v2312 = vpop.f32.mrb[0].mxu0
          %v2313 = vpop.f32.mrb[0].mxu0
          %v2314 = vadd.f32 0.0, %v2313
          %v2315 = vpop.f32.mrb[0].mxu0
          %2316 = vmatprep.mubr.bf16.mxu0 0
          %2317 = vmatmul.mubr.bf16.gmra.mrb[0].mxu0 %v1007
          %v2318 = vpop.f32.mrb[0].mxu0
          %v2319 = vadd.f32 0.0, %v2318
          %v2320 = vpop.f32.mrb[0].mxu0
          %v2321 = vpop.f32.mrb[0].mxu0
          %v2322 = vadd.f32 0.0, %v2321
          %v2323 = vpop.f32.mrb[0].mxu0
          %2324 = vmatprep.mubr.bf16.mxu0 0
          %2325 = vmatmul.mubr.bf16.gmra.mrb[0].mxu0 %v1010
          %v2326 = vpop.f32.mrb[0].mxu0
          %v2327 = vadd.f32 0.0, %v2326
          %v2328 = vpop.f32.mrb[0].mxu0
          %v2329 = vpop.f32.mrb[0].mxu0
          %v2330 = vadd.f32 0.0, %v2329
          %v2331 = vpop.f32.mrb[0].mxu0
          %2332 = vdwg.mxu0
          %v2333 = vpack.c.bf16 %v2274, %v2271
          %v2334 = vpack.c.bf16 %v2282, %v2279
          %v2335 = vpack.c.bf16 %v2290, %v2287
          %v2336 = vpack.c.bf16 %v2298, %v2295
          %v2337 = vpack.c.bf16 %v2306, %v2303
          %v2338 = vpack.c.bf16 %v2314, %v2311
          %v2339 = vpack.c.bf16 %v2322, %v2319
          %v2340 = vpack.c.bf16 %v2330, %v2327
          %s2341 = scalar_lea.vmem [#allocation5], 192
          %2342 = vst.msk [vmem:[%s2341] sm:$0xff] %vm918, %v2333
          %2343 = vst.msk [vmem:[%s2341 + $0x8] sm:$0xff] %vm918, %v2334
          %2344 = vst.msk [vmem:[%s2341 + $0x10] sm:$0xff] %vm918, %v2335
          %2345 = vst.msk [vmem:[%s2341 + $0x18] sm:$0xff] %vm918, %v2336
          %2346 = vst.msk [vmem:[%s2341 + $0x20] sm:$0xff] %vm918, %v2337
          %2347 = vst.msk [vmem:[%s2341 + $0x28] sm:$0xff] %vm918, %v2338
          %2348 = vst.msk [vmem:[%s2341 + $0x30] sm:$0xff] %vm918, %v2339
          %2349 = vst.msk [vmem:[%s2341 + $0x38] sm:$0xff] %vm918, %v2340
        $region120: #{tpu_custom_call.1} parent=115 // pred_fallthru
          _
        %s2350 = smul.u32 %s43, 8
        %s2351 = scalar_lea.vmem %s764, %s2350
        %v2352 = vld [vmem:[%s2351] sm:$0xff]
        %vm2353 = vcmask 261120
        %v2354 = vsel %vm2353, %v2352, 0.0
        %2355 = vadd.xlane.f32.xlu0 %v2354
        %v2356 = vpop.xlane.xlu0 %2355
        %v2357 = vrcp.pop 32.0
        %v2358 = vmul.f32 %v2356, %v2357
        %v2359 = vsub.f32 %v2352, %v2358
        %v2360 = vmul.f32 %v2359, %v2359
        %v2361 = vsel %vm2353, %v2360, 0.0
        %2362 = vadd.xlane.f32.xlu0 %v2361
        %v2363 = vpop.xlane.xlu0 %2362
        %v2364 = vmul.f32 %v2363, %v2357
        %v2365 = vadd.f32 %v2364, 1e-05
        %v2366 = vrsqrt.pop %v2365
        %v2367 = vmul.f32 %v2359, %v2366
        %v2369 = vlaneseq
        %v2370 = vshrl.u32 %v2369, 7
        %v2371 = vsub.s32 0, %v2370
        %v2372 = vrot.slane %v771, %v2371
        %v2374 = vmul.f32 %v2367, %v2372
        %v2376 = vlaneseq
        %v2377 = vshrl.u32 %v2376, 7
        %v2378 = vsub.s32 0, %v2377
        %v2379 = vrot.slane %v772, %v2378
        %v2381 = vadd.f32 %v2374, %v2379
        %v2382 = vld [vmem:[#allocation2] sm:$0xff]
        %v2383 = vld [vmem:[#allocation2 + $0x8] sm:$0xff]
        %v2384 = vld [vmem:[#allocation2 + $0x10] sm:$0xff]
        %v2385 = vld [vmem:[#allocation2 + $0x18] sm:$0xff]
        %v2386 = vld [vmem:[#allocation3] sm:$0xff]
        %v2387 = vld [vmem:[#allocation3 + $0x8] sm:$0xff]
        %v2388 = vld [vmem:[#allocation3 + $0x10] sm:$0xff]
        %v2389 = vld [vmem:[#allocation3 + $0x18] sm:$0xff]
        %v2390 = vpack.c.bf16 %v2381, %v2381
        %v2391 = vld [vmem:[%s4] sm:$0xf]
        %v2392 = vld [vmem:[%s4 + $0x4] sm:$0xf]
        %v2393 = vld [vmem:[%s4 + $0x8] sm:$0xf]
        %v2394 = vld [vmem:[%s4 + $0xc] sm:$0xf]
        %v2399 = vunpack.c.l.b16 %v2391
        %v2400 = vunpack.c.l.b16 %v2392
        %v2401 = vunpack.c.l.b16 %v2393
        %v2402 = vunpack.c.l.b16 %v2394
        %v2403 = vpack.c.b16 %v2400, %v2399
        %v2404 = vpack.c.b16 %v2402, %v2401
        %v2408 = vsel %vm2353, %v2390, 0
        %2410 = vmatprep.subr.bf16.mxu0 0
        %2411 = vmatpush1.bf16.msra.mxu0 %v2403
        %2412 = vmatprep.subr.bf16.mxu0 0
        %2413 = vmatpush1.bf16.msra.mxu0 %v2404
        %2414 = vmatprep.subr.bf16.mxu0 0
        %2415 = vmatpush1.bf16.msra.mxu0 0
        %2416 = vmatprep.subr.bf16.mxu0 0
        %2417 = vmatpush1.bf16.msra.mxu0 0
        %2418 = vmatprep.subr.bf16.mxu0 0
        %2419 = vmatpush1.bf16.msra.mxu0 0
        %2420 = vmatprep.subr.bf16.mxu0 0
        %2421 = vmatpush1.bf16.msra.mxu0 0
        %2422 = vmatprep.subr.bf16.mxu0 0
        %2423 = vmatpush1.bf16.msra.mxu0 0
        %2424 = vmatprep.subr.bf16.mxu0 0
        %2425 = vmatpush1.bf16.msra.mxu0 0
        %2426 = vmatprep.subr.bf16.mxu0 0
        %2427 = vmatpush1.bf16.msra.mxu0 0
        %2428 = vmatprep.subr.bf16.mxu0 0
        %2429 = vmatpush1.bf16.msra.mxu0 0
        %2430 = vmatprep.subr.bf16.mxu0 0
        %2431 = vmatpush1.bf16.msra.mxu0 0
        %2432 = vmatprep.subr.bf16.mxu0 0
        %2433 = vmatpush1.bf16.msra.mxu0 0
        %2434 = vmatprep.subr.bf16.mxu0 0
        %2435 = vmatpush1.bf16.msra.mxu0 0
        %2436 = vmatprep.subr.bf16.mxu0 0
        %2437 = vmatpush1.bf16.msra.mxu0 0
        %2438 = vmatprep.subr.bf16.mxu0 0
        %2439 = vmatpush1.bf16.msra.mxu0 0
        %2440 = vmatprep.subr.bf16.mxu0 0
        %2441 = vmatpush1.bf16.msra.mxu0 0
        %2442 = vmatprep.mubr.bf16.mxu0 0
        %2443 = vmatmul.mubr.bf16.gmra.mrb[0].mxu0 %v2408
        %v2444 = vpop.f32.mrb[0].mxu0
        %v2445 = vadd.f32 0.0, %v2444
        %v2446 = vpop.f32.mrb[0].mxu0
        %v2447 = vpop.f32.mrb[0].mxu0
        %v2448 = vpop.f32.mrb[0].mxu0
        %2449 = vdwg.mxu0
        %v2450 = vpack.c.bf16 %v2445, %v2445
        %vm2451 = vcmask 60416
        %2452 = vst.msk [vmem:[#allocation6] sm:$0xf] %vm2451, %v2450
        %s2453 = scalar_lea.vmem %s4, 16
        %v2454 = vld [vmem:[%s2453] sm:$0xf]
        %v2455 = vld [vmem:[%s2453 + $0x4] sm:$0xf]
        %v2456 = vld [vmem:[%s2453 + $0x8] sm:$0xf]
        %v2457 = vld [vmem:[%s2453 + $0xc] sm:$0xf]
        %v2462 = vunpack.c.l.b16 %v2454
        %v2463 = vunpack.c.l.b16 %v2455
        %v2464 = vunpack.c.l.b16 %v2456
        %v2465 = vunpack.c.l.b16 %v2457
        %v2466 = vpack.c.b16 %v2463, %v2462
        %v2467 = vpack.c.b16 %v2465, %v2464
        %2470 = vmatprep.subr.bf16.mxu0 0
        %2471 = vmatpush1.bf16.msra.mxu0 %v2466
        %2472 = vmatprep.subr.bf16.mxu0 0
        %2473 = vmatpush1.bf16.msra.mxu0 %v2467
        %2474 = vmatprep.subr.bf16.mxu0 0
        %2475 = vmatpush1.bf16.msra.mxu0 0
        %2476 = vmatprep.subr.bf16.mxu0 0
        %2477 = vmatpush1.bf16.msra.mxu0 0
        %2478 = vmatprep.subr.bf16.mxu0 0
        %2479 = vmatpush1.bf16.msra.mxu0 0
        %2480 = vmatprep.subr.bf16.mxu0 0
        %2481 = vmatpush1.bf16.msra.mxu0 0
        %2482 = vmatprep.subr.bf16.mxu0 0
        %2483 = vmatpush1.bf16.msra.mxu0 0
        %2484 = vmatprep.subr.bf16.mxu0 0
        %2485 = vmatpush1.bf16.msra.mxu0 0
        %2486 = vmatprep.subr.bf16.mxu0 0
        %2487 = vmatpush1.bf16.msra.mxu0 0
        %2488 = vmatprep.subr.bf16.mxu0 0
        %2489 = vmatpush1.bf16.msra.mxu0 0
        %2490 = vmatprep.subr.bf16.mxu0 0
        %2491 = vmatpush1.bf16.msra.mxu0 0
        %2492 = vmatprep.subr.bf16.mxu0 0
        %2493 = vmatpush1.bf16.msra.mxu0 0
        %2494 = vmatprep.subr.bf16.mxu0 0
        %2495 = vmatpush1.bf16.msra.mxu0 0
        %2496 = vmatprep.subr.bf16.mxu0 0
        %2497 = vmatpush1.bf16.msra.mxu0 0
        %2498 = vmatprep.subr.bf16.mxu0 0
        %2499 = vmatpush1.bf16.msra.mxu0 0
        %2500 = vmatprep.subr.bf16.mxu0 0
        %2501 = vmatpush1.bf16.msra.mxu0 0
        %2502 = vmatprep.mubr.bf16.mxu0 0
        %2503 = vmatmul.mubr.bf16.gmra.mrb[0].mxu0 %v2408
        %v2504 = vpop.f32.mrb[0].mxu0
        %v2505 = vadd.f32 0.0, %v2504
        %v2506 = vpop.f32.mrb[0].mxu0
        %v2507 = vpop.f32.mrb[0].mxu0
        %v2508 = vpop.f32.mrb[0].mxu0
        %2509 = vdwg.mxu0
        %v2510 = vpack.c.bf16 %v2505, %v2505
        %s2511 = scalar_lea.vmem [#allocation6], 4
        %2512 = vst.msk [vmem:[%s2511] sm:$0xf] %vm2451, %v2510
        %s2513 = scalar_lea.vmem %s4, 32
        %v2514 = vld [vmem:[%s2513] sm:$0xf]
        %v2515 = vld [vmem:[%s2513 + $0x4] sm:$0xf]
        %v2516 = vld [vmem:[%s2513 + $0x8] sm:$0xf]
        %v2517 = vld [vmem:[%s2513 + $0xc] sm:$0xf]
        %v2522 = vunpack.c.l.b16 %v2514
        %v2523 = vunpack.c.l.b16 %v2515
        %v2524 = vunpack.c.l.b16 %v2516
        %v2525 = vunpack.c.l.b16 %v2517
        %v2526 = vpack.c.b16 %v2523, %v2522
        %v2527 = vpack.c.b16 %v2525, %v2524
        %2530 = vmatprep.subr.bf16.mxu0 0
        %2531 = vmatpush1.bf16.msra.mxu0 %v2526
        %2532 = vmatprep.subr.bf16.mxu0 0
        %2533 = vmatpush1.bf16.msra.mxu0 %v2527
        %2534 = vmatprep.subr.bf16.mxu0 0
        %2535 = vmatpush1.bf16.msra.mxu0 0
        %2536 = vmatprep.subr.bf16.mxu0 0
        %2537 = vmatpush1.bf16.msra.mxu0 0
        %2538 = vmatprep.subr.bf16.mxu0 0
        %2539 = vmatpush1.bf16.msra.mxu0 0
        %2540 = vmatprep.subr.bf16.mxu0 0
        %2541 = vmatpush1.bf16.msra.mxu0 0
        %2542 = vmatprep.subr.bf16.mxu0 0
        %2543 = vmatpush1.bf16.msra.mxu0 0
        %2544 = vmatprep.subr.bf16.mxu0 0
        %2545 = vmatpush1.bf16.msra.mxu0 0
        %2546 = vmatprep.subr.bf16.mxu0 0
        %2547 = vmatpush1.bf16.msra.mxu0 0
        %2548 = vmatprep.subr.bf16.mxu0 0
        %2549 = vmatpush1.bf16.msra.mxu0 0
        %2550 = vmatprep.subr.bf16.mxu0 0
        %2551 = vmatpush1.bf16.msra.mxu0 0
        %2552 = vmatprep.subr.bf16.mxu0 0
        %2553 = vmatpush1.bf16.msra.mxu0 0
        %2554 = vmatprep.subr.bf16.mxu0 0
        %2555 = vmatpush1.bf16.msra.mxu0 0
        %2556 = vmatprep.subr.bf16.mxu0 0
        %2557 = vmatpush1.bf16.msra.mxu0 0
        %2558 = vmatprep.subr.bf16.mxu0 0
        %2559 = vmatpush1.bf16.msra.mxu0 0
        %2560 = vmatprep.subr.bf16.mxu0 0
        %2561 = vmatpush1.bf16.msra.mxu0 0
        %2562 = vmatprep.mubr.bf16.mxu0 0
        %2563 = vmatmul.mubr.bf16.gmra.mrb[0].mxu0 %v2408
        %v2564 = vpop.f32.mrb[0].mxu0
        %v2565 = vadd.f32 0.0, %v2564
        %v2566 = vpop.f32.mrb[0].mxu0
        %v2567 = vpop.f32.mrb[0].mxu0
        %v2568 = vpop.f32.mrb[0].mxu0
        %2569 = vdwg.mxu0
        %v2570 = vpack.c.bf16 %v2565, %v2565
        %s2571 = scalar_lea.vmem [#allocation6], 8
        %2572 = vst.msk [vmem:[%s2571] sm:$0xf] %vm2451, %v2570
        %s2573 = scalar_lea.vmem %s4, 48
        %v2574 = vld [vmem:[%s2573] sm:$0xf]
        %v2575 = vld [vmem:[%s2573 + $0x4] sm:$0xf]
        %v2576 = vld [vmem:[%s2573 + $0x8] sm:$0xf]
        %v2577 = vld [vmem:[%s2573 + $0xc] sm:$0xf]
        %v2582 = vunpack.c.l.b16 %v2574
        %v2583 = vunpack.c.l.b16 %v2575
        %v2584 = vunpack.c.l.b16 %v2576
        %v2585 = vunpack.c.l.b16 %v2577
        %v2586 = vpack.c.b16 %v2583, %v2582
        %v2587 = vpack.c.b16 %v2585, %v2584
        %2590 = vmatprep.subr.bf16.mxu0 0
        %2591 = vmatpush1.bf16.msra.mxu0 %v2586
        %2592 = vmatprep.subr.bf16.mxu0 0
        %2593 = vmatpush1.bf16.msra.mxu0 %v2587
        %2594 = vmatprep.subr.bf16.mxu0 0
        %2595 = vmatpush1.bf16.msra.mxu0 0
        %2596 = vmatprep.subr.bf16.mxu0 0
        %2597 = vmatpush1.bf16.msra.mxu0 0
        %2598 = vmatprep.subr.bf16.mxu0 0
        %2599 = vmatpush1.bf16.msra.mxu0 0
        %2600 = vmatprep.subr.bf16.mxu0 0
        %2601 = vmatpush1.bf16.msra.mxu0 0
        %2602 = vmatprep.subr.bf16.mxu0 0
        %2603 = vmatpush1.bf16.msra.mxu0 0
        %2604 = vmatprep.subr.bf16.mxu0 0
        %2605 = vmatpush1.bf16.msra.mxu0 0
        %2606 = vmatprep.subr.bf16.mxu0 0
        %2607 = vmatpush1.bf16.msra.mxu0 0
        %2608 = vmatprep.subr.bf16.mxu0 0
        %2609 = vmatpush1.bf16.msra.mxu0 0
        %2610 = vmatprep.subr.bf16.mxu0 0
        %2611 = vmatpush1.bf16.msra.mxu0 0
        %2612 = vmatprep.subr.bf16.mxu0 0
        %2613 = vmatpush1.bf16.msra.mxu0 0
        %2614 = vmatprep.subr.bf16.mxu0 0
        %2615 = vmatpush1.bf16.msra.mxu0 0
        %2616 = vmatprep.subr.bf16.mxu0 0
        %2617 = vmatpush1.bf16.msra.mxu0 0
        %2618 = vmatprep.subr.bf16.mxu0 0
        %2619 = vmatpush1.bf16.msra.mxu0 0
        %2620 = vmatprep.subr.bf16.mxu0 0
        %2621 = vmatpush1.bf16.msra.mxu0 0
        %2622 = vmatprep.mubr.bf16.mxu0 0
        %2623 = vmatmul.mubr.bf16.gmra.mrb[0].mxu0 %v2408
        %v2624 = vpop.f32.mrb[0].mxu0
        %v2625 = vadd.f32 0.0, %v2624
        %v2626 = vpop.f32.mrb[0].mxu0
        %v2627 = vpop.f32.mrb[0].mxu0
        %v2628 = vpop.f32.mrb[0].mxu0
        %2629 = vdwg.mxu0
        %v2630 = vpack.c.bf16 %v2625, %v2625
        %s2631 = scalar_lea.vmem [#allocation6], 12
        %2632 = vst.msk [vmem:[%s2631] sm:$0xf] %vm2451, %v2630
        %v2633 = vld [vmem:[#allocation6] sm:$0xf]
        %v2634 = vld [vmem:[#allocation6 + $0x4] sm:$0xf]
        %v2635 = vld [vmem:[#allocation6 + $0x8] sm:$0xf]
        %v2636 = vld [vmem:[#allocation6 + $0xc] sm:$0xf]
        %vm2637 = vcmask 64512
        %v2639 = vsel %vm2637, %v2633, 0
        %v2642 = vsel %vm2637, %v2382, 0
        %2644 = vmatprep.subr.bf16.mxu0 0
        %2645 = vmatpush1.bf16.xpose.msra.mxu0 %v2642
        %2646 = vmatprep.subr.bf16.mxu0 0
        %2647 = vmatpush1.bf16.xpose.msra.mxu0 0
        %2648 = vmatprep.subr.bf16.mxu0 0
        %2649 = vmatpush1.bf16.xpose.msra.mxu0 0
        %2650 = vmatprep.subr.bf16.mxu0 0
        %2651 = vmatpush1.bf16.xpose.msra.mxu0 0
        %2652 = vmatprep.subr.bf16.mxu0 0
        %2653 = vmatpush1.bf16.xpose.msra.mxu0 0
        %2654 = vmatprep.subr.bf16.mxu0 0
        %2655 = vmatpush1.bf16.xpose.msra.mxu0 0
        %2656 = vmatprep.subr.bf16.mxu0 0
        %2657 = vmatpush1.bf16.xpose.msra.mxu0 0
        %2658 = vmatprep.subr.bf16.mxu0 0
        %2659 = vmatpush1.bf16.xpose.msra.mxu0 0
        %2660 = vmatprep.subr.bf16.mxu0 0
        %2661 = vmatpush1.bf16.xpose.msra.mxu0 0
        %2662 = vmatprep.subr.bf16.mxu0 0
        %2663 = vmatpush1.bf16.xpose.msra.mxu0 0
        %2664 = vmatprep.subr.bf16.mxu0 0
        %2665 = vmatpush1.bf16.xpose.msra.mxu0 0
        %2666 = vmatprep.subr.bf16.mxu0 0
        %2667 = vmatpush1.bf16.xpose.msra.mxu0 0
        %2668 = vmatprep.subr.bf16.mxu0 0
        %2669 = vmatpush1.bf16.xpose.msra.mxu0 0
        %2670 = vmatprep.subr.bf16.mxu0 0
        %2671 = vmatpush1.bf16.xpose.msra.mxu0 0
        %2672 = vmatprep.subr.bf16.mxu0 0
        %2673 = vmatpush1.bf16.xpose.msra.mxu0 0
        %2674 = vmatprep.subr.bf16.mxu0 0
        %2675 = vmatpush1.bf16.xpose.msra.mxu0 0
        %2676 = vmatprep.mubr.bf16.mxu0 0
        %2677 = vmatmul.mubr.bf16.gmra.mrb[0].mxu0 %v2639
        %v2678 = vpop.f32.mrb[0].mxu0
        %v2679 = vadd.f32 0.0, %v2678
        %v2680 = vpop.f32.mrb[0].mxu0
        %v2681 = vpop.f32.mrb[0].mxu0
        %v2682 = vpop.f32.mrb[0].mxu0
        %2683 = vdwg.mxu0
        %v2685 = vsel %vm2637, %v2634, 0
        %v2688 = vsel %vm2637, %v2383, 0
        %2690 = vmatprep.subr.bf16.mxu0 0
        %2691 = vmatpush1.bf16.xpose.msra.mxu0 %v2688
        %2692 = vmatprep.subr.bf16.mxu0 0
        %2693 = vmatpush1.bf16.xpose.msra.mxu0 0
        %2694 = vmatprep.subr.bf16.mxu0 0
        %2695 = vmatpush1.bf16.xpose.msra.mxu0 0
        %2696 = vmatprep.subr.bf16.mxu0 0
        %2697 = vmatpush1.bf16.xpose.msra.mxu0 0
        %2698 = vmatprep.subr.bf16.mxu0 0
        %2699 = vmatpush1.bf16.xpose.msra.mxu0 0
        %2700 = vmatprep.subr.bf16.mxu0 0
        %2701 = vmatpush1.bf16.xpose.msra.mxu0 0
        %2702 = vmatprep.subr.bf16.mxu0 0
        %2703 = vmatpush1.bf16.xpose.msra.mxu0 0
        %2704 = vmatprep.subr.bf16.mxu0 0
        %2705 = vmatpush1.bf16.xpose.msra.mxu0 0
        %2706 = vmatprep.subr.bf16.mxu0 0
        %2707 = vmatpush1.bf16.xpose.msra.mxu0 0
        %2708 = vmatprep.subr.bf16.mxu0 0
        %2709 = vmatpush1.bf16.xpose.msra.mxu0 0
        %2710 = vmatprep.subr.bf16.mxu0 0
        %2711 = vmatpush1.bf16.xpose.msra.mxu0 0
        %2712 = vmatprep.subr.bf16.mxu0 0
        %2713 = vmatpush1.bf16.xpose.msra.mxu0 0
        %2714 = vmatprep.subr.bf16.mxu0 0
        %2715 = vmatpush1.bf16.xpose.msra.mxu0 0
        %2716 = vmatprep.subr.bf16.mxu0 0
        %2717 = vmatpush1.bf16.xpose.msra.mxu0 0
        %2718 = vmatprep.subr.bf16.mxu0 0
        %2719 = vmatpush1.bf16.xpose.msra.mxu0 0
        %2720 = vmatprep.subr.bf16.mxu0 0
        %2721 = vmatpush1.bf16.xpose.msra.mxu0 0
        %2722 = vmatprep.mubr.bf16.mxu0 0
        %2723 = vmatmul.mubr.bf16.gmra.mrb[0].mxu0 %v2685
        %v2724 = vpop.f32.mrb[0].mxu0
        %v2725 = vadd.f32 0.0, %v2724
        %v2726 = vpop.f32.mrb[0].mxu0
        %v2727 = vpop.f32.mrb[0].mxu0
        %v2728 = vpop.f32.mrb[0].mxu0
        %2729 = vdwg.mxu0
        %v2731 = vsel %vm2637, %v2635, 0
        %v2734 = vsel %vm2637, %v2384, 0
        %2736 = vmatprep.subr.bf16.mxu0 0
        %2737 = vmatpush1.bf16.xpose.msra.mxu0 %v2734
        %2738 = vmatprep.subr.bf16.mxu0 0
        %2739 = vmatpush1.bf16.xpose.msra.mxu0 0
        %2740 = vmatprep.subr.bf16.mxu0 0
        %2741 = vmatpush1.bf16.xpose.msra.mxu0 0
        %2742 = vmatprep.subr.bf16.mxu0 0
        %2743 = vmatpush1.bf16.xpose.msra.mxu0 0
        %2744 = vmatprep.subr.bf16.mxu0 0
        %2745 = vmatpush1.bf16.xpose.msra.mxu0 0
        %2746 = vmatprep.subr.bf16.mxu0 0
        %2747 = vmatpush1.bf16.xpose.msra.mxu0 0
        %2748 = vmatprep.subr.bf16.mxu0 0
        %2749 = vmatpush1.bf16.xpose.msra.mxu0 0
        %2750 = vmatprep.subr.bf16.mxu0 0
        %2751 = vmatpush1.bf16.xpose.msra.mxu0 0
        %2752 = vmatprep.subr.bf16.mxu0 0
        %2753 = vmatpush1.bf16.xpose.msra.mxu0 0
        %2754 = vmatprep.subr.bf16.mxu0 0
        %2755 = vmatpush1.bf16.xpose.msra.mxu0 0
        %2756 = vmatprep.subr.bf16.mxu0 0
        %2757 = vmatpush1.bf16.xpose.msra.mxu0 0
        %2758 = vmatprep.subr.bf16.mxu0 0
        %2759 = vmatpush1.bf16.xpose.msra.mxu0 0
        %2760 = vmatprep.subr.bf16.mxu0 0
        %2761 = vmatpush1.bf16.xpose.msra.mxu0 0
        %2762 = vmatprep.subr.bf16.mxu0 0
        %2763 = vmatpush1.bf16.xpose.msra.mxu0 0
        %2764 = vmatprep.subr.bf16.mxu0 0
        %2765 = vmatpush1.bf16.xpose.msra.mxu0 0
        %2766 = vmatprep.subr.bf16.mxu0 0
        %2767 = vmatpush1.bf16.xpose.msra.mxu0 0
        %2768 = vmatprep.mubr.bf16.mxu0 0
        %2769 = vmatmul.mubr.bf16.gmra.mrb[0].mxu0 %v2731
        %v2770 = vpop.f32.mrb[0].mxu0
        %v2771 = vadd.f32 0.0, %v2770
        %v2772 = vpop.f32.mrb[0].mxu0
        %v2773 = vpop.f32.mrb[0].mxu0
        %v2774 = vpop.f32.mrb[0].mxu0
        %2775 = vdwg.mxu0
        %v2777 = vsel %vm2637, %v2636, 0
        %v2780 = vsel %vm2637, %v2385, 0
        %2782 = vmatprep.subr.bf16.mxu0 0
        %2783 = vmatpush1.bf16.xpose.msra.mxu0 %v2780
        %2784 = vmatprep.subr.bf16.mxu0 0
        %2785 = vmatpush1.bf16.xpose.msra.mxu0 0
        %2786 = vmatprep.subr.bf16.mxu0 0
        %2787 = vmatpush1.bf16.xpose.msra.mxu0 0
        %2788 = vmatprep.subr.bf16.mxu0 0
        %2789 = vmatpush1.bf16.xpose.msra.mxu0 0
        %2790 = vmatprep.subr.bf16.mxu0 0
        %2791 = vmatpush1.bf16.xpose.msra.mxu0 0
        %2792 = vmatprep.subr.bf16.mxu0 0
        %2793 = vmatpush1.bf16.xpose.msra.mxu0 0
        %2794 = vmatprep.subr.bf16.mxu0 0
        %2795 = vmatpush1.bf16.xpose.msra.mxu0 0
        %2796 = vmatprep.subr.bf16.mxu0 0
        %2797 = vmatpush1.bf16.xpose.msra.mxu0 0
        %2798 = vmatprep.subr.bf16.mxu0 0
        %2799 = vmatpush1.bf16.xpose.msra.mxu0 0
        %2800 = vmatprep.subr.bf16.mxu0 0
        %2801 = vmatpush1.bf16.xpose.msra.mxu0 0
        %2802 = vmatprep.subr.bf16.mxu0 0
        %2803 = vmatpush1.bf16.xpose.msra.mxu0 0
        %2804 = vmatprep.subr.bf16.mxu0 0
        %2805 = vmatpush1.bf16.xpose.msra.mxu0 0
        %2806 = vmatprep.subr.bf16.mxu0 0
        %2807 = vmatpush1.bf16.xpose.msra.mxu0 0
        %2808 = vmatprep.subr.bf16.mxu0 0
        %2809 = vmatpush1.bf16.xpose.msra.mxu0 0
        %2810 = vmatprep.subr.bf16.mxu0 0
        %2811 = vmatpush1.bf16.xpose.msra.mxu0 0
        %2812 = vmatprep.subr.bf16.mxu0 0
        %2813 = vmatpush1.bf16.xpose.msra.mxu0 0
        %2814 = vmatprep.mubr.bf16.mxu0 0
        %2815 = vmatmul.mubr.bf16.gmra.mrb[0].mxu0 %v2777
        %v2816 = vpop.f32.mrb[0].mxu0
        %v2817 = vadd.f32 0.0, %v2816
        %v2818 = vpop.f32.mrb[0].mxu0
        %v2819 = vpop.f32.mrb[0].mxu0
        %v2820 = vpop.f32.mrb[0].mxu0
        %2821 = vdwg.mxu0
        %vm2822 = vcmask 130048
        %v2823 = vsel %vm2822, %v2679, -inf
        %2824 = vmax.xlane.f32.xlu0 %v2823
        %v2825 = vpop.xlane.xlu0 %2824
        %v2826 = vsel %vm2822, %v2725, -inf
        %2827 = vmax.xlane.f32.xlu0 %v2826
        %v2828 = vpop.xlane.xlu0 %2827
        %v2829 = vsel %vm2822, %v2771, -inf
        %2830 = vmax.xlane.f32.xlu0 %v2829
        %v2831 = vpop.xlane.xlu0 %2830
        %v2832 = vsel %vm2822, %v2817, -inf
        %2833 = vmax.xlane.f32.xlu0 %v2832
        %v2834 = vpop.xlane.xlu0 %2833
        %v2835 = vsub.f32 %v2679, %v2825
        %v2836 = vsub.f32 %v2725, %v2828
        %v2837 = vsub.f32 %v2771, %v2831
        %v2838 = vsub.f32 %v2817, %v2834
        %v2839 = vmul.f32 %v2835, 1.442695
        %v2840 = vpow.pop %v2839
        %v2841 = vmul.f32 %v2836, 1.442695
        %v2842 = vpow.pop %v2841
        %v2843 = vmul.f32 %v2837, 1.442695
        %v2844 = vpow.pop %v2843
        %v2845 = vmul.f32 %v2838, 1.442695
        %v2846 = vpow.pop %v2845
        %v2847 = vsel %vm2822, %v2840, 0.0
        %2848 = vadd.xlane.f32.xlu0 %v2847
        %v2849 = vpop.xlane.xlu0 %2848
        %v2850 = vsel %vm2822, %v2842, 0.0
        %2851 = vadd.xlane.f32.xlu0 %v2850
        %v2852 = vpop.xlane.xlu0 %2851
        %v2853 = vsel %vm2822, %v2844, 0.0
        %2854 = vadd.xlane.f32.xlu0 %v2853
        %v2855 = vpop.xlane.xlu0 %2854
        %v2856 = vsel %vm2822, %v2846, 0.0
        %2857 = vadd.xlane.f32.xlu0 %v2856
        %v2858 = vpop.xlane.xlu0 %2857
        %v2859 = vpack.c.bf16 %v2840, %v2840
        %v2860 = vpack.c.bf16 %v2842, %v2842
        %v2861 = vpack.c.bf16 %v2844, %v2844
        %v2862 = vpack.c.bf16 %v2846, %v2846
        %v2864 = vsel %vm2822, %v2859, 0
        %2866 = vmatprep.subr.bf16.mxu0 0
        %2867 = vmatpush1.bf16.msra.mxu0 %v2386
        %2868 = vmatprep.subr.bf16.mxu0 0
        %2869 = vmatpush1.bf16.msra.mxu0 0
        %2870 = vmatprep.subr.bf16.mxu0 0
        %2871 = vmatpush1.bf16.msra.mxu0 0
        %2872 = vmatprep.subr.bf16.mxu0 0
        %2873 = vmatpush1.bf16.msra.mxu0 0
        %2874 = vmatprep.subr.bf16.mxu0 0
        %2875 = vmatpush1.bf16.msra.mxu0 0
        %2876 = vmatprep.subr.bf16.mxu0 0
        %2877 = vmatpush1.bf16.msra.mxu0 0
        %2878 = vmatprep.subr.bf16.mxu0 0
        %2879 = vmatpush1.bf16.msra.mxu0 0
        %2880 = vmatprep.subr.bf16.mxu0 0
        %2881 = vmatpush1.bf16.msra.mxu0 0
        %2882 = vmatprep.subr.bf16.mxu0 0
        %2883 = vmatpush1.bf16.msra.mxu0 0
        %2884 = vmatprep.subr.bf16.mxu0 0
        %2885 = vmatpush1.bf16.msra.mxu0 0
        %2886 = vmatprep.subr.bf16.mxu0 0
        %2887 = vmatpush1.bf16.msra.mxu0 0
        %2888 = vmatprep.subr.bf16.mxu0 0
        %2889 = vmatpush1.bf16.msra.mxu0 0
        %2890 = vmatprep.subr.bf16.mxu0 0
        %2891 = vmatpush1.bf16.msra.mxu0 0
        %2892 = vmatprep.subr.bf16.mxu0 0
        %2893 = vmatpush1.bf16.msra.mxu0 0
        %2894 = vmatprep.subr.bf16.mxu0 0
        %2895 = vmatpush1.bf16.msra.mxu0 0
        %2896 = vmatprep.subr.bf16.mxu0 0
        %2897 = vmatpush1.bf16.msra.mxu0 0
        %2898 = vmatprep.mubr.bf16.mxu0 0
        %2899 = vmatmul.mubr.bf16.gmra.mrb[0].mxu0 %v2864
        %v2900 = vpop.f32.mrb[0].mxu0
        %v2901 = vadd.f32 0.0, %v2900
        %v2902 = vpop.f32.mrb[0].mxu0
        %v2903 = vpop.f32.mrb[0].mxu0
        %v2904 = vpop.f32.mrb[0].mxu0
        %2905 = vdwg.mxu0
        %v2907 = vsel %vm2822, %v2860, 0
        %2909 = vmatprep.subr.bf16.mxu0 0
        %2910 = vmatpush1.bf16.msra.mxu0 %v2387
        %2911 = vmatprep.subr.bf16.mxu0 0
        %2912 = vmatpush1.bf16.msra.mxu0 0
        %2913 = vmatprep.subr.bf16.mxu0 0
        %2914 = vmatpush1.bf16.msra.mxu0 0
        %2915 = vmatprep.subr.bf16.mxu0 0
        %2916 = vmatpush1.bf16.msra.mxu0 0
        %2917 = vmatprep.subr.bf16.mxu0 0
        %2918 = vmatpush1.bf16.msra.mxu0 0
        %2919 = vmatprep.subr.bf16.mxu0 0
        %2920 = vmatpush1.bf16.msra.mxu0 0
        %2921 = vmatprep.subr.bf16.mxu0 0
        %2922 = vmatpush1.bf16.msra.mxu0 0
        %2923 = vmatprep.subr.bf16.mxu0 0
        %2924 = vmatpush1.bf16.msra.mxu0 0
        %2925 = vmatprep.subr.bf16.mxu0 0
        %2926 = vmatpush1.bf16.msra.mxu0 0
        %2927 = vmatprep.subr.bf16.mxu0 0
        %2928 = vmatpush1.bf16.msra.mxu0 0
        %2929 = vmatprep.subr.bf16.mxu0 0
        %2930 = vmatpush1.bf16.msra.mxu0 0
        %2931 = vmatprep.subr.bf16.mxu0 0
        %2932 = vmatpush1.bf16.msra.mxu0 0
        %2933 = vmatprep.subr.bf16.mxu0 0
        %2934 = vmatpush1.bf16.msra.mxu0 0
        %2935 = vmatprep.subr.bf16.mxu0 0
        %2936 = vmatpush1.bf16.msra.mxu0 0
        %2937 = vmatprep.subr.bf16.mxu0 0
        %2938 = vmatpush1.bf16.msra.mxu0 0
        %2939 = vmatprep.subr.bf16.mxu0 0
        %2940 = vmatpush1.bf16.msra.mxu0 0
        %2941 = vmatprep.mubr.bf16.mxu0 0
        %2942 = vmatmul.mubr.bf16.gmra.mrb[0].mxu0 %v2907
        %v2943 = vpop.f32.mrb[0].mxu0
        %v2944 = vadd.f32 0.0, %v2943
        %v2945 = vpop.f32.mrb[0].mxu0
        %v2946 = vpop.f32.mrb[0].mxu0
        %v2947 = vpop.f32.mrb[0].mxu0
        %2948 = vdwg.mxu0
        %v2950 = vsel %vm2822, %v2861, 0
        %2952 = vmatprep.subr.bf16.mxu0 0
        %2953 = vmatpush1.bf16.msra.mxu0 %v2388
        %2954 = vmatprep.subr.bf16.mxu0 0
        %2955 = vmatpush1.bf16.msra.mxu0 0
        %2956 = vmatprep.subr.bf16.mxu0 0
        %2957 = vmatpush1.bf16.msra.mxu0 0
        %2958 = vmatprep.subr.bf16.mxu0 0
        %2959 = vmatpush1.bf16.msra.mxu0 0
        %2960 = vmatprep.subr.bf16.mxu0 0
        %2961 = vmatpush1.bf16.msra.mxu0 0
        %2962 = vmatprep.subr.bf16.mxu0 0
        %2963 = vmatpush1.bf16.msra.mxu0 0
        %2964 = vmatprep.subr.bf16.mxu0 0
        %2965 = vmatpush1.bf16.msra.mxu0 0
        %2966 = vmatprep.subr.bf16.mxu0 0
        %2967 = vmatpush1.bf16.msra.mxu0 0
        %2968 = vmatprep.subr.bf16.mxu0 0
        %2969 = vmatpush1.bf16.msra.mxu0 0
        %2970 = vmatprep.subr.bf16.mxu0 0
        %2971 = vmatpush1.bf16.msra.mxu0 0
        %2972 = vmatprep.subr.bf16.mxu0 0
        %2973 = vmatpush1.bf16.msra.mxu0 0
        %2974 = vmatprep.subr.bf16.mxu0 0
        %2975 = vmatpush1.bf16.msra.mxu0 0
        %2976 = vmatprep.subr.bf16.mxu0 0
        %2977 = vmatpush1.bf16.msra.mxu0 0
        %2978 = vmatprep.subr.bf16.mxu0 0
        %2979 = vmatpush1.bf16.msra.mxu0 0
        %2980 = vmatprep.subr.bf16.mxu0 0
        %2981 = vmatpush1.bf16.msra.mxu0 0
        %2982 = vmatprep.subr.bf16.mxu0 0
        %2983 = vmatpush1.bf16.msra.mxu0 0
        %2984 = vmatprep.mubr.bf16.mxu0 0
        %2985 = vmatmul.mubr.bf16.gmra.mrb[0].mxu0 %v2950
        %v2986 = vpop.f32.mrb[0].mxu0
        %v2987 = vadd.f32 0.0, %v2986
        %v2988 = vpop.f32.mrb[0].mxu0
        %v2989 = vpop.f32.mrb[0].mxu0
        %v2990 = vpop.f32.mrb[0].mxu0
        %2991 = vdwg.mxu0
        %v2993 = vsel %vm2822, %v2862, 0
        %2995 = vmatprep.subr.bf16.mxu0 0
        %2996 = vmatpush1.bf16.msra.mxu0 %v2389
        %2997 = vmatprep.subr.bf16.mxu0 0
        %2998 = vmatpush1.bf16.msra.mxu0 0
        %2999 = vmatprep.subr.bf16.mxu0 0
        %3000 = vmatpush1.bf16.msra.mxu0 0
        %3001 = vmatprep.subr.bf16.mxu0 0
        %3002 = vmatpush1.bf16.msra.mxu0 0
        %3003 = vmatprep.subr.bf16.mxu0 0
        %3004 = vmatpush1.bf16.msra.mxu0 0
        %3005 = vmatprep.subr.bf16.mxu0 0
        %3006 = vmatpush1.bf16.msra.mxu0 0
        %3007 = vmatprep.subr.bf16.mxu0 0
        %3008 = vmatpush1.bf16.msra.mxu0 0
        %3009 = vmatprep.subr.bf16.mxu0 0
        %3010 = vmatpush1.bf16.msra.mxu0 0
        %3011 = vmatprep.subr.bf16.mxu0 0
        %3012 = vmatpush1.bf16.msra.mxu0 0
        %3013 = vmatprep.subr.bf16.mxu0 0
        %3014 = vmatpush1.bf16.msra.mxu0 0
        %3015 = vmatprep.subr.bf16.mxu0 0
        %3016 = vmatpush1.bf16.msra.mxu0 0
        %3017 = vmatprep.subr.bf16.mxu0 0
        %3018 = vmatpush1.bf16.msra.mxu0 0
        %3019 = vmatprep.subr.bf16.mxu0 0
        %3020 = vmatpush1.bf16.msra.mxu0 0
        %3021 = vmatprep.subr.bf16.mxu0 0
        %3022 = vmatpush1.bf16.msra.mxu0 0
        %3023 = vmatprep.subr.bf16.mxu0 0
        %3024 = vmatpush1.bf16.msra.mxu0 0
        %3025 = vmatprep.subr.bf16.mxu0 0
        %3026 = vmatpush1.bf16.msra.mxu0 0
        %3027 = vmatprep.mubr.bf16.mxu0 0
        %3028 = vmatmul.mubr.bf16.gmra.mrb[0].mxu0 %v2993
        %v3029 = vpop.f32.mrb[0].mxu0
        %v3030 = vadd.f32 0.0, %v3029
        %v3031 = vpop.f32.mrb[0].mxu0
        %v3032 = vpop.f32.mrb[0].mxu0
        %v3033 = vpop.f32.mrb[0].mxu0
        %3034 = vdwg.mxu0
        %v3035 = vrcp.pop %v2849
        %v3036 = vrcp.pop %v2852
        %v3037 = vrcp.pop %v2855
        %v3038 = vrcp.pop %v2858
        %v3039 = vmul.f32 %v2901, %v3035
        %v3040 = vmul.f32 %v2944, %v3036
        %v3041 = vmul.f32 %v2987, %v3037
        %v3042 = vmul.f32 %v3030, %v3038
        %v3043 = vpack.c.bf16 %v3039, %v3039
        %v3044 = vpack.c.bf16 %v3040, %v3040
        %v3045 = vpack.c.bf16 %v3041, %v3041
        %v3046 = vpack.c.bf16 %v3042, %v3042
        %v3047 = vld [vmem:[%s7] sm:$0xf]
        %v3048 = vld [vmem:[%s7 + $0x4] sm:$0xf]
        %v3049 = vld [vmem:[%s7 + $0x8] sm:$0xf]
        %v3050 = vld [vmem:[%s7 + $0xc] sm:$0xf]
        %v3052 = vsel %vm2637, %v3043, 0
        %vm3054 = vcmask 1043456
        %v3056 = vsel %vm3054, %v3047, 0
        %3058 = vmatprep.subr.bf16.mxu0 0
        %3059 = vmatpush1.bf16.msra.mxu0 %v3056
        %3060 = vmatprep.subr.bf16.mxu0 0
        %3061 = vmatpush1.bf16.msra.mxu0 0
        %3062 = vmatprep.subr.bf16.mxu0 0
        %3063 = vmatpush1.bf16.msra.mxu0 0
        %3064 = vmatprep.subr.bf16.mxu0 0
        %3065 = vmatpush1.bf16.msra.mxu0 0
        %3066 = vmatprep.subr.bf16.mxu0 0
        %3067 = vmatpush1.bf16.msra.mxu0 0
        %3068 = vmatprep.subr.bf16.mxu0 0
        %3069 = vmatpush1.bf16.msra.mxu0 0
        %3070 = vmatprep.subr.bf16.mxu0 0
        %3071 = vmatpush1.bf16.msra.mxu0 0
        %3072 = vmatprep.subr.bf16.mxu0 0
        %3073 = vmatpush1.bf16.msra.mxu0 0
        %3074 = vmatprep.subr.bf16.mxu0 0
        %3075 = vmatpush1.bf16.msra.mxu0 0
        %3076 = vmatprep.subr.bf16.mxu0 0
        %3077 = vmatpush1.bf16.msra.mxu0 0
        %3078 = vmatprep.subr.bf16.mxu0 0
        %3079 = vmatpush1.bf16.msra.mxu0 0
        %3080 = vmatprep.subr.bf16.mxu0 0
        %3081 = vmatpush1.bf16.msra.mxu0 0
        %3082 = vmatprep.subr.bf16.mxu0 0
        %3083 = vmatpush1.bf16.msra.mxu0 0
        %3084 = vmatprep.subr.bf16.mxu0 0
        %3085 = vmatpush1.bf16.msra.mxu0 0
        %3086 = vmatprep.subr.bf16.mxu0 0
        %3087 = vmatpush1.bf16.msra.mxu0 0
        %3088 = vmatprep.subr.bf16.mxu0 0
        %3089 = vmatpush1.bf16.msra.mxu0 0
        %3090 = vmatprep.mubr.bf16.mxu0 0
        %3091 = vmatmul.mubr.bf16.gmra.mrb[0].mxu0 %v3052
        %v3092 = vpop.f32.mrb[0].mxu0
        %v3093 = vadd.f32 0.0, %v3092
        %v3094 = vpop.f32.mrb[0].mxu0
        %v3095 = vpop.f32.mrb[0].mxu0
        %v3096 = vpop.f32.mrb[0].mxu0
        %3097 = vdwg.mxu0
        %v3099 = vsel %vm2637, %v3044, 0
        %v3102 = vsel %vm3054, %v3048, 0
        %3104 = vmatprep.subr.bf16.mxu0 0
        %3105 = vmatpush1.bf16.msra.mxu0 %v3102
        %3106 = vmatprep.subr.bf16.mxu0 0
        %3107 = vmatpush1.bf16.msra.mxu0 0
        %3108 = vmatprep.subr.bf16.mxu0 0
        %3109 = vmatpush1.bf16.msra.mxu0 0
        %3110 = vmatprep.subr.bf16.mxu0 0
        %3111 = vmatpush1.bf16.msra.mxu0 0
        %3112 = vmatprep.subr.bf16.mxu0 0
        %3113 = vmatpush1.bf16.msra.mxu0 0
        %3114 = vmatprep.subr.bf16.mxu0 0
        %3115 = vmatpush1.bf16.msra.mxu0 0
        %3116 = vmatprep.subr.bf16.mxu0 0
        %3117 = vmatpush1.bf16.msra.mxu0 0
        %3118 = vmatprep.subr.bf16.mxu0 0
        %3119 = vmatpush1.bf16.msra.mxu0 0
        %3120 = vmatprep.subr.bf16.mxu0 0
        %3121 = vmatpush1.bf16.msra.mxu0 0
        %3122 = vmatprep.subr.bf16.mxu0 0
        %3123 = vmatpush1.bf16.msra.mxu0 0
        %3124 = vmatprep.subr.bf16.mxu0 0
        %3125 = vmatpush1.bf16.msra.mxu0 0
        %3126 = vmatprep.subr.bf16.mxu0 0
        %3127 = vmatpush1.bf16.msra.mxu0 0
        %3128 = vmatprep.subr.bf16.mxu0 0
        %3129 = vmatpush1.bf16.msra.mxu0 0
        %3130 = vmatprep.subr.bf16.mxu0 0
        %3131 = vmatpush1.bf16.msra.mxu0 0
        %3132 = vmatprep.subr.bf16.mxu0 0
        %3133 = vmatpush1.bf16.msra.mxu0 0
        %3134 = vmatprep.subr.bf16.mxu0 0
        %3135 = vmatpush1.bf16.msra.mxu0 0
        %3136 = vmatprep.mubr.bf16.mxu0 0
        %3137 = vmatmul.mubr.bf16.gmra.mrb[0].mxu0 %v3099
        %v3138 = vpop.f32.mrb[0].mxu0
        %v3139 = vadd.f32 0.0, %v3138
        %v3140 = vpop.f32.mrb[0].mxu0
        %v3141 = vpop.f32.mrb[0].mxu0
        %v3142 = vpop.f32.mrb[0].mxu0
        %3143 = vdwg.mxu0
        %v3145 = vsel %vm2637, %v3045, 0
        %v3148 = vsel %vm3054, %v3049, 0
        %3150 = vmatprep.subr.bf16.mxu0 0
        %3151 = vmatpush1.bf16.msra.mxu0 %v3148
        %3152 = vmatprep.subr.bf16.mxu0 0
        %3153 = vmatpush1.bf16.msra.mxu0 0
        %3154 = vmatprep.subr.bf16.mxu0 0
        %3155 = vmatpush1.bf16.msra.mxu0 0
        %3156 = vmatprep.subr.bf16.mxu0 0
        %3157 = vmatpush1.bf16.msra.mxu0 0
        %3158 = vmatprep.subr.bf16.mxu0 0
        %3159 = vmatpush1.bf16.msra.mxu0 0
        %3160 = vmatprep.subr.bf16.mxu0 0
        %3161 = vmatpush1.bf16.msra.mxu0 0
        %3162 = vmatprep.subr.bf16.mxu0 0
        %3163 = vmatpush1.bf16.msra.mxu0 0
        %3164 = vmatprep.subr.bf16.mxu0 0
        %3165 = vmatpush1.bf16.msra.mxu0 0
        %3166 = vmatprep.subr.bf16.mxu0 0
        %3167 = vmatpush1.bf16.msra.mxu0 0
        %3168 = vmatprep.subr.bf16.mxu0 0
        %3169 = vmatpush1.bf16.msra.mxu0 0
        %3170 = vmatprep.subr.bf16.mxu0 0
        %3171 = vmatpush1.bf16.msra.mxu0 0
        %3172 = vmatprep.subr.bf16.mxu0 0
        %3173 = vmatpush1.bf16.msra.mxu0 0
        %3174 = vmatprep.subr.bf16.mxu0 0
        %3175 = vmatpush1.bf16.msra.mxu0 0
        %3176 = vmatprep.subr.bf16.mxu0 0
        %3177 = vmatpush1.bf16.msra.mxu0 0
        %3178 = vmatprep.subr.bf16.mxu0 0
        %3179 = vmatpush1.bf16.msra.mxu0 0
        %3180 = vmatprep.subr.bf16.mxu0 0
        %3181 = vmatpush1.bf16.msra.mxu0 0
        %3182 = vmatprep.mubr.bf16.mxu0 0
        %3183 = vmatmul.mubr.bf16.gmra.mrb[0].mxu0 %v3145
        %v3184 = vpop.f32.mrb[0].mxu0
        %v3185 = vadd.f32 0.0, %v3184
        %v3186 = vpop.f32.mrb[0].mxu0
        %v3187 = vpop.f32.mrb[0].mxu0
        %v3188 = vpop.f32.mrb[0].mxu0
        %3189 = vdwg.mxu0
        %v3191 = vsel %vm2637, %v3046, 0
        %v3194 = vsel %vm3054, %v3050, 0
        %3196 = vmatprep.subr.bf16.mxu0 0
        %3197 = vmatpush1.bf16.msra.mxu0 %v3194
        %3198 = vmatprep.subr.bf16.mxu0 0
        %3199 = vmatpush1.bf16.msra.mxu0 0
        %3200 = vmatprep.subr.bf16.mxu0 0
        %3201 = vmatpush1.bf16.msra.mxu0 0
        %3202 = vmatprep.subr.bf16.mxu0 0
        %3203 = vmatpush1.bf16.msra.mxu0 0
        %3204 = vmatprep.subr.bf16.mxu0 0
        %3205 = vmatpush1.bf16.msra.mxu0 0
        %3206 = vmatprep.subr.bf16.mxu0 0
        %3207 = vmatpush1.bf16.msra.mxu0 0
        %3208 = vmatprep.subr.bf16.mxu0 0
        %3209 = vmatpush1.bf16.msra.mxu0 0
        %3210 = vmatprep.subr.bf16.mxu0 0
        %3211 = vmatpush1.bf16.msra.mxu0 0
        %3212 = vmatprep.subr.bf16.mxu0 0
        %3213 = vmatpush1.bf16.msra.mxu0 0
        %3214 = vmatprep.subr.bf16.mxu0 0
        %3215 = vmatpush1.bf16.msra.mxu0 0
        %3216 = vmatprep.subr.bf16.mxu0 0
        %3217 = vmatpush1.bf16.msra.mxu0 0
        %3218 = vmatprep.subr.bf16.mxu0 0
        %3219 = vmatpush1.bf16.msra.mxu0 0
        %3220 = vmatprep.subr.bf16.mxu0 0
        %3221 = vmatpush1.bf16.msra.mxu0 0
        %3222 = vmatprep.subr.bf16.mxu0 0
        %3223 = vmatpush1.bf16.msra.mxu0 0
        %3224 = vmatprep.subr.bf16.mxu0 0
        %3225 = vmatpush1.bf16.msra.mxu0 0
        %3226 = vmatprep.subr.bf16.mxu0 0
        %3227 = vmatpush1.bf16.msra.mxu0 0
        %3228 = vmatprep.mubr.bf16.mxu0 0
        %3229 = vmatmul.mubr.bf16.gmra.mrb[0].mxu0 %v3191
        %v3230 = vpop.f32.mrb[0].mxu0
        %v3231 = vadd.f32 0.0, %v3230
        %v3232 = vpop.f32.mrb[0].mxu0
        %v3233 = vpop.f32.mrb[0].mxu0
        %v3234 = vpop.f32.mrb[0].mxu0
        %3235 = vdwg.mxu0
        %v3236 = vsel %vm2353, %v3093, 0.0
        %v3237 = vsel %vm2353, %v3139, 0.0
        %v3238 = vadd.f32 %v3236, %v3237
        %v3239 = vsel %vm2353, %v3185, 0.0
        %v3240 = vadd.f32 %v3238, %v3239
        %v3241 = vsel %vm2353, %v3231, 0.0
        %v3242 = vadd.f32 %v3240, %v3241
        %v3244 = vlaneseq
        %v3245 = vshrl.u32 %v3244, 7
        %v3246 = vsub.s32 0, %v3245
        %v3247 = vrot.slane %v777, %v3246
        %v3249 = vadd.f32 %v3242, %v3247
        %v3250 = vadd.f32 %v2352, %v3249
        %v3251 = vsel %vm2353, %v3250, 0.0
        %3252 = vadd.xlane.f32.xlu0 %v3251
        %v3253 = vpop.xlane.xlu0 %3252
        %v3254 = vmul.f32 %v3253, %v2357
        %v3255 = vsub.f32 %v3250, %v3254
        %v3256 = vmul.f32 %v3255, %v3255
        %v3257 = vsel %vm2353, %v3256, 0.0
        %3258 = vadd.xlane.f32.xlu0 %v3257
        %v3259 = vpop.xlane.xlu0 %3258
        %v3260 = vmul.f32 %v3259, %v2357
        %v3261 = vadd.f32 %v3260, 1e-05
        %v3262 = vrsqrt.pop %v3261
        %v3263 = vmul.f32 %v3255, %v3262
        %v3265 = vlaneseq
        %v3266 = vshrl.u32 %v3265, 7
        %v3267 = vsub.s32 0, %v3266
        %v3268 = vrot.slane %v773, %v3267
        %v3270 = vmul.f32 %v3263, %v3268
        %v3272 = vlaneseq
        %v3273 = vshrl.u32 %v3272, 7
        %v3274 = vsub.s32 0, %v3273
        %v3275 = vrot.slane %v774, %v3274
        %v3277 = vadd.f32 %v3270, %v3275
        %v3278 = vld [vmem:[#allocation4] sm:$0xff]
        %v3279 = vld [vmem:[#allocation4 + $0x8] sm:$0xff]
        %v3280 = vld [vmem:[#allocation4 + $0x10] sm:$0xff]
        %v3281 = vld [vmem:[#allocation4 + $0x18] sm:$0xff]
        %v3282 = vld [vmem:[#allocation4 + $0x20] sm:$0xff]
        %v3283 = vld [vmem:[#allocation4 + $0x28] sm:$0xff]
        %v3284 = vld [vmem:[#allocation4 + $0x30] sm:$0xff]
        %v3285 = vld [vmem:[#allocation4 + $0x38] sm:$0xff]
        %v3286 = vld [vmem:[#allocation4 + $0x40] sm:$0xff]
        %v3287 = vld [vmem:[#allocation4 + $0x48] sm:$0xff]
        %v3288 = vld [vmem:[#allocation4 + $0x50] sm:$0xff]
        %v3289 = vld [vmem:[#allocation4 + $0x58] sm:$0xff]
        %v3290 = vld [vmem:[#allocation4 + $0x60] sm:$0xff]
        %v3291 = vld [vmem:[#allocation4 + $0x68] sm:$0xff]
        %v3292 = vld [vmem:[#allocation4 + $0x70] sm:$0xff]
        %v3293 = vld [vmem:[#allocation4 + $0x78] sm:$0xff]
        %v3294 = vld [vmem:[#allocation4 + $0x80] sm:$0xff]
        %v3295 = vld [vmem:[#allocation4 + $0x88] sm:$0xff]
        %v3296 = vld [vmem:[#allocation4 + $0x90] sm:$0xff]
        %v3297 = vld [vmem:[#allocation4 + $0x98] sm:$0xff]
        %v3298 = vld [vmem:[#allocation4 + $0xa0] sm:$0xff]
        %v3299 = vld [vmem:[#allocation4 + $0xa8] sm:$0xff]
        %v3300 = vld [vmem:[#allocation4 + $0xb0] sm:$0xff]
        %v3301 = vld [vmem:[#allocation4 + $0xb8] sm:$0xff]
        %v3302 = vld [vmem:[#allocation4 + $0xc0] sm:$0xff]
        %v3303 = vld [vmem:[#allocation4 + $0xc8] sm:$0xff]
        %v3304 = vld [vmem:[#allocation4 + $0xd0] sm:$0xff]
        %v3305 = vld [vmem:[#allocation4 + $0xd8] sm:$0xff]
        %v3306 = vld [vmem:[#allocation4 + $0xe0] sm:$0xff]
        %v3307 = vld [vmem:[#allocation4 + $0xe8] sm:$0xff]
        %v3308 = vld [vmem:[#allocation4 + $0xf0] sm:$0xff]
        %v3309 = vld [vmem:[#allocation4 + $0xf8] sm:$0xff]
        %v3310 = vld [vmem:[#allocation5] sm:$0xff]
        %v3311 = vld [vmem:[#allocation5 + $0x8] sm:$0xff]
        %v3312 = vld [vmem:[#allocation5 + $0x10] sm:$0xff]
        %v3313 = vld [vmem:[#allocation5 + $0x18] sm:$0xff]
        %v3314 = vld [vmem:[#allocation5 + $0x20] sm:$0xff]
        %v3315 = vld [vmem:[#allocation5 + $0x28] sm:$0xff]
        %v3316 = vld [vmem:[#allocation5 + $0x30] sm:$0xff]
        %v3317 = vld [vmem:[#allocation5 + $0x38] sm:$0xff]
        %v3318 = vld [vmem:[#allocation5 + $0x40] sm:$0xff]
        %v3319 = vld [vmem:[#allocation5 + $0x48] sm:$0xff]
        %v3320 = vld [vmem:[#allocation5 + $0x50] sm:$0xff]
        %v3321 = vld [vmem:[#allocation5 + $0x58] sm:$0xff]
        %v3322 = vld [vmem:[#allocation5 + $0x60] sm:$0xff]
        %v3323 = vld [vmem:[#allocation5 + $0x68] sm:$0xff]
        %v3324 = vld [vmem:[#allocation5 + $0x70] sm:$0xff]
        %v3325 = vld [vmem:[#allocation5 + $0x78] sm:$0xff]
        %v3326 = vld [vmem:[#allocation5 + $0x80] sm:$0xff]
        %v3327 = vld [vmem:[#allocation5 + $0x88] sm:$0xff]
        %v3328 = vld [vmem:[#allocation5 + $0x90] sm:$0xff]
        %v3329 = vld [vmem:[#allocation5 + $0x98] sm:$0xff]
        %v3330 = vld [vmem:[#allocation5 + $0xa0] sm:$0xff]
        %v3331 = vld [vmem:[#allocation5 + $0xa8] sm:$0xff]
        %v3332 = vld [vmem:[#allocation5 + $0xb0] sm:$0xff]
        %v3333 = vld [vmem:[#allocation5 + $0xb8] sm:$0xff]
        %v3334 = vld [vmem:[#allocation5 + $0xc0] sm:$0xff]
        %v3335 = vld [vmem:[#allocation5 + $0xc8] sm:$0xff]
        %v3336 = vld [vmem:[#allocation5 + $0xd0] sm:$0xff]
        %v3337 = vld [vmem:[#allocation5 + $0xd8] sm:$0xff]
        %v3338 = vld [vmem:[#allocation5 + $0xe0] sm:$0xff]
        %v3339 = vld [vmem:[#allocation5 + $0xe8] sm:$0xff]
        %v3340 = vld [vmem:[#allocation5 + $0xf0] sm:$0xff]
        %v3341 = vld [vmem:[#allocation5 + $0xf8] sm:$0xff]
        %v3342 = vpack.c.bf16 %v3277, %v3277
        %v3343 = vld [vmem:[%s11] sm:$0xf]
        %v3344 = vld [vmem:[%s11 + $0x4] sm:$0xf]
        %v3345 = vld [vmem:[%s11 + $0x8] sm:$0xf]
        %v3346 = vld [vmem:[%s11 + $0xc] sm:$0xf]
        %v3351 = vunpack.c.l.b16 %v3343
        %v3352 = vunpack.c.l.b16 %v3344
        %v3353 = vunpack.c.l.b16 %v3345
        %v3354 = vunpack.c.l.b16 %v3346
        %v3355 = vpack.c.b16 %v3352, %v3351
        %v3356 = vpack.c.b16 %v3354, %v3353
        %v3360 = vsel %vm2353, %v3342, 0
        %3362 = vmatprep.subr.bf16.mxu0 0
        %3363 = vmatpush1.bf16.msra.mxu0 %v3355
        %3364 = vmatprep.subr.bf16.mxu0 0
        %3365 = vmatpush1.bf16.msra.mxu0 %v3356
        %3366 = vmatprep.subr.bf16.mxu0 0
        %3367 = vmatpush1.bf16.msra.mxu0 0
        %3368 = vmatprep.subr.bf16.mxu0 0
        %3369 = vmatpush1.bf16.msra.mxu0 0
        %3370 = vmatprep.subr.bf16.mxu0 0
        %3371 = vmatpush1.bf16.msra.mxu0 0
        %3372 = vmatprep.subr.bf16.mxu0 0
        %3373 = vmatpush1.bf16.msra.mxu0 0
        %3374 = vmatprep.subr.bf16.mxu0 0
        %3375 = vmatpush1.bf16.msra.mxu0 0
        %3376 = vmatprep.subr.bf16.mxu0 0
        %3377 = vmatpush1.bf16.msra.mxu0 0
        %3378 = vmatprep.subr.bf16.mxu0 0
        %3379 = vmatpush1.bf16.msra.mxu0 0
        %3380 = vmatprep.subr.bf16.mxu0 0
        %3381 = vmatpush1.bf16.msra.mxu0 0
        %3382 = vmatprep.subr.bf16.mxu0 0
        %3383 = vmatpush1.bf16.msra.mxu0 0
        %3384 = vmatprep.subr.bf16.mxu0 0
        %3385 = vmatpush1.bf16.msra.mxu0 0
        %3386 = vmatprep.subr.bf16.mxu0 0
        %3387 = vmatpush1.bf16.msra.mxu0 0
        %3388 = vmatprep.subr.bf16.mxu0 0
        %3389 = vmatpush1.bf16.msra.mxu0 0
        %3390 = vmatprep.subr.bf16.mxu0 0
        %3391 = vmatpush1.bf16.msra.mxu0 0
        %3392 = vmatprep.subr.bf16.mxu0 0
        %3393 = vmatpush1.bf16.msra.mxu0 0
        %3394 = vmatprep.mubr.bf16.mxu0 0
        %3395 = vmatmul.mubr.bf16.gmra.mrb[0].mxu0 %v3360
        %v3396 = vpop.f32.mrb[0].mxu0
        %v3397 = vadd.f32 0.0, %v3396
        %v3398 = vpop.f32.mrb[0].mxu0
        %v3399 = vpop.f32.mrb[0].mxu0
        %v3400 = vpop.f32.mrb[0].mxu0
        %3401 = vdwg.mxu0
        %v3402 = vpack.c.bf16 %v3397, %v3397
        %3403 = vst.msk [vmem:[#allocation6] sm:$0xf] %vm2451, %v3402
        %s3404 = scalar_lea.vmem %s11, 16
        %v3405 = vld [vmem:[%s3404] sm:$0xf]
        %v3406 = vld [vmem:[%s3404 + $0x4] sm:$0xf]
        %v3407 = vld [vmem:[%s3404 + $0x8] sm:$0xf]
        %v3408 = vld [vmem:[%s3404 + $0xc] sm:$0xf]
        %v3413 = vunpack.c.l.b16 %v3405
        %v3414 = vunpack.c.l.b16 %v3406
        %v3415 = vunpack.c.l.b16 %v3407
        %v3416 = vunpack.c.l.b16 %v3408
        %v3417 = vpack.c.b16 %v3414, %v3413
        %v3418 = vpack.c.b16 %v3416, %v3415
        %3421 = vmatprep.subr.bf16.mxu0 0
        %3422 = vmatpush1.bf16.msra.mxu0 %v3417
        %3423 = vmatprep.subr.bf16.mxu0 0
        %3424 = vmatpush1.bf16.msra.mxu0 %v3418
        %3425 = vmatprep.subr.bf16.mxu0 0
        %3426 = vmatpush1.bf16.msra.mxu0 0
        %3427 = vmatprep.subr.bf16.mxu0 0
        %3428 = vmatpush1.bf16.msra.mxu0 0
        %3429 = vmatprep.subr.bf16.mxu0 0
        %3430 = vmatpush1.bf16.msra.mxu0 0
        %3431 = vmatprep.subr.bf16.mxu0 0
        %3432 = vmatpush1.bf16.msra.mxu0 0
        %3433 = vmatprep.subr.bf16.mxu0 0
        %3434 = vmatpush1.bf16.msra.mxu0 0
        %3435 = vmatprep.subr.bf16.mxu0 0
        %3436 = vmatpush1.bf16.msra.mxu0 0
        %3437 = vmatprep.subr.bf16.mxu0 0
        %3438 = vmatpush1.bf16.msra.mxu0 0
        %3439 = vmatprep.subr.bf16.mxu0 0
        %3440 = vmatpush1.bf16.msra.mxu0 0
        %3441 = vmatprep.subr.bf16.mxu0 0
        %3442 = vmatpush1.bf16.msra.mxu0 0
        %3443 = vmatprep.subr.bf16.mxu0 0
        %3444 = vmatpush1.bf16.msra.mxu0 0
        %3445 = vmatprep.subr.bf16.mxu0 0
        %3446 = vmatpush1.bf16.msra.mxu0 0
        %3447 = vmatprep.subr.bf16.mxu0 0
        %3448 = vmatpush1.bf16.msra.mxu0 0
        %3449 = vmatprep.subr.bf16.mxu0 0
        %3450 = vmatpush1.bf16.msra.mxu0 0
        %3451 = vmatprep.subr.bf16.mxu0 0
        %3452 = vmatpush1.bf16.msra.mxu0 0
        %3453 = vmatprep.mubr.bf16.mxu0 0
        %3454 = vmatmul.mubr.bf16.gmra.mrb[0].mxu0 %v3360
        %v3455 = vpop.f32.mrb[0].mxu0
        %v3456 = vadd.f32 0.0, %v3455
        %v3457 = vpop.f32.mrb[0].mxu0
        %v3458 = vpop.f32.mrb[0].mxu0
        %v3459 = vpop.f32.mrb[0].mxu0
        %3460 = vdwg.mxu0
        %v3461 = vpack.c.bf16 %v3456, %v3456
        %3462 = vst.msk [vmem:[%s2511] sm:$0xf] %vm2451, %v3461
        %s3463 = scalar_lea.vmem %s11, 32
        %v3464 = vld [vmem:[%s3463] sm:$0xf]
        %v3465 = vld [vmem:[%s3463 + $0x4] sm:$0xf]
        %v3466 = vld [vmem:[%s3463 + $0x8] sm:$0xf]
        %v3467 = vld [vmem:[%s3463 + $0xc] sm:$0xf]
        %v3472 = vunpack.c.l.b16 %v3464
        %v3473 = vunpack.c.l.b16 %v3465
        %v3474 = vunpack.c.l.b16 %v3466
        %v3475 = vunpack.c.l.b16 %v3467
        %v3476 = vpack.c.b16 %v3473, %v3472
        %v3477 = vpack.c.b16 %v3475, %v3474
        %3480 = vmatprep.subr.bf16.mxu0 0
        %3481 = vmatpush1.bf16.msra.mxu0 %v3476
        %3482 = vmatprep.subr.bf16.mxu0 0
        %3483 = vmatpush1.bf16.msra.mxu0 %v3477
        %3484 = vmatprep.subr.bf16.mxu0 0
        %3485 = vmatpush1.bf16.msra.mxu0 0
        %3486 = vmatprep.subr.bf16.mxu0 0
        %3487 = vmatpush1.bf16.msra.mxu0 0
        %3488 = vmatprep.subr.bf16.mxu0 0
        %3489 = vmatpush1.bf16.msra.mxu0 0
        %3490 = vmatprep.subr.bf16.mxu0 0
        %3491 = vmatpush1.bf16.msra.mxu0 0
        %3492 = vmatprep.subr.bf16.mxu0 0
        %3493 = vmatpush1.bf16.msra.mxu0 0
        %3494 = vmatprep.subr.bf16.mxu0 0
        %3495 = vmatpush1.bf16.msra.mxu0 0
        %3496 = vmatprep.subr.bf16.mxu0 0
        %3497 = vmatpush1.bf16.msra.mxu0 0
        %3498 = vmatprep.subr.bf16.mxu0 0
        %3499 = vmatpush1.bf16.msra.mxu0 0
        %3500 = vmatprep.subr.bf16.mxu0 0
        %3501 = vmatpush1.bf16.msra.mxu0 0
        %3502 = vmatprep.subr.bf16.mxu0 0
        %3503 = vmatpush1.bf16.msra.mxu0 0
        %3504 = vmatprep.subr.bf16.mxu0 0
        %3505 = vmatpush1.bf16.msra.mxu0 0
        %3506 = vmatprep.subr.bf16.mxu0 0
        %3507 = vmatpush1.bf16.msra.mxu0 0
        %3508 = vmatprep.subr.bf16.mxu0 0
        %3509 = vmatpush1.bf16.msra.mxu0 0
        %3510 = vmatprep.subr.bf16.mxu0 0
        %3511 = vmatpush1.bf16.msra.mxu0 0
        %3512 = vmatprep.mubr.bf16.mxu0 0
        %3513 = vmatmul.mubr.bf16.gmra.mrb[0].mxu0 %v3360
        %v3514 = vpop.f32.mrb[0].mxu0
        %v3515 = vadd.f32 0.0, %v3514
        %v3516 = vpop.f32.mrb[0].mxu0
        %v3517 = vpop.f32.mrb[0].mxu0
        %v3518 = vpop.f32.mrb[0].mxu0
        %3519 = vdwg.mxu0
        %v3520 = vpack.c.bf16 %v3515, %v3515
        %3521 = vst.msk [vmem:[%s2571] sm:$0xf] %vm2451, %v3520
        %s3522 = scalar_lea.vmem %s11, 48
        %v3523 = vld [vmem:[%s3522] sm:$0xf]
        %v3524 = vld [vmem:[%s3522 + $0x4] sm:$0xf]
        %v3525 = vld [vmem:[%s3522 + $0x8] sm:$0xf]
        %v3526 = vld [vmem:[%s3522 + $0xc] sm:$0xf]
        %v3531 = vunpack.c.l.b16 %v3523
        %v3532 = vunpack.c.l.b16 %v3524
        %v3533 = vunpack.c.l.b16 %v3525
        %v3534 = vunpack.c.l.b16 %v3526
        %v3535 = vpack.c.b16 %v3532, %v3531
        %v3536 = vpack.c.b16 %v3534, %v3533
        %3539 = vmatprep.subr.bf16.mxu0 0
        %3540 = vmatpush1.bf16.msra.mxu0 %v3535
        %3541 = vmatprep.subr.bf16.mxu0 0
        %3542 = vmatpush1.bf16.msra.mxu0 %v3536
        %3543 = vmatprep.subr.bf16.mxu0 0
        %3544 = vmatpush1.bf16.msra.mxu0 0
        %3545 = vmatprep.subr.bf16.mxu0 0
        %3546 = vmatpush1.bf16.msra.mxu0 0
        %3547 = vmatprep.subr.bf16.mxu0 0
        %3548 = vmatpush1.bf16.msra.mxu0 0
        %3549 = vmatprep.subr.bf16.mxu0 0
        %3550 = vmatpush1.bf16.msra.mxu0 0
        %3551 = vmatprep.subr.bf16.mxu0 0
        %3552 = vmatpush1.bf16.msra.mxu0 0
        %3553 = vmatprep.subr.bf16.mxu0 0
        %3554 = vmatpush1.bf16.msra.mxu0 0
        %3555 = vmatprep.subr.bf16.mxu0 0
        %3556 = vmatpush1.bf16.msra.mxu0 0
        %3557 = vmatprep.subr.bf16.mxu0 0
        %3558 = vmatpush1.bf16.msra.mxu0 0
        %3559 = vmatprep.subr.bf16.mxu0 0
        %3560 = vmatpush1.bf16.msra.mxu0 0
        %3561 = vmatprep.subr.bf16.mxu0 0
        %3562 = vmatpush1.bf16.msra.mxu0 0
        %3563 = vmatprep.subr.bf16.mxu0 0
        %3564 = vmatpush1.bf16.msra.mxu0 0
        %3565 = vmatprep.subr.bf16.mxu0 0
        %3566 = vmatpush1.bf16.msra.mxu0 0
        %3567 = vmatprep.subr.bf16.mxu0 0
        %3568 = vmatpush1.bf16.msra.mxu0 0
        %3569 = vmatprep.subr.bf16.mxu0 0
        %3570 = vmatpush1.bf16.msra.mxu0 0
        %3571 = vmatprep.mubr.bf16.mxu0 0
        %3572 = vmatmul.mubr.bf16.gmra.mrb[0].mxu0 %v3360
        %v3573 = vpop.f32.mrb[0].mxu0
        %v3574 = vadd.f32 0.0, %v3573
        %v3575 = vpop.f32.mrb[0].mxu0
        %v3576 = vpop.f32.mrb[0].mxu0
        %v3577 = vpop.f32.mrb[0].mxu0
        %3578 = vdwg.mxu0
        %v3579 = vpack.c.bf16 %v3574, %v3574
        %3580 = vst.msk [vmem:[%s2631] sm:$0xf] %vm2451, %v3579
        %v3581 = vld [vmem:[#allocation6] sm:$0xf]
        %v3582 = vld [vmem:[#allocation6 + $0x4] sm:$0xf]
        %v3583 = vld [vmem:[#allocation6 + $0x8] sm:$0xf]
        %v3584 = vld [vmem:[#allocation6 + $0xc] sm:$0xf]
        %v3586 = vsel %vm2637, %v3581, 0
        %v3589 = vsel %vm2637, %v3278, 0
        %v3592 = vsel %vm2637, %v3279, 0
        %v3595 = vsel %vm2637, %v3280, 0
        %v3598 = vsel %vm2637, %v3281, 0
        %v3601 = vsel %vm2637, %v3282, 0
        %v3604 = vsel %vm2637, %v3283, 0
        %v3607 = vsel %vm2637, %v3284, 0
        %v3610 = vsel %vm2637, %v3285, 0
        %3612 = vmatprep.subr.bf16.mxu0 0
        %3613 = vmatpush1.bf16.xpose.msra.mxu0 %v3589
        %3614 = vmatprep.subr.bf16.mxu0 0
        %3615 = vmatpush1.bf16.xpose.msra.mxu0 %v3592
        %3616 = vmatprep.subr.bf16.mxu0 0
        %3617 = vmatpush1.bf16.xpose.msra.mxu0 %v3595
        %3618 = vmatprep.subr.bf16.mxu0 0
        %3619 = vmatpush1.bf16.xpose.msra.mxu0 %v3598
        %3620 = vmatprep.subr.bf16.mxu0 0
        %3621 = vmatpush1.bf16.xpose.msra.mxu0 %v3601
        %3622 = vmatprep.subr.bf16.mxu0 0
        %3623 = vmatpush1.bf16.xpose.msra.mxu0 %v3604
        %3624 = vmatprep.subr.bf16.mxu0 0
        %3625 = vmatpush1.bf16.xpose.msra.mxu0 %v3607
        %3626 = vmatprep.subr.bf16.mxu0 0
        %3627 = vmatpush1.bf16.xpose.msra.mxu0 %v3610
        %3628 = vmatprep.subr.bf16.mxu0 0
        %3629 = vmatpush1.bf16.xpose.msra.mxu0 0
        %3630 = vmatprep.subr.bf16.mxu0 0
        %3631 = vmatpush1.bf16.xpose.msra.mxu0 0
        %3632 = vmatprep.subr.bf16.mxu0 0
        %3633 = vmatpush1.bf16.xpose.msra.mxu0 0
        %3634 = vmatprep.subr.bf16.mxu0 0
        %3635 = vmatpush1.bf16.xpose.msra.mxu0 0
        %3636 = vmatprep.subr.bf16.mxu0 0
        %3637 = vmatpush1.bf16.xpose.msra.mxu0 0
        %3638 = vmatprep.subr.bf16.mxu0 0
        %3639 = vmatpush1.bf16.xpose.msra.mxu0 0
        %3640 = vmatprep.subr.bf16.mxu0 0
        %3641 = vmatpush1.bf16.xpose.msra.mxu0 0
        %3642 = vmatprep.subr.bf16.mxu0 0
        %3643 = vmatpush1.bf16.xpose.msra.mxu0 0
        %3644 = vmatprep.mubr.bf16.mxu0 0
        %3645 = vmatmul.mubr.bf16.gmra.mrb[0].mxu0 %v3586
        %v3646 = vpop.f32.mrb[0].mxu0
        %v3647 = vadd.f32 0.0, %v3646
        %v3648 = vpop.f32.mrb[0].mxu0
        %v3649 = vpop.f32.mrb[0].mxu0
        %v3650 = vpop.f32.mrb[0].mxu0
        %3651 = vdwg.mxu0
        %v3653 = vsel %vm2637, %v3582, 0
        %v3656 = vsel %vm2637, %v3286, 0
        %v3659 = vsel %vm2637, %v3287, 0
        %v3662 = vsel %vm2637, %v3288, 0
        %v3665 = vsel %vm2637, %v3289, 0
        %v3668 = vsel %vm2637, %v3290, 0
        %v3671 = vsel %vm2637, %v3291, 0
        %v3674 = vsel %vm2637, %v3292, 0
        %v3677 = vsel %vm2637, %v3293, 0
        %3679 = vmatprep.subr.bf16.mxu0 0
        %3680 = vmatpush1.bf16.xpose.msra.mxu0 %v3656
        %3681 = vmatprep.subr.bf16.mxu0 0
        %3682 = vmatpush1.bf16.xpose.msra.mxu0 %v3659
        %3683 = vmatprep.subr.bf16.mxu0 0
        %3684 = vmatpush1.bf16.xpose.msra.mxu0 %v3662
        %3685 = vmatprep.subr.bf16.mxu0 0
        %3686 = vmatpush1.bf16.xpose.msra.mxu0 %v3665
        %3687 = vmatprep.subr.bf16.mxu0 0
        %3688 = vmatpush1.bf16.xpose.msra.mxu0 %v3668
        %3689 = vmatprep.subr.bf16.mxu0 0
        %3690 = vmatpush1.bf16.xpose.msra.mxu0 %v3671
        %3691 = vmatprep.subr.bf16.mxu0 0
        %3692 = vmatpush1.bf16.xpose.msra.mxu0 %v3674
        %3693 = vmatprep.subr.bf16.mxu0 0
        %3694 = vmatpush1.bf16.xpose.msra.mxu0 %v3677
        %3695 = vmatprep.subr.bf16.mxu0 0
        %3696 = vmatpush1.bf16.xpose.msra.mxu0 0
        %3697 = vmatprep.subr.bf16.mxu0 0
        %3698 = vmatpush1.bf16.xpose.msra.mxu0 0
        %3699 = vmatprep.subr.bf16.mxu0 0
        %3700 = vmatpush1.bf16.xpose.msra.mxu0 0
        %3701 = vmatprep.subr.bf16.mxu0 0
        %3702 = vmatpush1.bf16.xpose.msra.mxu0 0
        %3703 = vmatprep.subr.bf16.mxu0 0
        %3704 = vmatpush1.bf16.xpose.msra.mxu0 0
        %3705 = vmatprep.subr.bf16.mxu0 0
        %3706 = vmatpush1.bf16.xpose.msra.mxu0 0
        %3707 = vmatprep.subr.bf16.mxu0 0
        %3708 = vmatpush1.bf16.xpose.msra.mxu0 0
        %3709 = vmatprep.subr.bf16.mxu0 0
        %3710 = vmatpush1.bf16.xpose.msra.mxu0 0
        %3711 = vmatprep.mubr.bf16.mxu0 0
        %3712 = vmatmul.mubr.bf16.gmra.mrb[0].mxu0 %v3653
        %v3713 = vpop.f32.mrb[0].mxu0
        %v3714 = vadd.f32 0.0, %v3713
        %v3715 = vpop.f32.mrb[0].mxu0
        %v3716 = vpop.f32.mrb[0].mxu0
        %v3717 = vpop.f32.mrb[0].mxu0
        %3718 = vdwg.mxu0
        %v3720 = vsel %vm2637, %v3583, 0
        %v3723 = vsel %vm2637, %v3294, 0
        %v3726 = vsel %vm2637, %v3295, 0
        %v3729 = vsel %vm2637, %v3296, 0
        %v3732 = vsel %vm2637, %v3297, 0
        %v3735 = vsel %vm2637, %v3298, 0
        %v3738 = vsel %vm2637, %v3299, 0
        %v3741 = vsel %vm2637, %v3300, 0
        %v3744 = vsel %vm2637, %v3301, 0
        %3746 = vmatprep.subr.bf16.mxu0 0
        %3747 = vmatpush1.bf16.xpose.msra.mxu0 %v3723
        %3748 = vmatprep.subr.bf16.mxu0 0
        %3749 = vmatpush1.bf16.xpose.msra.mxu0 %v3726
        %3750 = vmatprep.subr.bf16.mxu0 0
        %3751 = vmatpush1.bf16.xpose.msra.mxu0 %v3729
        %3752 = vmatprep.subr.bf16.mxu0 0
        %3753 = vmatpush1.bf16.xpose.msra.mxu0 %v3732
        %3754 = vmatprep.subr.bf16.mxu0 0
        %3755 = vmatpush1.bf16.xpose.msra.mxu0 %v3735
        %3756 = vmatprep.subr.bf16.mxu0 0
        %3757 = vmatpush1.bf16.xpose.msra.mxu0 %v3738
        %3758 = vmatprep.subr.bf16.mxu0 0
        %3759 = vmatpush1.bf16.xpose.msra.mxu0 %v3741
        %3760 = vmatprep.subr.bf16.mxu0 0
        %3761 = vmatpush1.bf16.xpose.msra.mxu0 %v3744
        %3762 = vmatprep.subr.bf16.mxu0 0
        %3763 = vmatpush1.bf16.xpose.msra.mxu0 0
        %3764 = vmatprep.subr.bf16.mxu0 0
        %3765 = vmatpush1.bf16.xpose.msra.mxu0 0
        %3766 = vmatprep.subr.bf16.mxu0 0
        %3767 = vmatpush1.bf16.xpose.msra.mxu0 0
        %3768 = vmatprep.subr.bf16.mxu0 0
        %3769 = vmatpush1.bf16.xpose.msra.mxu0 0
        %3770 = vmatprep.subr.bf16.mxu0 0
        %3771 = vmatpush1.bf16.xpose.msra.mxu0 0
        %3772 = vmatprep.subr.bf16.mxu0 0
        %3773 = vmatpush1.bf16.xpose.msra.mxu0 0
        %3774 = vmatprep.subr.bf16.mxu0 0
        %3775 = vmatpush1.bf16.xpose.msra.mxu0 0
        %3776 = vmatprep.subr.bf16.mxu0 0
        %3777 = vmatpush1.bf16.xpose.msra.mxu0 0
        %3778 = vmatprep.mubr.bf16.mxu0 0
        %3779 = vmatmul.mubr.bf16.gmra.mrb[0].mxu0 %v3720
        %v3780 = vpop.f32.mrb[0].mxu0
        %v3781 = vadd.f32 0.0, %v3780
        %v3782 = vpop.f32.mrb[0].mxu0
        %v3783 = vpop.f32.mrb[0].mxu0
        %v3784 = vpop.f32.mrb[0].mxu0
        %3785 = vdwg.mxu0
        %v3787 = vsel %vm2637, %v3584, 0
        %v3790 = vsel %vm2637, %v3302, 0
        %v3793 = vsel %vm2637, %v3303, 0
        %v3796 = vsel %vm2637, %v3304, 0
        %v3799 = vsel %vm2637, %v3305, 0
        %v3802 = vsel %vm2637, %v3306, 0
        %v3805 = vsel %vm2637, %v3307, 0
        %v3808 = vsel %vm2637, %v3308, 0
        %v3811 = vsel %vm2637, %v3309, 0
        %3813 = vmatprep.subr.bf16.mxu0 0
        %3814 = vmatpush1.bf16.xpose.msra.mxu0 %v3790
        %3815 = vmatprep.subr.bf16.mxu0 0
        %3816 = vmatpush1.bf16.xpose.msra.mxu0 %v3793
        %3817 = vmatprep.subr.bf16.mxu0 0
        %3818 = vmatpush1.bf16.xpose.msra.mxu0 %v3796
        %3819 = vmatprep.subr.bf16.mxu0 0
        %3820 = vmatpush1.bf16.xpose.msra.mxu0 %v3799
        %3821 = vmatprep.subr.bf16.mxu0 0
        %3822 = vmatpush1.bf16.xpose.msra.mxu0 %v3802
        %3823 = vmatprep.subr.bf16.mxu0 0
        %3824 = vmatpush1.bf16.xpose.msra.mxu0 %v3805
        %3825 = vmatprep.subr.bf16.mxu0 0
        %3826 = vmatpush1.bf16.xpose.msra.mxu0 %v3808
        %3827 = vmatprep.subr.bf16.mxu0 0
        %3828 = vmatpush1.bf16.xpose.msra.mxu0 %v3811
        %3829 = vmatprep.subr.bf16.mxu0 0
        %3830 = vmatpush1.bf16.xpose.msra.mxu0 0
        %3831 = vmatprep.subr.bf16.mxu0 0
        %3832 = vmatpush1.bf16.xpose.msra.mxu0 0
        %3833 = vmatprep.subr.bf16.mxu0 0
        %3834 = vmatpush1.bf16.xpose.msra.mxu0 0
        %3835 = vmatprep.subr.bf16.mxu0 0
        %3836 = vmatpush1.bf16.xpose.msra.mxu0 0
        %3837 = vmatprep.subr.bf16.mxu0 0
        %3838 = vmatpush1.bf16.xpose.msra.mxu0 0
        %3839 = vmatprep.subr.bf16.mxu0 0
        %3840 = vmatpush1.bf16.xpose.msra.mxu0 0
        %3841 = vmatprep.subr.bf16.mxu0 0
        %3842 = vmatpush1.bf16.xpose.msra.mxu0 0
        %3843 = vmatprep.subr.bf16.mxu0 0
        %3844 = vmatpush1.bf16.xpose.msra.mxu0 0
        %3845 = vmatprep.mubr.bf16.mxu0 0
        %3846 = vmatmul.mubr.bf16.gmra.mrb[0].mxu0 %v3787
        %v3847 = vpop.f32.mrb[0].mxu0
        %v3848 = vadd.f32 0.0, %v3847
        %v3849 = vpop.f32.mrb[0].mxu0
        %v3850 = vpop.f32.mrb[0].mxu0
        %v3851 = vpop.f32.mrb[0].mxu0
        %3852 = vdwg.mxu0
        %v3853 = vlaneseq
        %v3854 = vand.u32 %v3853, 127
        %vm3855 = vcmp.lt.s32.totalorder %v3854, 8
        %v3856 = vsel %vm3855, %v3647, -1e+30
        %v3857 = vsel %vm3855, %v3714, -1e+30
        %v3858 = vsel %vm3855, %v3781, -1e+30
        %v3859 = vsel %vm3855, %v3848, -1e+30
        %3860 = vmax.xlane.f32.xlu0 %v3856
        %v3861 = vpop.xlane.xlu0 %3860
        %3862 = vmax.xlane.f32.xlu0 %v3857
        %v3863 = vpop.xlane.xlu0 %3862
        %3864 = vmax.xlane.f32.xlu0 %v3858
        %v3865 = vpop.xlane.xlu0 %3864
        %3866 = vmax.xlane.f32.xlu0 %v3859
        %v3867 = vpop.xlane.xlu0 %3866
        %v3868 = vsub.f32 %v3856, %v3861
        %v3869 = vsub.f32 %v3857, %v3863
        %v3870 = vsub.f32 %v3858, %v3865
        %v3871 = vsub.f32 %v3859, %v3867
        %v3872 = vmul.f32 %v3868, 1.442695
        %v3873 = vpow.pop %v3872
        %v3874 = vmul.f32 %v3869, 1.442695
        %v3875 = vpow.pop %v3874
        %v3876 = vmul.f32 %v3870, 1.442695
        %v3877 = vpow.pop %v3876
        %v3878 = vmul.f32 %v3871, 1.442695
        %v3879 = vpow.pop %v3878
        %3880 = vadd.xlane.f32.xlu0 %v3873
        %v3881 = vpop.xlane.xlu0 %3880
        %3882 = vadd.xlane.f32.xlu0 %v3875
        %v3883 = vpop.xlane.xlu0 %3882
        %3884 = vadd.xlane.f32.xlu0 %v3877
        %v3885 = vpop.xlane.xlu0 %3884
        %3886 = vadd.xlane.f32.xlu0 %v3879
        %v3887 = vpop.xlane.xlu0 %3886
        %v3888 = vpack.c.bf16 %v3873, %v3873
        %v3889 = vpack.c.bf16 %v3875, %v3875
        %v3890 = vpack.c.bf16 %v3877, %v3877
        %v3891 = vpack.c.bf16 %v3879, %v3879
        %3892 = vmatprep.subr.bf16.mxu0 0
        %3893 = vmatpush1.bf16.msra.mxu0 %v3310
        %3894 = vmatprep.subr.bf16.mxu0 0
        %3895 = vmatpush1.bf16.msra.mxu0 %v3311
        %3896 = vmatprep.subr.bf16.mxu0 0
        %3897 = vmatpush1.bf16.msra.mxu0 %v3312
        %3898 = vmatprep.subr.bf16.mxu0 0
        %3899 = vmatpush1.bf16.msra.mxu0 %v3313
        %3900 = vmatprep.subr.bf16.mxu0 0
        %3901 = vmatpush1.bf16.msra.mxu0 %v3314
        %3902 = vmatprep.subr.bf16.mxu0 0
        %3903 = vmatpush1.bf16.msra.mxu0 %v3315
        %3904 = vmatprep.subr.bf16.mxu0 0
        %3905 = vmatpush1.bf16.msra.mxu0 %v3316
        %3906 = vmatprep.subr.bf16.mxu0 0
        %3907 = vmatpush1.bf16.msra.mxu0 %v3317
        %3908 = vmatprep.subr.bf16.mxu0 0
        %3909 = vmatpush1.bf16.msra.mxu0 0
        %3910 = vmatprep.subr.bf16.mxu0 0
        %3911 = vmatpush1.bf16.msra.mxu0 0
        %3912 = vmatprep.subr.bf16.mxu0 0
        %3913 = vmatpush1.bf16.msra.mxu0 0
        %3914 = vmatprep.subr.bf16.mxu0 0
        %3915 = vmatpush1.bf16.msra.mxu0 0
        %3916 = vmatprep.subr.bf16.mxu0 0
        %3917 = vmatpush1.bf16.msra.mxu0 0
        %3918 = vmatprep.subr.bf16.mxu0 0
        %3919 = vmatpush1.bf16.msra.mxu0 0
        %3920 = vmatprep.subr.bf16.mxu0 0
        %3921 = vmatpush1.bf16.msra.mxu0 0
        %3922 = vmatprep.subr.bf16.mxu0 0
        %3923 = vmatpush1.bf16.msra.mxu0 0
        %3924 = vmatprep.mubr.bf16.mxu0 0
        %3925 = vmatmul.mubr.bf16.gmra.mrb[0].mxu0 %v3888
        %v3926 = vpop.f32.mrb[0].mxu0
        %v3927 = vadd.f32 0.0, %v3926
        %v3928 = vpop.f32.mrb[0].mxu0
        %v3929 = vpop.f32.mrb[0].mxu0
        %v3930 = vpop.f32.mrb[0].mxu0
        %3931 = vdwg.mxu0
        %3932 = vmatprep.subr.bf16.mxu0 0
        %3933 = vmatpush1.bf16.msra.mxu0 %v3318
        %3934 = vmatprep.subr.bf16.mxu0 0
        %3935 = vmatpush1.bf16.msra.mxu0 %v3319
        %3936 = vmatprep.subr.bf16.mxu0 0
        %3937 = vmatpush1.bf16.msra.mxu0 %v3320
        %3938 = vmatprep.subr.bf16.mxu0 0
        %3939 = vmatpush1.bf16.msra.mxu0 %v3321
        %3940 = vmatprep.subr.bf16.mxu0 0
        %3941 = vmatpush1.bf16.msra.mxu0 %v3322
        %3942 = vmatprep.subr.bf16.mxu0 0
        %3943 = vmatpush1.bf16.msra.mxu0 %v3323
        %3944 = vmatprep.subr.bf16.mxu0 0
        %3945 = vmatpush1.bf16.msra.mxu0 %v3324
        %3946 = vmatprep.subr.bf16.mxu0 0
        %3947 = vmatpush1.bf16.msra.mxu0 %v3325
        %3948 = vmatprep.subr.bf16.mxu0 0
        %3949 = vmatpush1.bf16.msra.mxu0 0
        %3950 = vmatprep.subr.bf16.mxu0 0
        %3951 = vmatpush1.bf16.msra.mxu0 0
        %3952 = vmatprep.subr.bf16.mxu0 0
        %3953 = vmatpush1.bf16.msra.mxu0 0
        %3954 = vmatprep.subr.bf16.mxu0 0
        %3955 = vmatpush1.bf16.msra.mxu0 0
        %3956 = vmatprep.subr.bf16.mxu0 0
        %3957 = vmatpush1.bf16.msra.mxu0 0
        %3958 = vmatprep.subr.bf16.mxu0 0
        %3959 = vmatpush1.bf16.msra.mxu0 0
        %3960 = vmatprep.subr.bf16.mxu0 0
        %3961 = vmatpush1.bf16.msra.mxu0 0
        %3962 = vmatprep.subr.bf16.mxu0 0
        %3963 = vmatpush1.bf16.msra.mxu0 0
        %3964 = vmatprep.mubr.bf16.mxu0 0
        %3965 = vmatmul.mubr.bf16.gmra.mrb[0].mxu0 %v3889
        %v3966 = vpop.f32.mrb[0].mxu0
        %v3967 = vadd.f32 0.0, %v3966
        %v3968 = vpop.f32.mrb[0].mxu0
        %v3969 = vpop.f32.mrb[0].mxu0
        %v3970 = vpop.f32.mrb[0].mxu0
        %3971 = vdwg.mxu0
        %3972 = vmatprep.subr.bf16.mxu0 0
        %3973 = vmatpush1.bf16.msra.mxu0 %v3326
        %3974 = vmatprep.subr.bf16.mxu0 0
        %3975 = vmatpush1.bf16.msra.mxu0 %v3327
        %3976 = vmatprep.subr.bf16.mxu0 0
        %3977 = vmatpush1.bf16.msra.mxu0 %v3328
        %3978 = vmatprep.subr.bf16.mxu0 0
        %3979 = vmatpush1.bf16.msra.mxu0 %v3329
        %3980 = vmatprep.subr.bf16.mxu0 0
        %3981 = vmatpush1.bf16.msra.mxu0 %v3330
        %3982 = vmatprep.subr.bf16.mxu0 0
        %3983 = vmatpush1.bf16.msra.mxu0 %v3331
        %3984 = vmatprep.subr.bf16.mxu0 0
        %3985 = vmatpush1.bf16.msra.mxu0 %v3332
        %3986 = vmatprep.subr.bf16.mxu0 0
        %3987 = vmatpush1.bf16.msra.mxu0 %v3333
        %3988 = vmatprep.subr.bf16.mxu0 0
        %3989 = vmatpush1.bf16.msra.mxu0 0
        %3990 = vmatprep.subr.bf16.mxu0 0
        %3991 = vmatpush1.bf16.msra.mxu0 0
        %3992 = vmatprep.subr.bf16.mxu0 0
        %3993 = vmatpush1.bf16.msra.mxu0 0
        %3994 = vmatprep.subr.bf16.mxu0 0
        %3995 = vmatpush1.bf16.msra.mxu0 0
        %3996 = vmatprep.subr.bf16.mxu0 0
        %3997 = vmatpush1.bf16.msra.mxu0 0
        %3998 = vmatprep.subr.bf16.mxu0 0
        %3999 = vmatpush1.bf16.msra.mxu0 0
        %4000 = vmatprep.subr.bf16.mxu0 0
        %4001 = vmatpush1.bf16.msra.mxu0 0
        %4002 = vmatprep.subr.bf16.mxu0 0
        %4003 = vmatpush1.bf16.msra.mxu0 0
        %4004 = vmatprep.mubr.bf16.mxu0 0
        %4005 = vmatmul.mubr.bf16.gmra.mrb[0].mxu0 %v3890
        %v4006 = vpop.f32.mrb[0].mxu0
        %v4007 = vadd.f32 0.0, %v4006
        %v4008 = vpop.f32.mrb[0].mxu0
        %v4009 = vpop.f32.mrb[0].mxu0
        %v4010 = vpop.f32.mrb[0].mxu0
        %4011 = vdwg.mxu0
        %4012 = vmatprep.subr.bf16.mxu0 0
        %4013 = vmatpush1.bf16.msra.mxu0 %v3334
        %4014 = vmatprep.subr.bf16.mxu0 0
        %4015 = vmatpush1.bf16.msra.mxu0 %v3335
        %4016 = vmatprep.subr.bf16.mxu0 0
        %4017 = vmatpush1.bf16.msra.mxu0 %v3336
        %4018 = vmatprep.subr.bf16.mxu0 0
        %4019 = vmatpush1.bf16.msra.mxu0 %v3337
        %4020 = vmatprep.subr.bf16.mxu0 0
        %4021 = vmatpush1.bf16.msra.mxu0 %v3338
        %4022 = vmatprep.subr.bf16.mxu0 0
        %4023 = vmatpush1.bf16.msra.mxu0 %v3339
        %4024 = vmatprep.subr.bf16.mxu0 0
        %4025 = vmatpush1.bf16.msra.mxu0 %v3340
        %4026 = vmatprep.subr.bf16.mxu0 0
        %4027 = vmatpush1.bf16.msra.mxu0 %v3341
        %4028 = vmatprep.subr.bf16.mxu0 0
        %4029 = vmatpush1.bf16.msra.mxu0 0
        %4030 = vmatprep.subr.bf16.mxu0 0
        %4031 = vmatpush1.bf16.msra.mxu0 0
        %4032 = vmatprep.subr.bf16.mxu0 0
        %4033 = vmatpush1.bf16.msra.mxu0 0
        %4034 = vmatprep.subr.bf16.mxu0 0
        %4035 = vmatpush1.bf16.msra.mxu0 0
        %4036 = vmatprep.subr.bf16.mxu0 0
        %4037 = vmatpush1.bf16.msra.mxu0 0
        %4038 = vmatprep.subr.bf16.mxu0 0
        %4039 = vmatpush1.bf16.msra.mxu0 0
        %4040 = vmatprep.subr.bf16.mxu0 0
        %4041 = vmatpush1.bf16.msra.mxu0 0
        %4042 = vmatprep.subr.bf16.mxu0 0
        %4043 = vmatpush1.bf16.msra.mxu0 0
        %4044 = vmatprep.mubr.bf16.mxu0 0
        %4045 = vmatmul.mubr.bf16.gmra.mrb[0].mxu0 %v3891
        %v4046 = vpop.f32.mrb[0].mxu0
        %v4047 = vadd.f32 0.0, %v4046
        %v4048 = vpop.f32.mrb[0].mxu0
        %v4049 = vpop.f32.mrb[0].mxu0
        %v4050 = vpop.f32.mrb[0].mxu0
        %4051 = vdwg.mxu0
        %v4052 = vrcp.pop %v3881
        %v4053 = vrcp.pop %v3883
        %v4054 = vrcp.pop %v3885
        %v4055 = vrcp.pop %v3887
        %v4056 = vmul.f32 %v3927, %v4052
        %v4057 = vmul.f32 %v3967, %v4053
        %v4058 = vmul.f32 %v4007, %v4054
        %v4059 = vmul.f32 %v4047, %v4055
        %v4060 = vpack.c.bf16 %v4056, %v4056
        %v4061 = vpack.c.bf16 %v4057, %v4057
        %v4062 = vpack.c.bf16 %v4058, %v4058
        %v4063 = vpack.c.bf16 %v4059, %v4059
        %v4064 = vld [vmem:[%s14] sm:$0xf]
        %v4065 = vld [vmem:[%s14 + $0x4] sm:$0xf]
        %v4066 = vld [vmem:[%s14 + $0x8] sm:$0xf]
        %v4067 = vld [vmem:[%s14 + $0xc] sm:$0xf]
        %v4069 = vsel %vm2637, %v4060, 0
        %v4072 = vsel %vm3054, %v4064, 0
        %4074 = vmatprep.subr.bf16.mxu0 0
        %4075 = vmatpush1.bf16.msra.mxu0 %v4072
        %4076 = vmatprep.subr.bf16.mxu0 0
        %4077 = vmatpush1.bf16.msra.mxu0 0
        %4078 = vmatprep.subr.bf16.mxu0 0
        %4079 = vmatpush1.bf16.msra.mxu0 0
        %4080 = vmatprep.subr.bf16.mxu0 0
        %4081 = vmatpush1.bf16.msra.mxu0 0
        %4082 = vmatprep.subr.bf16.mxu0 0
        %4083 = vmatpush1.bf16.msra.mxu0 0
        %4084 = vmatprep.subr.bf16.mxu0 0
        %4085 = vmatpush1.bf16.msra.mxu0 0
        %4086 = vmatprep.subr.bf16.mxu0 0
        %4087 = vmatpush1.bf16.msra.mxu0 0
        %4088 = vmatprep.subr.bf16.mxu0 0
        %4089 = vmatpush1.bf16.msra.mxu0 0
        %4090 = vmatprep.subr.bf16.mxu0 0
        %4091 = vmatpush1.bf16.msra.mxu0 0
        %4092 = vmatprep.subr.bf16.mxu0 0
        %4093 = vmatpush1.bf16.msra.mxu0 0
        %4094 = vmatprep.subr.bf16.mxu0 0
        %4095 = vmatpush1.bf16.msra.mxu0 0
        %4096 = vmatprep.subr.bf16.mxu0 0
        %4097 = vmatpush1.bf16.msra.mxu0 0
        %4098 = vmatprep.subr.bf16.mxu0 0
        %4099 = vmatpush1.bf16.msra.mxu0 0
        %4100 = vmatprep.subr.bf16.mxu0 0
        %4101 = vmatpush1.bf16.msra.mxu0 0
        %4102 = vmatprep.subr.bf16.mxu0 0
        %4103 = vmatpush1.bf16.msra.mxu0 0
        %4104 = vmatprep.subr.bf16.mxu0 0
        %4105 = vmatpush1.bf16.msra.mxu0 0
        %4106 = vmatprep.mubr.bf16.mxu0 0
        %4107 = vmatmul.mubr.bf16.gmra.mrb[0].mxu0 %v4069
        %v4108 = vpop.f32.mrb[0].mxu0
        %v4109 = vadd.f32 0.0, %v4108
        %v4110 = vpop.f32.mrb[0].mxu0
        %v4111 = vpop.f32.mrb[0].mxu0
        %v4112 = vpop.f32.mrb[0].mxu0
        %4113 = vdwg.mxu0
        %v4115 = vsel %vm2637, %v4061, 0
        %v4118 = vsel %vm3054, %v4065, 0
        %4120 = vmatprep.subr.bf16.mxu0 0
        %4121 = vmatpush1.bf16.msra.mxu0 %v4118
        %4122 = vmatprep.subr.bf16.mxu0 0
        %4123 = vmatpush1.bf16.msra.mxu0 0
        %4124 = vmatprep.subr.bf16.mxu0 0
        %4125 = vmatpush1.bf16.msra.mxu0 0
        %4126 = vmatprep.subr.bf16.mxu0 0
        %4127 = vmatpush1.bf16.msra.mxu0 0
        %4128 = vmatprep.subr.bf16.mxu0 0
        %4129 = vmatpush1.bf16.msra.mxu0 0
        %4130 = vmatprep.subr.bf16.mxu0 0
        %4131 = vmatpush1.bf16.msra.mxu0 0
        %4132 = vmatprep.subr.bf16.mxu0 0
        %4133 = vmatpush1.bf16.msra.mxu0 0
        %4134 = vmatprep.subr.bf16.mxu0 0
        %4135 = vmatpush1.bf16.msra.mxu0 0
        %4136 = vmatprep.subr.bf16.mxu0 0
        %4137 = vmatpush1.bf16.msra.mxu0 0
        %4138 = vmatprep.subr.bf16.mxu0 0
        %4139 = vmatpush1.bf16.msra.mxu0 0
        %4140 = vmatprep.subr.bf16.mxu0 0
        %4141 = vmatpush1.bf16.msra.mxu0 0
        %4142 = vmatprep.subr.bf16.mxu0 0
        %4143 = vmatpush1.bf16.msra.mxu0 0
        %4144 = vmatprep.subr.bf16.mxu0 0
        %4145 = vmatpush1.bf16.msra.mxu0 0
        %4146 = vmatprep.subr.bf16.mxu0 0
        %4147 = vmatpush1.bf16.msra.mxu0 0
        %4148 = vmatprep.subr.bf16.mxu0 0
        %4149 = vmatpush1.bf16.msra.mxu0 0
        %4150 = vmatprep.subr.bf16.mxu0 0
        %4151 = vmatpush1.bf16.msra.mxu0 0
        %4152 = vmatprep.mubr.bf16.mxu0 0
        %4153 = vmatmul.mubr.bf16.gmra.mrb[0].mxu0 %v4115
        %v4154 = vpop.f32.mrb[0].mxu0
        %v4155 = vadd.f32 0.0, %v4154
        %v4156 = vpop.f32.mrb[0].mxu0
        %v4157 = vpop.f32.mrb[0].mxu0
        %v4158 = vpop.f32.mrb[0].mxu0
        %4159 = vdwg.mxu0
        %v4161 = vsel %vm2637, %v4062, 0
        %v4164 = vsel %vm3054, %v4066, 0
        %4166 = vmatprep.subr.bf16.mxu0 0
        %4167 = vmatpush1.bf16.msra.mxu0 %v4164
        %4168 = vmatprep.subr.bf16.mxu0 0
        %4169 = vmatpush1.bf16.msra.mxu0 0
        %4170 = vmatprep.subr.bf16.mxu0 0
        %4171 = vmatpush1.bf16.msra.mxu0 0
        %4172 = vmatprep.subr.bf16.mxu0 0
        %4173 = vmatpush1.bf16.msra.mxu0 0
        %4174 = vmatprep.subr.bf16.mxu0 0
        %4175 = vmatpush1.bf16.msra.mxu0 0
        %4176 = vmatprep.subr.bf16.mxu0 0
        %4177 = vmatpush1.bf16.msra.mxu0 0
        %4178 = vmatprep.subr.bf16.mxu0 0
        %4179 = vmatpush1.bf16.msra.mxu0 0
        %4180 = vmatprep.subr.bf16.mxu0 0
        %4181 = vmatpush1.bf16.msra.mxu0 0
        %4182 = vmatprep.subr.bf16.mxu0 0
        %4183 = vmatpush1.bf16.msra.mxu0 0
        %4184 = vmatprep.subr.bf16.mxu0 0
        %4185 = vmatpush1.bf16.msra.mxu0 0
        %4186 = vmatprep.subr.bf16.mxu0 0
        %4187 = vmatpush1.bf16.msra.mxu0 0
        %4188 = vmatprep.subr.bf16.mxu0 0
        %4189 = vmatpush1.bf16.msra.mxu0 0
        %4190 = vmatprep.subr.bf16.mxu0 0
        %4191 = vmatpush1.bf16.msra.mxu0 0
        %4192 = vmatprep.subr.bf16.mxu0 0
        %4193 = vmatpush1.bf16.msra.mxu0 0
        %4194 = vmatprep.subr.bf16.mxu0 0
        %4195 = vmatpush1.bf16.msra.mxu0 0
        %4196 = vmatprep.subr.bf16.mxu0 0
        %4197 = vmatpush1.bf16.msra.mxu0 0
        %4198 = vmatprep.mubr.bf16.mxu0 0
        %4199 = vmatmul.mubr.bf16.gmra.mrb[0].mxu0 %v4161
        %v4200 = vpop.f32.mrb[0].mxu0
        %v4201 = vadd.f32 0.0, %v4200
        %v4202 = vpop.f32.mrb[0].mxu0
        %v4203 = vpop.f32.mrb[0].mxu0
        %v4204 = vpop.f32.mrb[0].mxu0
        %4205 = vdwg.mxu0
        %v4207 = vsel %vm2637, %v4063, 0
        %v4210 = vsel %vm3054, %v4067, 0
        %4212 = vmatprep.subr.bf16.mxu0 0
        %4213 = vmatpush1.bf16.msra.mxu0 %v4210
        %4214 = vmatprep.subr.bf16.mxu0 0
        %4215 = vmatpush1.bf16.msra.mxu0 0
        %4216 = vmatprep.subr.bf16.mxu0 0
        %4217 = vmatpush1.bf16.msra.mxu0 0
        %4218 = vmatprep.subr.bf16.mxu0 0
        %4219 = vmatpush1.bf16.msra.mxu0 0
        %4220 = vmatprep.subr.bf16.mxu0 0
        %4221 = vmatpush1.bf16.msra.mxu0 0
        %4222 = vmatprep.subr.bf16.mxu0 0
        %4223 = vmatpush1.bf16.msra.mxu0 0
        %4224 = vmatprep.subr.bf16.mxu0 0
        %4225 = vmatpush1.bf16.msra.mxu0 0
        %4226 = vmatprep.subr.bf16.mxu0 0
        %4227 = vmatpush1.bf16.msra.mxu0 0
        %4228 = vmatprep.subr.bf16.mxu0 0
        %4229 = vmatpush1.bf16.msra.mxu0 0
        %4230 = vmatprep.subr.bf16.mxu0 0
        %4231 = vmatpush1.bf16.msra.mxu0 0
        %4232 = vmatprep.subr.bf16.mxu0 0
        %4233 = vmatpush1.bf16.msra.mxu0 0
        %4234 = vmatprep.subr.bf16.mxu0 0
        %4235 = vmatpush1.bf16.msra.mxu0 0
        %4236 = vmatprep.subr.bf16.mxu0 0
        %4237 = vmatpush1.bf16.msra.mxu0 0
        %4238 = vmatprep.subr.bf16.mxu0 0
        %4239 = vmatpush1.bf16.msra.mxu0 0
        %4240 = vmatprep.subr.bf16.mxu0 0
        %4241 = vmatpush1.bf16.msra.mxu0 0
        %4242 = vmatprep.subr.bf16.mxu0 0
        %4243 = vmatpush1.bf16.msra.mxu0 0
        %4244 = vmatprep.mubr.bf16.mxu0 0
        %4245 = vmatmul.mubr.bf16.gmra.mrb[0].mxu0 %v4207
        %v4246 = vpop.f32.mrb[0].mxu0
        %v4247 = vadd.f32 0.0, %v4246
        %v4248 = vpop.f32.mrb[0].mxu0
        %v4249 = vpop.f32.mrb[0].mxu0
        %v4250 = vpop.f32.mrb[0].mxu0
        %4251 = vdwg.mxu0
        %v4252 = vsel %vm2353, %v4109, 0.0
        %v4253 = vsel %vm2353, %v4155, 0.0
        %v4254 = vadd.f32 %v4252, %v4253
        %v4255 = vsel %vm2353, %v4201, 0.0
        %v4256 = vadd.f32 %v4254, %v4255
        %v4257 = vsel %vm2353, %v4247, 0.0
        %v4258 = vadd.f32 %v4256, %v4257
        %v4260 = vlaneseq
        %v4261 = vshrl.u32 %v4260, 7
        %v4262 = vsub.s32 0, %v4261
        %v4263 = vrot.slane %v778, %v4262
        %v4265 = vadd.f32 %v4258, %v4263
        %v4266 = vadd.f32 %v3250, %v4265
        %v4267 = vsel %vm2353, %v4266, 0.0
        %4268 = vadd.xlane.f32.xlu0 %v4267
        %v4269 = vpop.xlane.xlu0 %4268
        %v4270 = vmul.f32 %v4269, %v2357
        %v4271 = vsub.f32 %v4266, %v4270
        %v4272 = vmul.f32 %v4271, %v4271
        %v4273 = vsel %vm2353, %v4272, 0.0
        %4274 = vadd.xlane.f32.xlu0 %v4273
        %v4275 = vpop.xlane.xlu0 %4274
        %v4276 = vmul.f32 %v4275, %v2357
        %v4277 = vadd.f32 %v4276, 1e-05
        %v4278 = vrsqrt.pop %v4277
        %v4279 = vmul.f32 %v4271, %v4278
        %v4281 = vlaneseq
        %v4282 = vshrl.u32 %v4281, 7
        %v4283 = vsub.s32 0, %v4282
        %v4284 = vrot.slane %v775, %v4283
        %v4286 = vmul.f32 %v4279, %v4284
        %v4288 = vlaneseq
        %v4289 = vshrl.u32 %v4288, 7
        %v4290 = vsub.s32 0, %v4289
        %v4291 = vrot.slane %v776, %v4290
        %v4293 = vadd.f32 %v4286, %v4291
        %v4294 = vpack.c.bf16 %v4293, %v4293
        %v4295 = vld [vmem:[%s18] sm:$0xf]
        %v4296 = vld [vmem:[%s18 + $0x4] sm:$0xf]
        %v4297 = vld [vmem:[%s18 + $0x8] sm:$0xf]
        %v4298 = vld [vmem:[%s18 + $0xc] sm:$0xf]
        %v4300 = vlaneseq
        %v4301 = vshrl.u32 %v4300, 7
        %v4302 = vsub.s32 0, %v4301
        %v4303 = vrot.slane %v779, %v4302
        %v4309 = vunpack.c.l.b16 %v4295
        %v4310 = vunpack.c.l.b16 %v4296
        %v4311 = vunpack.c.l.b16 %v4297
        %v4312 = vunpack.c.l.b16 %v4298
        %v4313 = vpack.c.b16 %v4310, %v4309
        %v4314 = vpack.c.b16 %v4312, %v4311
        %v4318 = vsel %vm2353, %v4294, 0
        %4320 = vmatprep.subr.bf16.mxu0 0
        %4321 = vmatpush1.bf16.msra.mxu0 %v4313
        %4322 = vmatprep.subr.bf16.mxu0 0
        %4323 = vmatpush1.bf16.msra.mxu0 %v4314
        %4324 = vmatprep.subr.bf16.mxu0 0
        %4325 = vmatpush1.bf16.msra.mxu0 0
        %4326 = vmatprep.subr.bf16.mxu0 0
        %4327 = vmatpush1.bf16.msra.mxu0 0
        %4328 = vmatprep.subr.bf16.mxu0 0
        %4329 = vmatpush1.bf16.msra.mxu0 0
        %4330 = vmatprep.subr.bf16.mxu0 0
        %4331 = vmatpush1.bf16.msra.mxu0 0
        %4332 = vmatprep.subr.bf16.mxu0 0
        %4333 = vmatpush1.bf16.msra.mxu0 0
        %4334 = vmatprep.subr.bf16.mxu0 0
        %4335 = vmatpush1.bf16.msra.mxu0 0
        %4336 = vmatprep.subr.bf16.mxu0 0
        %4337 = vmatpush1.bf16.msra.mxu0 0
        %4338 = vmatprep.subr.bf16.mxu0 0
        %4339 = vmatpush1.bf16.msra.mxu0 0
        %4340 = vmatprep.subr.bf16.mxu0 0
        %4341 = vmatpush1.bf16.msra.mxu0 0
        %4342 = vmatprep.subr.bf16.mxu0 0
        %4343 = vmatpush1.bf16.msra.mxu0 0
        %4344 = vmatprep.subr.bf16.mxu0 0
        %4345 = vmatpush1.bf16.msra.mxu0 0
        %4346 = vmatprep.subr.bf16.mxu0 0
        %4347 = vmatpush1.bf16.msra.mxu0 0
        %4348 = vmatprep.subr.bf16.mxu0 0
        %4349 = vmatpush1.bf16.msra.mxu0 0
        %4350 = vmatprep.subr.bf16.mxu0 0
        %4351 = vmatpush1.bf16.msra.mxu0 0
        %4352 = vmatprep.mubr.bf16.mxu0 0
        %4353 = vmatmul.mubr.bf16.gmra.mrb[0].mxu0 %v4318
        %v4354 = vpop.f32.mrb[0].mxu0
        %v4355 = vadd.f32 %v4303, %v4354
        %v4356 = vpop.f32.mrb[0].mxu0
        %v4357 = vpop.f32.mrb[0].mxu0
        %v4358 = vpop.f32.mrb[0].mxu0
        %4359 = vdwg.mxu0
        %v4360 = vld [vmem:[%s20] sm:$0xf]
        %v4361 = vld [vmem:[%s20 + $0x4] sm:$0xf]
        %v4362 = vld [vmem:[%s20 + $0x8] sm:$0xf]
        %v4363 = vld [vmem:[%s20 + $0xc] sm:$0xf]
        %v4365 = vlaneseq
        %v4366 = vshrl.u32 %v4365, 7
        %v4367 = vsub.s32 0, %v4366
        %v4368 = vrot.slane %v780, %v4367
        %v4374 = vunpack.c.l.b16 %v4360
        %v4375 = vunpack.c.l.b16 %v4361
        %v4376 = vunpack.c.l.b16 %v4362
        %v4377 = vunpack.c.l.b16 %v4363
        %v4378 = vpack.c.b16 %v4375, %v4374
        %v4379 = vpack.c.b16 %v4377, %v4376
        %4382 = vmatprep.subr.bf16.mxu0 0
        %4383 = vmatpush1.bf16.msra.mxu0 %v4378
        %4384 = vmatprep.subr.bf16.mxu0 0
        %4385 = vmatpush1.bf16.msra.mxu0 %v4379
        %4386 = vmatprep.subr.bf16.mxu0 0
        %4387 = vmatpush1.bf16.msra.mxu0 0
        %4388 = vmatprep.subr.bf16.mxu0 0
        %4389 = vmatpush1.bf16.msra.mxu0 0
        %4390 = vmatprep.subr.bf16.mxu0 0
        %4391 = vmatpush1.bf16.msra.mxu0 0
        %4392 = vmatprep.subr.bf16.mxu0 0
        %4393 = vmatpush1.bf16.msra.mxu0 0
        %4394 = vmatprep.subr.bf16.mxu0 0
        %4395 = vmatpush1.bf16.msra.mxu0 0
        %4396 = vmatprep.subr.bf16.mxu0 0
        %4397 = vmatpush1.bf16.msra.mxu0 0
        %4398 = vmatprep.subr.bf16.mxu0 0
        %4399 = vmatpush1.bf16.msra.mxu0 0
        %4400 = vmatprep.subr.bf16.mxu0 0
        %4401 = vmatpush1.bf16.msra.mxu0 0
        %4402 = vmatprep.subr.bf16.mxu0 0
        %4403 = vmatpush1.bf16.msra.mxu0 0
        %4404 = vmatprep.subr.bf16.mxu0 0
        %4405 = vmatpush1.bf16.msra.mxu0 0
        %4406 = vmatprep.subr.bf16.mxu0 0
        %4407 = vmatpush1.bf16.msra.mxu0 0
        %4408 = vmatprep.subr.bf16.mxu0 0
        %4409 = vmatpush1.bf16.msra.mxu0 0
        %4410 = vmatprep.subr.bf16.mxu0 0
        %4411 = vmatpush1.bf16.msra.mxu0 0
        %4412 = vmatprep.subr.bf16.mxu0 0
        %4413 = vmatpush1.bf16.msra.mxu0 0
        %4414 = vmatprep.mubr.bf16.mxu0 0
        %4415 = vmatmul.mubr.bf16.gmra.mrb[0].mxu0 %v4318
        %v4416 = vpop.f32.mrb[0].mxu0
        %v4417 = vadd.f32 %v4368, %v4416
        %v4418 = vpop.f32.mrb[0].mxu0
        %v4419 = vpop.f32.mrb[0].mxu0
        %v4420 = vpop.f32.mrb[0].mxu0
        %4421 = vdwg.mxu0
        %v4422 = vmul.f32 %v4417, 0.70710677
        %vm4423 = vcmp.ge.f32.partialorder %v4422, 0.0
        %v4424 = vsel %vm4423, 1.0, -1.0
        %v4425 = vand.u32 2147483647, %v4422
        %v4426 = vmul.f32 %v4425, 0.3275911
        %v4427 = vadd.f32 %v4426, 1.0
        %v4428 = vrcp.pop %v4427
        %v4429 = vmul.f32 1.0, %v4428
        %v4430 = vmul.f32 %v4429, 1.0614054
        %v4431 = vadd.f32 %v4430, -1.4531521
        %v4432 = vmul.f32 %v4431, %v4429
        %v4433 = vadd.f32 %v4432, 1.4214138
        %v4434 = vmul.f32 %v4433, %v4429
        %v4435 = vadd.f32 %v4434, -0.28449672
        %v4436 = vmul.f32 %v4435, %v4429
        %v4437 = vadd.f32 %v4436, 0.2548296
        %v4438 = vmul.f32 %v4437, %v4429
        %v4439 = vsub.f32 0.0, %v4425
        %v4440 = vmul.f32 %v4439, %v4425
        %v4441 = vmul.f32 %v4440, 1.442695
        %v4442 = vpow.pop %v4441
        %v4443 = vmul.f32 %v4438, %v4442
        %v4444 = vsub.f32 1.0, %v4443
        %v4445 = vmul.f32 %v4424, %v4444
        %v4446 = vmul.f32 %v4417, 0.5
        %v4447 = vadd.f32 %v4445, 1.0
        %v4448 = vmul.f32 %v4446, %v4447
        %v4449 = vmul.f32 %v4355, %v4448
        %v4450 = vpack.c.bf16 %v4449, %v4449
        %v4451 = vld [vmem:[%s22] sm:$0xf]
        %v4452 = vld [vmem:[%s22 + $0x4] sm:$0xf]
        %v4453 = vld [vmem:[%s22 + $0x8] sm:$0xf]
        %v4454 = vld [vmem:[%s22 + $0xc] sm:$0xf]
        %v4455 = vld [vmem:[%s22 + $0x10] sm:$0xf]
        %v4456 = vld [vmem:[%s22 + $0x14] sm:$0xf]
        %v4457 = vld [vmem:[%s22 + $0x18] sm:$0xf]
        %v4458 = vld [vmem:[%s22 + $0x1c] sm:$0xf]
        %v4459 = vld [vmem:[%s22 + $0x20] sm:$0xf]
        %v4460 = vld [vmem:[%s22 + $0x24] sm:$0xf]
        %v4461 = vld [vmem:[%s22 + $0x28] sm:$0xf]
        %v4462 = vld [vmem:[%s22 + $0x2c] sm:$0xf]
        %v4463 = vld [vmem:[%s22 + $0x30] sm:$0xf]
        %v4464 = vld [vmem:[%s22 + $0x34] sm:$0xf]
        %v4465 = vld [vmem:[%s22 + $0x38] sm:$0xf]
        %v4466 = vld [vmem:[%s22 + $0x3c] sm:$0xf]
        %v4483 = vunpack.c.l.b16 %v4451
        %v4484 = vunpack.c.l.b16 %v4452
        %v4485 = vunpack.c.l.b16 %v4453
        %v4486 = vunpack.c.l.b16 %v4454
        %v4487 = vunpack.c.l.b16 %v4455
        %v4488 = vunpack.c.l.b16 %v4456
        %v4489 = vunpack.c.l.b16 %v4457
        %v4490 = vunpack.c.l.b16 %v4458
        %v4491 = vunpack.c.l.b16 %v4459
        %v4492 = vunpack.c.l.b16 %v4460
        %v4493 = vunpack.c.l.b16 %v4461
        %v4494 = vunpack.c.l.b16 %v4462
        %v4495 = vunpack.c.l.b16 %v4463
        %v4496 = vunpack.c.l.b16 %v4464
        %v4497 = vunpack.c.l.b16 %v4465
        %v4498 = vunpack.c.l.b16 %v4466
        %v4499 = vpack.c.b16 %v4484, %v4483
        %v4500 = vpack.c.b16 %v4486, %v4485
        %v4501 = vpack.c.b16 %v4488, %v4487
        %v4502 = vpack.c.b16 %v4490, %v4489
        %v4503 = vpack.c.b16 %v4492, %v4491
        %v4504 = vpack.c.b16 %v4494, %v4493
        %v4505 = vpack.c.b16 %v4496, %v4495
        %v4506 = vpack.c.b16 %v4498, %v4497
        %4515 = vmatprep.subr.bf16.mxu0 0
        %4516 = vmatpush1.bf16.msra.mxu0 %v4499
        %4517 = vmatprep.subr.bf16.mxu0 0
        %4518 = vmatpush1.bf16.msra.mxu0 %v4500
        %4519 = vmatprep.subr.bf16.mxu0 0
        %4520 = vmatpush1.bf16.msra.mxu0 %v4501
        %4521 = vmatprep.subr.bf16.mxu0 0
        %4522 = vmatpush1.bf16.msra.mxu0 %v4502
        %4523 = vmatprep.subr.bf16.mxu0 0
        %4524 = vmatpush1.bf16.msra.mxu0 %v4503
        %4525 = vmatprep.subr.bf16.mxu0 0
        %4526 = vmatpush1.bf16.msra.mxu0 %v4504
        %4527 = vmatprep.subr.bf16.mxu0 0
        %4528 = vmatpush1.bf16.msra.mxu0 %v4505
        %4529 = vmatprep.subr.bf16.mxu0 0
        %4530 = vmatpush1.bf16.msra.mxu0 %v4506
        %4531 = vmatprep.subr.bf16.mxu0 0
        %4532 = vmatpush1.bf16.msra.mxu0 0
        %4533 = vmatprep.subr.bf16.mxu0 0
        %4534 = vmatpush1.bf16.msra.mxu0 0
        %4535 = vmatprep.subr.bf16.mxu0 0
        %4536 = vmatpush1.bf16.msra.mxu0 0
        %4537 = vmatprep.subr.bf16.mxu0 0
        %4538 = vmatpush1.bf16.msra.mxu0 0
        %4539 = vmatprep.subr.bf16.mxu0 0
        %4540 = vmatpush1.bf16.msra.mxu0 0
        %4541 = vmatprep.subr.bf16.mxu0 0
        %4542 = vmatpush1.bf16.msra.mxu0 0
        %4543 = vmatprep.subr.bf16.mxu0 0
        %4544 = vmatpush1.bf16.msra.mxu0 0
        %4545 = vmatprep.subr.bf16.mxu0 0
        %4546 = vmatpush1.bf16.msra.mxu0 0
        %4547 = vmatprep.mubr.bf16.mxu0 0
        %4548 = vmatmul.mubr.bf16.gmra.mrb[0].mxu0 %v4450
        %v4549 = vpop.f32.mrb[0].mxu0
        %v4550 = vadd.f32 0.0, %v4549
        %v4551 = vpop.f32.mrb[0].mxu0
        %v4552 = vpop.f32.mrb[0].mxu0
        %v4553 = vpop.f32.mrb[0].mxu0
        %4554 = vdwg.mxu0
        %v4555 = vadd.f32 %v4266, %v4550
        %v4557 = vlaneseq
        %v4558 = vshrl.u32 %v4557, 7
        %v4559 = vsub.s32 0, %v4558
        %v4560 = vrot.slane %v781, %v4559
        %v4562 = vadd.f32 %v4555, %v4560
        %4563 = vst.msk [vmem:[%s759] sm:$0xff] %vm2353, %v4562
        %s4564 = sand.u32 %s574, 1
        %s4565 = scalar_lea.sflag [#allocation8], %s4564
        %s4566 = sand.u32 %s574, 1
        %s4567 = smul.addr %s4566, 8
        %s4568 = scalar_lea.vmem [#allocation7], %s4567
        // Predicated region
        $region121: #{tpu_custom_call.1} parent=115 // pred_check
          %p4569 = pneg %p584
        $region122: #{tpu_custom_call.1} parent=115 // pred_check_branch
          %4571 = sbr.rel (%p4569) target = $region124
        $region123: #{tpu_custom_call.1} parent=115 // pred_region
          %s4573 = ssub.s32 128, 128
          %4574 = vsyncadd %s4565, %s4573
          %s4575 = smul.addr %s42, 2
          %s4576 = sadd.s32 %s43, %s4575
          %s4577 = smul.addr %s4576, 128
          %s4578 = scalar_lea.hbm %s24, %s4577
          %s4580 = sshll.u32 %s4568, 4
          %s4581 = int_to_ptr.vmem [resolvable:$true] %s4580
          %4583 = dma.vmem_to_hbm [thread:$0]  %s4581, 128, %s4578, %s4565
        $region124: #{tpu_custom_call.1} parent=115 // pred_fallthru
          _
      $region116: #{tpu_custom_call.1} parent=5 // pred_fallthru
        _
      %p4584 = scmp.le.s32.totalorder 2, %s33
      // Predicated region
      $region125: #{tpu_custom_call.1} parent=5 // pred_check
        %p4585 = pneg %p4584
      $region126: #{tpu_custom_call.1} parent=5 // pred_check_branch
        %4587 = sbr.rel (%p4585) target = $region128
      $region127: #{tpu_custom_call.1} parent=5 // pred_region
        %s4588 = ssub.s32 %s33, 2
        // Predicated region
        $region129: #{tpu_custom_call.1} parent=127 // pred_check
          %p4589 = pneg %p590
        $region130: #{tpu_custom_call.1} parent=127 // pred_check_branch
          %4591 = sbr.rel (%p4589) target = $region132
        $region131: #{tpu_custom_call.1} parent=127 // pred_region
          %s4592 = sand.u32 %s575, 1
          %s4593 = scalar_lea.sflag [#allocation8], %s4592
          %s4594 = sand.u32 %s575, 1
          %s4595 = smul.addr %s4594, 8
          %s4596 = scalar_lea.vmem [#allocation7], %s4595
          %4597 = dma.done %s4593, 128
        $region132: #{tpu_custom_call.1} parent=127 // pred_fallthru
          _
      $region128: #{tpu_custom_call.1} parent=5 // pred_fallthru
        _
    $region6: #{tpu_custom_call.1} parent=1 // loop_footer
      %s37 = sadd.s32 1, %s33
    $region7: #{tpu_custom_call.1} parent=1 // loop_footer_branch
      %32 = sbr.rel target = $region3
    $region8: #{tpu_custom_call.1} parent=1 // loop_exit
      _
    %4598 = vsyncpa [#allocation8], 1
    %s4599 = scalar_lea.sflag [#allocation8], 1
    %4600 = vsyncpa %s4599, 1

</llo_original>
